<compile_context>
chip_gen: v6e
topology: v6e:2x2x1
jax: 0.10.0
libtpu: 0.0.40
codegen_flags: <defaults>
</compile_context>

<pallas_src>
import functools

import jax
import jax.numpy as jnp
from jax import lax
from jax.experimental import pallas as pl
from jax.experimental.pallas import tpu as pltpu


# -----------------------------------------------------------------------------
# Kernel 1: fused attention block
#   out = LayerNorm( fc_out( MHA(q_in, kv_in, mask) ) + q_in )
# One grid step per batch element; all heads processed in-kernel.
# -----------------------------------------------------------------------------

def _attn_block_kernel(q_ref, kv_ref, m_ref, wq_ref, wk_ref, wv_ref,
                       wo_ref, bo_ref, g_ref, b_ref, o_ref, *,
                       heads, head_dim, inv_scale, eps):
    x_q = q_ref[0].astype(jnp.float32)          # (Lq, E) lane-dense load
    x_kv = kv_ref[0].astype(jnp.float32)        # (Lk, E)
    m = m_ref[0, 0]                             # (Mq, Lk) -> broadcasts over Lq
    neg = jnp.float32(-1e20)

    xq_b = x_q.astype(jnp.bfloat16)
    xkv_b = x_kv.astype(jnp.bfloat16)
    # Block-diagonal head projections as dense E-wide bf16 matmuls, f32 acc.
    q = jnp.dot(xq_b, wq_ref[...], preferred_element_type=jnp.float32)
    k = jnp.dot(xkv_b, wk_ref[...], preferred_element_type=jnp.float32)
    v = jnp.dot(xkv_b, wv_ref[...], preferred_element_type=jnp.float32)

    # Per-head attention: static in-register value slices (heads is small and
    # static -> unrolled); a single lane-dense concatenated store at the end.
    ctx_parts = []
    for h in range(heads):
        lo = h * head_dim
        hi = lo + head_dim
        qh = q[:, lo:hi]                        # (Lq, d)
        kh = k[:, lo:hi]                        # (Lk, d)
        vh = v[:, lo:hi]                        # (Lk, d)
        # energy = qh @ kh^T via dot_general (no explicit XLU transpose).
        energy = lax.dot_general(qh, kh, (((1,), (1,)), ((), ())),
                                 preferred_element_type=jnp.float32)
        # masked_fill(mask == 0, -1e20) BEFORE scaling, as in the reference,
        # scaled by 1/sqrt(embed_size) (reference uses embed_size, not d).
        energy = jnp.where(m == 0, neg, energy) * inv_scale
        e_max = jnp.max(energy, axis=-1, keepdims=True)
        p = jnp.exp(energy - e_max)
        denom = jnp.sum(p, axis=-1, keepdims=True)
        attn = p * pl.reciprocal(denom, approx=True)   # EUP slot (approx)
        ctx_parts.append(jnp.dot(attn, vh, preferred_element_type=jnp.float32))

    ctx = jnp.concatenate(ctx_parts, axis=-1)          # (Lq, E) lane-dense

    # fc_out + bias + residual + LayerNorm epilogue.
    y = jnp.dot(ctx.astype(jnp.bfloat16), wo_ref[...],
                preferred_element_type=jnp.float32)
    s = y + bo_ref[...].astype(jnp.float32) + x_q
    mu = jnp.mean(s, axis=-1, keepdims=True)
    var = jnp.mean((s - mu) * (s - mu), axis=-1, keepdims=True)
    norm = (s - mu) * lax.rsqrt(var + eps)
    o_ref[0] = (norm * g_ref[...] + b_ref[...]).astype(o_ref.dtype)


def attn_block(q_in, kv_in, mask, p, gamma, beta, heads, embed_size, eps=1e-5):
    N, Lq, E = q_in.shape
    Lk = kv_in.shape[1]
    Mq, Mk = mask.shape[2], mask.shape[3]
    d = E // heads
    inv_scale = 1.0 / (float(embed_size) ** 0.5)
    kernel = functools.partial(_attn_block_kernel, heads=heads, head_dim=d,
                               inv_scale=inv_scale, eps=eps)
    return pl.pallas_call(
        kernel,
        out_shape=jax.ShapeDtypeStruct((N, Lq, E), q_in.dtype),
        grid=(N,),
        in_specs=[
            pl.BlockSpec((1, Lq, E), lambda n: (n, 0, 0)),
            pl.BlockSpec((1, Lk, E), lambda n: (n, 0, 0)),
            pl.BlockSpec((1, 1, Mq, Mk), lambda n: (n, 0, 0, 0)),
            pl.BlockSpec((E, E), lambda n: (0, 0)),      # Wq (block-diag)
            pl.BlockSpec((E, E), lambda n: (0, 0)),      # Wk (block-diag)
            pl.BlockSpec((E, E), lambda n: (0, 0)),      # Wv (block-diag)
            pl.BlockSpec((E, E), lambda n: (0, 0)),      # Wo
            pl.BlockSpec((1, E), lambda n: (0, 0)),      # bo
            pl.BlockSpec((1, E), lambda n: (0, 0)),      # LN gamma
            pl.BlockSpec((1, E), lambda n: (0, 0)),      # LN beta
        ],
        out_specs=pl.BlockSpec((1, Lq, E), lambda n: (n, 0, 0)),
        compiler_params=pltpu.CompilerParams(
            dimension_semantics=("parallel",)),
    )(q_in, kv_in, mask, p["Wq"], p["Wk"], p["Wv"], p["Wo"], p["bo"],
      gamma, beta)


# -----------------------------------------------------------------------------
# Kernel 2: fused feed-forward block
#   out = LayerNorm( relu(x @ W1 + b1) @ W2 + b2 + x )
# -----------------------------------------------------------------------------

def _ffn_block_kernel(x_ref, w1_ref, b1_ref, w2_ref, b2_ref, g_ref, b_ref,
                      o_ref, *, eps):
    x = x_ref[0].astype(jnp.float32)                     # (L, E)
    h = jnp.dot(x.astype(jnp.bfloat16), w1_ref[...],
                preferred_element_type=jnp.float32)
    h = jnp.maximum(h + b1_ref[...].astype(jnp.float32), 0.0)
    y = jnp.dot(h.astype(jnp.bfloat16), w2_ref[...],
                preferred_element_type=jnp.float32)
    s = y + b2_ref[...].astype(jnp.float32) + x
    mu = jnp.mean(s, axis=-1, keepdims=True)
    var = jnp.mean((s - mu) * (s - mu), axis=-1, keepdims=True)
    norm = (s - mu) * lax.rsqrt(var + eps)
    o_ref[0] = (norm * g_ref[...] + b_ref[...]).astype(o_ref.dtype)


def ffn_block(x, p, gamma, beta, eps=1e-5):
    N, L, E = x.shape
    H = p["W1"].shape[1]
    return pl.pallas_call(
        functools.partial(_ffn_block_kernel, eps=eps),
        out_shape=jax.ShapeDtypeStruct((N, L, E), x.dtype),
        grid=(N,),
        in_specs=[
            pl.BlockSpec((1, L, E), lambda n: (n, 0, 0)),
            pl.BlockSpec((E, H), lambda n: (0, 0)),
            pl.BlockSpec((1, H), lambda n: (0, 0)),
            pl.BlockSpec((H, E), lambda n: (0, 0)),
            pl.BlockSpec((1, E), lambda n: (0, 0)),
            pl.BlockSpec((1, E), lambda n: (0, 0)),
            pl.BlockSpec((1, E), lambda n: (0, 0)),
        ],
        out_specs=pl.BlockSpec((1, L, E), lambda n: (n, 0, 0)),
        compiler_params=pltpu.CompilerParams(
            dimension_semantics=("parallel",)),
    )(x, p["W1"], p["b1"], p["W2"], p["b2"], gamma, beta)


# -----------------------------------------------------------------------------
# Kernel 3: embedding linear with fused positional-table add
#   out = x @ W + b + pos
# -----------------------------------------------------------------------------

def _embed_kernel(x_ref, w_ref, b_ref, pos_ref, o_ref):
    x = x_ref[0].astype(jnp.float32)                     # (T, C)
    h = jnp.dot(x.astype(jnp.bfloat16), w_ref[...],
                preferred_element_type=jnp.float32)
    o_ref[0] = (h + b_ref[...].astype(jnp.float32)
                + pos_ref[...].astype(jnp.float32)).astype(o_ref.dtype)


def embed_block(x, w, b, pos):
    N, T, C = x.shape
    E = w.shape[1]
    return pl.pallas_call(
        _embed_kernel,
        out_shape=jax.ShapeDtypeStruct((N, T, E), jnp.float32),
        grid=(N,),
        in_specs=[
            pl.BlockSpec((1, T, C), lambda n: (n, 0, 0)),
            pl.BlockSpec((C, E), lambda n: (0, 0)),
            pl.BlockSpec((1, E), lambda n: (0, 0)),
            pl.BlockSpec((T, E), lambda n: (0, 0)),
        ],
        out_specs=pl.BlockSpec((1, T, E), lambda n: (n, 0, 0)),
        compiler_params=pltpu.CompilerParams(
            dimension_semantics=("parallel",)),
    )(x, w, b, pos)


# -----------------------------------------------------------------------------
# Kernel 4: final output projection  out = x @ W + b
# -----------------------------------------------------------------------------

def _out_proj_kernel(x_ref, w_ref, b_ref, o_ref):
    x = x_ref[0].astype(jnp.float32)                     # (T, E)
    y = jnp.dot(x.astype(jnp.bfloat16), w_ref[...],
                preferred_element_type=jnp.float32)
    o_ref[0] = (y + b_ref[...].astype(jnp.float32)).astype(o_ref.dtype)


def out_proj(x, w, b):
    N, T, E = x.shape
    C = w.shape[1]
    return pl.pallas_call(
        _out_proj_kernel,
        out_shape=jax.ShapeDtypeStruct((N, T, C), x.dtype),
        grid=(N,),
        in_specs=[
            pl.BlockSpec((1, T, E), lambda n: (n, 0, 0)),
            pl.BlockSpec((E, C), lambda n: (0, 0)),
            pl.BlockSpec((1, C), lambda n: (0, 0)),
        ],
        out_specs=pl.BlockSpec((1, T, C), lambda n: (n, 0, 0)),
        compiler_params=pltpu.CompilerParams(
            dimension_semantics=("parallel",)),
    )(x, w, b)


# -----------------------------------------------------------------------------
# Model glue (8 pallas_call launches total for the demo config)
# -----------------------------------------------------------------------------

def decoder_forward(params, x, enc_out, src_mask, trg_mask, heads, embed_size):
    N, T, C = x.shape
    # trg_feature_linear + positional embedding (positions = arange(T)) fused.
    h = embed_block(x, params["emb_w"], params["emb_b"],
                    params["pos_table"][:T])
    # TODO(synk): nn.Dropout is identity here (eval-mode semantics).
    for lp in params["layers"]:
        # DecoderBlock: masked self-attention + residual + LayerNorm -> query
        query = attn_block(h, h, trg_mask, lp["self_attn"],
                           lp["norm_g"], lp["norm_b"], heads, embed_size)
        # TransformerBlock: cross-attention (kv = enc_out) + residual + LN1
        a = attn_block(query, enc_out, src_mask, lp["cross_attn"],
                       lp["norm1_g"], lp["norm1_b"], heads, embed_size)
        # Feed-forward + residual + LN2
        h = ffn_block(a, lp["ffn"], lp["norm2_g"], lp["norm2_b"])
    return out_proj(h, params["fc_w"], params["fc_b"])


# -----------------------------------------------------------------------------
# Deterministic parameter init (matmul weights stored bf16 for the MXU;
# biases / LayerNorm params / positional table stay f32).
# -----------------------------------------------------------------------------

def _w(key, shape, scale=0.05, dtype=jnp.float32):
    return (jax.random.normal(key, shape, jnp.float32) * scale).astype(dtype)


def _block_diag(w, heads):
    # Shared (d,d) head weight -> block-diagonal (E,E) weight; exact equivalent
    # of applying nn.Linear(head_dim, head_dim) to every contiguous head slice
    # of reshape(N, L, heads, head_dim).
    return jnp.kron(jnp.eye(heads, dtype=w.dtype), w)


def init_params(key, trg_feature_dim, embed_size, num_layers, heads,
                forward_expansion, max_length):
    d = embed_size // heads
    E, C, FE = embed_size, trg_feature_dim, forward_expansion
    keys = iter(jax.random.split(key, 8 + num_layers * 16))
    bf16 = jnp.bfloat16

    def attn_params():
        Wv = _w(next(keys), (d, d))
        Wk = _w(next(keys), (d, d))
        Wq = _w(next(keys), (d, d))
        return dict(
            Wq=_block_diag(Wq, heads).astype(bf16),       # (E, E)
            Wk=_block_diag(Wk, heads).astype(bf16),       # (E, E)
            Wv=_block_diag(Wv, heads).astype(bf16),       # (E, E)
            Wo=_w(next(keys), (E, E), dtype=bf16),
            bo=_w(next(keys), (1, E)),
        )

    layers = []
    for _ in range(num_layers):
        layers.append(dict(
            self_attn=attn_params(),
            norm_g=jnp.ones((1, E), jnp.float32),
            norm_b=jnp.zeros((1, E), jnp.float32),
            cross_attn=attn_params(),
            norm1_g=jnp.ones((1, E), jnp.float32),
            norm1_b=jnp.zeros((1, E), jnp.float32),
            ffn=dict(
                W1=_w(next(keys), (E, FE * E), dtype=bf16),
                b1=_w(next(keys), (1, FE * E)),
                W2=_w(next(keys), (FE * E, E), dtype=bf16),
                b2=_w(next(keys), (1, E)),
            ),
            norm2_g=jnp.ones((1, E), jnp.float32),
            norm2_b=jnp.zeros((1, E), jnp.float32),
        ))

    return dict(
        emb_w=_w(next(keys), (C, E), dtype=bf16),
        emb_b=_w(next(keys), (1, E)),
        pos_table=_w(next(keys), (max_length, E)),
        fc_w=_w(next(keys), (E, C), dtype=bf16),
        fc_b=_w(next(keys), (1, C)),
        layers=layers,
    )


# -----------------------------------------------------------------------------
# Main
# -----------------------------------------------------------------------------

if __name__ == "__main__":
    N, T, S = 2, 8, 8                  # batch, target seq len, source seq len
    trg_feature_dim = 4
    embed_size, heads = 32, 4
    num_layers, forward_expansion = 2, 2
    max_length = 16

    key = jax.random.PRNGKey(0)
    k_p, k_x, k_e = jax.random.split(key, 3)

    params = init_params(k_p, trg_feature_dim, embed_size, num_layers, heads,
                         forward_expansion, max_length)

    x = jax.random.normal(k_x, (N, T, trg_feature_dim), jnp.float32)
    enc_out = jax.random.normal(k_e, (N, S, embed_size), jnp.float32)

    # Masks are runtime module inputs, so they stay as arrays (kept un-broadcast
    # over heads: every head reads the same (Mq, Mk) block in-kernel).
    trg_mask = jnp.tril(jnp.ones((T, T), jnp.float32))[None, None]
    trg_mask = jnp.broadcast_to(trg_mask, (N, 1, T, T))
    src_mask = jnp.ones((N, 1, 1, S), jnp.float32)

    fwd = jax.jit(functools.partial(decoder_forward,
                                    heads=heads, embed_size=embed_size))
    out = fwd(params, x, enc_out, src_mask, trg_mask)
    out = jax.block_until_ready(out)

    assert out.shape == (N, T, trg_feature_dim), out.shape
    assert bool(jnp.all(jnp.isfinite(out)))
    print("KERNEL_OK")
</pallas_src>

<mosaic_0001>
module attributes {stable_mosaic.version = 11 : i64} {
  func.func @_attn_block_kernel(%arg0: i32, %arg1: memref<1x8x32xf32, #tpu.memory_space<vmem>>, %arg2: memref<1x8x32xf32, #tpu.memory_space<vmem>>, %arg3: memref<1x1x1x8xf32, #tpu.memory_space<vmem>>, %arg4: memref<32x32xbf16, #tpu.memory_space<vmem>>, %arg5: memref<32x32xbf16, #tpu.memory_space<vmem>>, %arg6: memref<32x32xbf16, #tpu.memory_space<vmem>>, %arg7: memref<32x32xbf16, #tpu.memory_space<vmem>>, %arg8: memref<1x32xf32, #tpu.memory_space<vmem>>, %arg9: memref<1x32xf32, #tpu.memory_space<vmem>>, %arg10: memref<1x32xf32, #tpu.memory_space<vmem>>, %arg11: memref<1x8x32xf32, #tpu.memory_space<vmem>>) attributes {dimension_semantics = [#tpu.dimension_semantics<parallel>], iteration_bounds = array<i64: 2>, scalar_prefetch = 0 : i64, scratch_operands = 0 : i64, tpu.core_type = #tpu.core_type<tc>, window_params = [{transform_indices = @transform_0, window_bounds = array<i64: 1, 8, 32>}, {transform_indices = @transform_1, window_bounds = array<i64: 1, 8, 32>}, {transform_indices = @transform_2, window_bounds = array<i64: 1, 1, 1, 8>}, {pipeline_mode = #tpu.pipeline_mode<synchronous>, transform_indices = @transform_3, window_bounds = array<i64: 32, 32>}, {pipeline_mode = #tpu.pipeline_mode<synchronous>, transform_indices = @transform_4, window_bounds = array<i64: 32, 32>}, {pipeline_mode = #tpu.pipeline_mode<synchronous>, transform_indices = @transform_5, window_bounds = array<i64: 32, 32>}, {pipeline_mode = #tpu.pipeline_mode<synchronous>, transform_indices = @transform_6, window_bounds = array<i64: 32, 32>}, {pipeline_mode = #tpu.pipeline_mode<synchronous>, transform_indices = @transform_7, window_bounds = array<i64: 1, 32>}, {pipeline_mode = #tpu.pipeline_mode<synchronous>, transform_indices = @transform_8, window_bounds = array<i64: 1, 32>}, {pipeline_mode = #tpu.pipeline_mode<synchronous>, transform_indices = @transform_9, window_bounds = array<i64: 1, 32>}, {transform_indices = @transform_10, window_bounds = array<i64: 1, 8, 32>}]} {
    %c0 = arith.constant 0 : index
    %c0_0 = arith.constant 0 : index
    %c0_1 = arith.constant 0 : index
    %0 = vector.load %arg1[%c0, %c0_0, %c0_1] : memref<1x8x32xf32, #tpu.memory_space<vmem>>, vector<1x8x32xf32>
    %1 = vector.shape_cast %0 : vector<1x8x32xf32> to vector<8x32xf32>
    %c0_2 = arith.constant 0 : index
    %c0_3 = arith.constant 0 : index
    %c0_4 = arith.constant 0 : index
    %2 = vector.load %arg2[%c0_2, %c0_3, %c0_4] : memref<1x8x32xf32, #tpu.memory_space<vmem>>, vector<1x8x32xf32>
    %3 = vector.shape_cast %2 : vector<1x8x32xf32> to vector<8x32xf32>
    %c0_5 = arith.constant 0 : index
    %c0_6 = arith.constant 0 : index
    %c0_7 = arith.constant 0 : index
    %c0_8 = arith.constant 0 : index
    %4 = vector.load %arg3[%c0_5, %c0_6, %c0_7, %c0_8] : memref<1x1x1x8xf32, #tpu.memory_space<vmem>>, vector<1x1x1x8xf32>
    %5 = vector.shape_cast %4 : vector<1x1x1x8xf32> to vector<1x8xf32>
    %6 = arith.truncf %1 : vector<8x32xf32> to vector<8x32xbf16>
    %7 = arith.truncf %3 : vector<8x32xf32> to vector<8x32xbf16>
    %c0_9 = arith.constant 0 : index
    %c0_10 = arith.constant 0 : index
    %8 = vector.load %arg4[%c0_9, %c0_10] : memref<32x32xbf16, #tpu.memory_space<vmem>>, vector<32x32xbf16>
    %cst = arith.constant dense<0.000000e+00> : vector<8x32xf32>
    %9 = tpu.matmul %6, %8, %cst {dimension_numbers = #tpu.dot_dimension_numbers<[1], [0], [0], [1], [0, 0, 1, 1], [], []>} : vector<8x32xbf16>, vector<32x32xbf16>, vector<8x32xf32> -> vector<8x32xf32>
    %c0_11 = arith.constant 0 : index
    %c0_12 = arith.constant 0 : index
    %10 = vector.load %arg5[%c0_11, %c0_12] : memref<32x32xbf16, #tpu.memory_space<vmem>>, vector<32x32xbf16>
    %cst_13 = arith.constant dense<0.000000e+00> : vector<8x32xf32>
    %11 = tpu.matmul %7, %10, %cst_13 {dimension_numbers = #tpu.dot_dimension_numbers<[1], [0], [0], [1], [0, 0, 1, 1], [], []>} : vector<8x32xbf16>, vector<32x32xbf16>, vector<8x32xf32> -> vector<8x32xf32>
    %c0_14 = arith.constant 0 : index
    %c0_15 = arith.constant 0 : index
    %12 = vector.load %arg6[%c0_14, %c0_15] : memref<32x32xbf16, #tpu.memory_space<vmem>>, vector<32x32xbf16>
    %cst_16 = arith.constant dense<0.000000e+00> : vector<8x32xf32>
    %13 = tpu.matmul %7, %12, %cst_16 {dimension_numbers = #tpu.dot_dimension_numbers<[1], [0], [0], [1], [0, 0, 1, 1], [], []>} : vector<8x32xbf16>, vector<32x32xbf16>, vector<8x32xf32> -> vector<8x32xf32>
    %14 = vector.extract_strided_slice %9 {offsets = [0, 0], sizes = [8, 8], strides = [1, 1]} : vector<8x32xf32> to vector<8x8xf32>
    %15 = vector.extract_strided_slice %11 {offsets = [0, 0], sizes = [8, 8], strides = [1, 1]} : vector<8x32xf32> to vector<8x8xf32>
    %16 = vector.extract_strided_slice %13 {offsets = [0, 0], sizes = [8, 8], strides = [1, 1]} : vector<8x32xf32> to vector<8x8xf32>
    %cst_17 = arith.constant dense<0.000000e+00> : vector<8x8xf32>
    %17 = tpu.matmul %14, %15, %cst_17 {dimension_numbers = #tpu.dot_dimension_numbers<[1], [1], [0], [0], [0, 0, 1, 0], [], []>} : vector<8x8xf32>, vector<8x8xf32>, vector<8x8xf32> -> vector<8x8xf32>
    %cst_18 = arith.constant 0.000000e+00 : f32
    %18 = vector.broadcast %cst_18 : f32 to vector<1x8xf32>
    %19 = arith.cmpf oeq, %5, %18 : vector<1x8xf32>
    %cst_19 = arith.constant -1.000000e+20 : f32
    %20 = vector.shape_cast %19 : vector<1x8xi1> to vector<1x8xi1>
    %21 = vector.broadcast %20 : vector<1x8xi1> to vector<8x8xi1>
    %22 = vector.broadcast %cst_19 : f32 to vector<8x8xf32>
    %23 = arith.select %21, %22, %17 : vector<8x8xi1>, vector<8x8xf32>
    %cst_20 = arith.constant 0.176776692 : f32
    %24 = vector.broadcast %cst_20 : f32 to vector<8x8xf32>
    %25 = arith.mulf %23, %24 : vector<8x8xf32>
    %cst_21 = arith.constant dense<0xFF800000> : vector<8xf32>
    %26 = vector.multi_reduction <maximumf>, %25, %cst_21 [1] : vector<8x8xf32> to vector<8xf32>
    %27 = vector.shape_cast %26 : vector<8xf32> to vector<8x1xf32>
    %28 = vector.broadcast %27 : vector<8x1xf32> to vector<8x8xf32>
    %29 = arith.subf %25, %28 : vector<8x8xf32>
    %30 = math.exp %29 : vector<8x8xf32>
    %cst_22 = arith.constant dense<0.000000e+00> : vector<8xf32>
    %31 = vector.multi_reduction <add>, %30, %cst_22 [1] : vector<8x8xf32> to vector<8xf32>
    %32 = vector.shape_cast %31 : vector<8xf32> to vector<8x1xf32>
    %33 = tpu.reciprocal %32 {approx = true} : vector<8x1xf32> -> vector<8x1xf32>
    %34 = vector.broadcast %33 : vector<8x1xf32> to vector<8x8xf32>
    %35 = arith.mulf %30, %34 : vector<8x8xf32>
    %cst_23 = arith.constant dense<0.000000e+00> : vector<8x8xf32>
    %36 = tpu.matmul %35, %16, %cst_23 {dimension_numbers = #tpu.dot_dimension_numbers<[1], [0], [0], [1], [0, 0, 1, 1], [], []>} : vector<8x8xf32>, vector<8x8xf32>, vector<8x8xf32> -> vector<8x8xf32>
    %37 = vector.extract_strided_slice %9 {offsets = [0, 8], sizes = [8, 8], strides = [1, 1]} : vector<8x32xf32> to vector<8x8xf32>
    %38 = vector.extract_strided_slice %11 {offsets = [0, 8], sizes = [8, 8], strides = [1, 1]} : vector<8x32xf32> to vector<8x8xf32>
    %39 = vector.extract_strided_slice %13 {offsets = [0, 8], sizes = [8, 8], strides = [1, 1]} : vector<8x32xf32> to vector<8x8xf32>
    %cst_24 = arith.constant dense<0.000000e+00> : vector<8x8xf32>
    %40 = tpu.matmul %37, %38, %cst_24 {dimension_numbers = #tpu.dot_dimension_numbers<[1], [1], [0], [0], [0, 0, 1, 0], [], []>} : vector<8x8xf32>, vector<8x8xf32>, vector<8x8xf32> -> vector<8x8xf32>
    %cst_25 = arith.constant 0.000000e+00 : f32
    %41 = vector.broadcast %cst_25 : f32 to vector<1x8xf32>
    %42 = arith.cmpf oeq, %5, %41 : vector<1x8xf32>
    %cst_26 = arith.constant -1.000000e+20 : f32
    %43 = vector.shape_cast %42 : vector<1x8xi1> to vector<1x8xi1>
    %44 = vector.broadcast %43 : vector<1x8xi1> to vector<8x8xi1>
    %45 = vector.broadcast %cst_26 : f32 to vector<8x8xf32>
    %46 = arith.select %44, %45, %40 : vector<8x8xi1>, vector<8x8xf32>
    %cst_27 = arith.constant 0.176776692 : f32
    %47 = vector.broadcast %cst_27 : f32 to vector<8x8xf32>
    %48 = arith.mulf %46, %47 : vector<8x8xf32>
    %cst_28 = arith.constant dense<0xFF800000> : vector<8xf32>
    %49 = vector.multi_reduction <maximumf>, %48, %cst_28 [1] : vector<8x8xf32> to vector<8xf32>
    %50 = vector.shape_cast %49 : vector<8xf32> to vector<8x1xf32>
    %51 = vector.broadcast %50 : vector<8x1xf32> to vector<8x8xf32>
    %52 = arith.subf %48, %51 : vector<8x8xf32>
    %53 = math.exp %52 : vector<8x8xf32>
    %cst_29 = arith.constant dense<0.000000e+00> : vector<8xf32>
    %54 = vector.multi_reduction <add>, %53, %cst_29 [1] : vector<8x8xf32> to vector<8xf32>
    %55 = vector.shape_cast %54 : vector<8xf32> to vector<8x1xf32>
    %56 = tpu.reciprocal %55 {approx = true} : vector<8x1xf32> -> vector<8x1xf32>
    %57 = vector.broadcast %56 : vector<8x1xf32> to vector<8x8xf32>
    %58 = arith.mulf %53, %57 : vector<8x8xf32>
    %cst_30 = arith.constant dense<0.000000e+00> : vector<8x8xf32>
    %59 = tpu.matmul %58, %39, %cst_30 {dimension_numbers = #tpu.dot_dimension_numbers<[1], [0], [0], [1], [0, 0, 1, 1], [], []>} : vector<8x8xf32>, vector<8x8xf32>, vector<8x8xf32> -> vector<8x8xf32>
    %60 = vector.extract_strided_slice %9 {offsets = [0, 16], sizes = [8, 8], strides = [1, 1]} : vector<8x32xf32> to vector<8x8xf32>
    %61 = vector.extract_strided_slice %11 {offsets = [0, 16], sizes = [8, 8], strides = [1, 1]} : vector<8x32xf32> to vector<8x8xf32>
    %62 = vector.extract_strided_slice %13 {offsets = [0, 16], sizes = [8, 8], strides = [1, 1]} : vector<8x32xf32> to vector<8x8xf32>
    %cst_31 = arith.constant dense<0.000000e+00> : vector<8x8xf32>
    %63 = tpu.matmul %60, %61, %cst_31 {dimension_numbers = #tpu.dot_dimension_numbers<[1], [1], [0], [0], [0, 0, 1, 0], [], []>} : vector<8x8xf32>, vector<8x8xf32>, vector<8x8xf32> -> vector<8x8xf32>
    %cst_32 = arith.constant 0.000000e+00 : f32
    %64 = vector.broadcast %cst_32 : f32 to vector<1x8xf32>
    %65 = arith.cmpf oeq, %5, %64 : vector<1x8xf32>
    %cst_33 = arith.constant -1.000000e+20 : f32
    %66 = vector.shape_cast %65 : vector<1x8xi1> to vector<1x8xi1>
    %67 = vector.broadcast %66 : vector<1x8xi1> to vector<8x8xi1>
    %68 = vector.broadcast %cst_33 : f32 to vector<8x8xf32>
    %69 = arith.select %67, %68, %63 : vector<8x8xi1>, vector<8x8xf32>
    %cst_34 = arith.constant 0.176776692 : f32
    %70 = vector.broadcast %cst_34 : f32 to vector<8x8xf32>
    %71 = arith.mulf %69, %70 : vector<8x8xf32>
    %cst_35 = arith.constant dense<0xFF800000> : vector<8xf32>
    %72 = vector.multi_reduction <maximumf>, %71, %cst_35 [1] : vector<8x8xf32> to vector<8xf32>
    %73 = vector.shape_cast %72 : vector<8xf32> to vector<8x1xf32>
    %74 = vector.broadcast %73 : vector<8x1xf32> to vector<8x8xf32>
    %75 = arith.subf %71, %74 : vector<8x8xf32>
    %76 = math.exp %75 : vector<8x8xf32>
    %cst_36 = arith.constant dense<0.000000e+00> : vector<8xf32>
    %77 = vector.multi_reduction <add>, %76, %cst_36 [1] : vector<8x8xf32> to vector<8xf32>
    %78 = vector.shape_cast %77 : vector<8xf32> to vector<8x1xf32>
    %79 = tpu.reciprocal %78 {approx = true} : vector<8x1xf32> -> vector<8x1xf32>
    %80 = vector.broadcast %79 : vector<8x1xf32> to vector<8x8xf32>
    %81 = arith.mulf %76, %80 : vector<8x8xf32>
    %cst_37 = arith.constant dense<0.000000e+00> : vector<8x8xf32>
    %82 = tpu.matmul %81, %62, %cst_37 {dimension_numbers = #tpu.dot_dimension_numbers<[1], [0], [0], [1], [0, 0, 1, 1], [], []>} : vector<8x8xf32>, vector<8x8xf32>, vector<8x8xf32> -> vector<8x8xf32>
    %83 = vector.extract_strided_slice %9 {offsets = [0, 24], sizes = [8, 8], strides = [1, 1]} : vector<8x32xf32> to vector<8x8xf32>
    %84 = vector.extract_strided_slice %11 {offsets = [0, 24], sizes = [8, 8], strides = [1, 1]} : vector<8x32xf32> to vector<8x8xf32>
    %85 = vector.extract_strided_slice %13 {offsets = [0, 24], sizes = [8, 8], strides = [1, 1]} : vector<8x32xf32> to vector<8x8xf32>
    %cst_38 = arith.constant dense<0.000000e+00> : vector<8x8xf32>
    %86 = tpu.matmul %83, %84, %cst_38 {dimension_numbers = #tpu.dot_dimension_numbers<[1], [1], [0], [0], [0, 0, 1, 0], [], []>} : vector<8x8xf32>, vector<8x8xf32>, vector<8x8xf32> -> vector<8x8xf32>
    %cst_39 = arith.constant 0.000000e+00 : f32
    %87 = vector.broadcast %cst_39 : f32 to vector<1x8xf32>
    %88 = arith.cmpf oeq, %5, %87 : vector<1x8xf32>
    %cst_40 = arith.constant -1.000000e+20 : f32
    %89 = vector.shape_cast %88 : vector<1x8xi1> to vector<1x8xi1>
    %90 = vector.broadcast %89 : vector<1x8xi1> to vector<8x8xi1>
    %91 = vector.broadcast %cst_40 : f32 to vector<8x8xf32>
    %92 = arith.select %90, %91, %86 : vector<8x8xi1>, vector<8x8xf32>
    %cst_41 = arith.constant 0.176776692 : f32
    %93 = vector.broadcast %cst_41 : f32 to vector<8x8xf32>
    %94 = arith.mulf %92, %93 : vector<8x8xf32>
    %cst_42 = arith.constant dense<0xFF800000> : vector<8xf32>
    %95 = vector.multi_reduction <maximumf>, %94, %cst_42 [1] : vector<8x8xf32> to vector<8xf32>
    %96 = vector.shape_cast %95 : vector<8xf32> to vector<8x1xf32>
    %97 = vector.broadcast %96 : vector<8x1xf32> to vector<8x8xf32>
    %98 = arith.subf %94, %97 : vector<8x8xf32>
    %99 = math.exp %98 : vector<8x8xf32>
    %cst_43 = arith.constant dense<0.000000e+00> : vector<8xf32>
    %100 = vector.multi_reduction <add>, %99, %cst_43 [1] : vector<8x8xf32> to vector<8xf32>
    %101 = vector.shape_cast %100 : vector<8xf32> to vector<8x1xf32>
    %102 = tpu.reciprocal %101 {approx = true} : vector<8x1xf32> -> vector<8x1xf32>
    %103 = vector.broadcast %102 : vector<8x1xf32> to vector<8x8xf32>
    %104 = arith.mulf %99, %103 : vector<8x8xf32>
    %cst_44 = arith.constant dense<0.000000e+00> : vector<8x8xf32>
    %105 = tpu.matmul %104, %85, %cst_44 {dimension_numbers = #tpu.dot_dimension_numbers<[1], [0], [0], [1], [0, 0, 1, 1], [], []>} : vector<8x8xf32>, vector<8x8xf32>, vector<8x8xf32> -> vector<8x8xf32>
    %106 = tpu.concatenate %36, %59, %82, %105 in 1 : vector<8x8xf32>, vector<8x8xf32>, vector<8x8xf32>, vector<8x8xf32> -> vector<8x32xf32>
    %107 = arith.truncf %106 : vector<8x32xf32> to vector<8x32xbf16>
    %c0_45 = arith.constant 0 : index
    %c0_46 = arith.constant 0 : index
    %108 = vector.load %arg7[%c0_45, %c0_46] : memref<32x32xbf16, #tpu.memory_space<vmem>>, vector<32x32xbf16>
    %cst_47 = arith.constant dense<0.000000e+00> : vector<8x32xf32>
    %109 = tpu.matmul %107, %108, %cst_47 {dimension_numbers = #tpu.dot_dimension_numbers<[1], [0], [0], [1], [0, 0, 1, 1], [], []>} : vector<8x32xbf16>, vector<32x32xbf16>, vector<8x32xf32> -> vector<8x32xf32>
    %c0_48 = arith.constant 0 : index
    %c0_49 = arith.constant 0 : index
    %110 = vector.load %arg8[%c0_48, %c0_49] : memref<1x32xf32, #tpu.memory_space<vmem>>, vector<1x32xf32>
    %111 = vector.broadcast %110 : vector<1x32xf32> to vector<8x32xf32>
    %112 = arith.addf %109, %111 : vector<8x32xf32>
    %113 = arith.addf %112, %1 : vector<8x32xf32>
    %cst_50 = arith.constant dense<0.000000e+00> : vector<8xf32>
    %114 = vector.multi_reduction <add>, %113, %cst_50 [1] : vector<8x32xf32> to vector<8xf32>
    %115 = vector.shape_cast %114 : vector<8xf32> to vector<8x1xf32>
    %cst_51 = arith.constant 3.200000e+01 : f32
    %116 = vector.broadcast %cst_51 : f32 to vector<8x1xf32>
    %117 = arith.divf %115, %116 : vector<8x1xf32>
    %118 = vector.broadcast %117 : vector<8x1xf32> to vector<8x32xf32>
    %119 = arith.subf %113, %118 : vector<8x32xf32>
    %120 = vector.broadcast %117 : vector<8x1xf32> to vector<8x32xf32>
    %121 = arith.subf %113, %120 : vector<8x32xf32>
    %122 = arith.mulf %119, %121 : vector<8x32xf32>
    %cst_52 = arith.constant dense<0.000000e+00> : vector<8xf32>
    %123 = vector.multi_reduction <add>, %122, %cst_52 [1] : vector<8x32xf32> to vector<8xf32>
    %124 = vector.shape_cast %123 : vector<8xf32> to vector<8x1xf32>
    %cst_53 = arith.constant 3.200000e+01 : f32
    %125 = vector.broadcast %cst_53 : f32 to vector<8x1xf32>
    %126 = arith.divf %124, %125 : vector<8x1xf32>
    %127 = vector.broadcast %117 : vector<8x1xf32> to vector<8x32xf32>
    %128 = arith.subf %113, %127 : vector<8x32xf32>
    %cst_54 = arith.constant 9.99999974E-6 : f32
    %129 = vector.broadcast %cst_54 : f32 to vector<8x1xf32>
    %130 = arith.addf %126, %129 : vector<8x1xf32>
    %131 = math.rsqrt %130 : vector<8x1xf32>
    %132 = vector.broadcast %131 : vector<8x1xf32> to vector<8x32xf32>
    %133 = arith.mulf %128, %132 : vector<8x32xf32>
    %c0_55 = arith.constant 0 : index
    %c0_56 = arith.constant 0 : index
    %134 = vector.load %arg9[%c0_55, %c0_56] : memref<1x32xf32, #tpu.memory_space<vmem>>, vector<1x32xf32>
    %135 = vector.broadcast %134 : vector<1x32xf32> to vector<8x32xf32>
    %136 = arith.mulf %133, %135 : vector<8x32xf32>
    %c0_57 = arith.constant 0 : index
    %c0_58 = arith.constant 0 : index
    %137 = vector.load %arg10[%c0_57, %c0_58] : memref<1x32xf32, #tpu.memory_space<vmem>>, vector<1x32xf32>
    %138 = vector.broadcast %137 : vector<1x32xf32> to vector<8x32xf32>
    %139 = arith.addf %136, %138 : vector<8x32xf32>
    %c0_59 = arith.constant 0 : index
    %c0_60 = arith.constant 0 : index
    %c0_61 = arith.constant 0 : index
    %140 = vector.load %arg11[%c0_59, %c0_60, %c0_61] : memref<1x8x32xf32, #tpu.memory_space<vmem>>, vector<1x8x32xf32>
    %141 = vector.shape_cast %140 : vector<1x8x32xf32> to vector<8x32xf32>
    %142 = vector.shape_cast %139 : vector<8x32xf32> to vector<1x8x32xf32>
    tpu.vector_store %arg11[%c0_59, %c0_60, %c0_61], %142 {strides = array<i32>} : memref<1x8x32xf32, #tpu.memory_space<vmem>>, vector<1x8x32xf32>,
    return
  }
  func.func @transform_0(%arg0: i32) -> (i32, i32, i32) {
    %c0_i32 = arith.constant 0 : i32
    %c0_i32_0 = arith.constant 0 : i32
    %c0_i32_1 = arith.constant 0 : i32
    return %arg0, %c0_i32, %c0_i32_0 : i32, i32, i32
  }
  func.func @transform_1(%arg0: i32) -> (i32, i32, i32) {
    %c0_i32 = arith.constant 0 : i32
    %c0_i32_0 = arith.constant 0 : i32
    %c0_i32_1 = arith.constant 0 : i32
    return %arg0, %c0_i32, %c0_i32_0 : i32, i32, i32
  }
  func.func @transform_2(%arg0: i32) -> (i32, i32, i32, i32) {
    %c0_i32 = arith.constant 0 : i32
    %c0_i32_0 = arith.constant 0 : i32
    %c0_i32_1 = arith.constant 0 : i32
    %c0_i32_2 = arith.constant 0 : i32
    return %arg0, %c0_i32, %c0_i32_0, %c0_i32_1 : i32, i32, i32, i32
  }
  func.func @transform_3(%arg0: i32) -> (i32, i32) {
    %c0_i32 = arith.constant 0 : i32
    %c0_i32_0 = arith.constant 0 : i32
    %c0_i32_1 = arith.constant 0 : i32
    return %c0_i32, %c0_i32_0 : i32, i32
  }
  func.func @transform_4(%arg0: i32) -> (i32, i32) {
    %c0_i32 = arith.constant 0 : i32
    %c0_i32_0 = arith.constant 0 : i32
    %c0_i32_1 = arith.constant 0 : i32
    return %c0_i32, %c0_i32_0 : i32, i32
  }
  func.func @transform_5(%arg0: i32) -> (i32, i32) {
    %c0_i32 = arith.constant 0 : i32
    %c0_i32_0 = arith.constant 0 : i32
    %c0_i32_1 = arith.constant 0 : i32
    return %c0_i32, %c0_i32_0 : i32, i32
  }
  func.func @transform_6(%arg0: i32) -> (i32, i32) {
    %c0_i32 = arith.constant 0 : i32
    %c0_i32_0 = arith.constant 0 : i32
    %c0_i32_1 = arith.constant 0 : i32
    return %c0_i32, %c0_i32_0 : i32, i32
  }
  func.func @transform_7(%arg0: i32) -> (i32, i32) {
    %c0_i32 = arith.constant 0 : i32
    %c0_i32_0 = arith.constant 0 : i32
    %c0_i32_1 = arith.constant 0 : i32
    return %c0_i32, %c0_i32_0 : i32, i32
  }
  func.func @transform_8(%arg0: i32) -> (i32, i32) {
    %c0_i32 = arith.constant 0 : i32
    %c0_i32_0 = arith.constant 0 : i32
    %c0_i32_1 = arith.constant 0 : i32
    return %c0_i32, %c0_i32_0 : i32, i32
  }
  func.func @transform_9(%arg0: i32) -> (i32, i32) {
    %c0_i32 = arith.constant 0 : i32
    %c0_i32_0 = arith.constant 0 : i32
    %c0_i32_1 = arith.constant 0 : i32
    return %c0_i32, %c0_i32_0 : i32, i32
  }
  func.func @transform_10(%arg0: i32) -> (i32, i32, i32) {
    %c0_i32 = arith.constant 0 : i32
    %c0_i32_0 = arith.constant 0 : i32
    %c0_i32_1 = arith.constant 0 : i32
    return %arg0, %c0_i32, %c0_i32_0 : i32, i32, i32
  }
}

module attributes {stable_mosaic.version = 11 : i64} {
  func.func @_embed_kernel(%arg0: i32, %arg1: memref<1x8x4xf32, #tpu.memory_space<vmem>>, %arg2: memref<4x32xbf16, #tpu.memory_space<vmem>>, %arg3: memref<1x32xf32, #tpu.memory_space<vmem>>, %arg4: memref<8x32xf32, #tpu.memory_space<vmem>>, %arg5: memref<1x8x32xf32, #tpu.memory_space<vmem>>) attributes {dimension_semantics = [#tpu.dimension_semantics<parallel>], iteration_bounds = array<i64: 2>, scalar_prefetch = 0 : i64, scratch_operands = 0 : i64, tpu.core_type = #tpu.core_type<tc>, window_params = [{transform_indices = @transform_0, window_bounds = array<i64: 1, 8, 4>}, {pipeline_mode = #tpu.pipeline_mode<synchronous>, transform_indices = @transform_1, window_bounds = array<i64: 4, 32>}, {pipeline_mode = #tpu.pipeline_mode<synchronous>, transform_indices = @transform_2, window_bounds = array<i64: 1, 32>}, {pipeline_mode = #tpu.pipeline_mode<synchronous>, transform_indices = @transform_3, window_bounds = array<i64: 8, 32>}, {transform_indices = @transform_4, window_bounds = array<i64: 1, 8, 32>}]} {
    %c0 = arith.constant 0 : index
    %c0_0 = arith.constant 0 : index
    %c0_1 = arith.constant 0 : index
    %0 = vector.load %arg1[%c0, %c0_0, %c0_1] : memref<1x8x4xf32, #tpu.memory_space<vmem>>, vector<1x8x4xf32>
    %1 = vector.shape_cast %0 : vector<1x8x4xf32> to vector<8x4xf32>
    %2 = arith.truncf %1 : vector<8x4xf32> to vector<8x4xbf16>
    %c0_2 = arith.constant 0 : index
    %c0_3 = arith.constant 0 : index
    %3 = vector.load %arg2[%c0_2, %c0_3] : memref<4x32xbf16, #tpu.memory_space<vmem>>, vector<4x32xbf16>
    %cst = arith.constant dense<0.000000e+00> : vector<8x32xf32>
    %4 = tpu.matmul %2, %3, %cst {dimension_numbers = #tpu.dot_dimension_numbers<[1], [0], [0], [1], [0, 0, 1, 1], [], []>} : vector<8x4xbf16>, vector<4x32xbf16>, vector<8x32xf32> -> vector<8x32xf32>
    %c0_4 = arith.constant 0 : index
    %c0_5 = arith.constant 0 : index
    %5 = vector.load %arg3[%c0_4, %c0_5] : memref<1x32xf32, #tpu.memory_space<vmem>>, vector<1x32xf32>
    %6 = vector.broadcast %5 : vector<1x32xf32> to vector<8x32xf32>
    %7 = arith.addf %4, %6 : vector<8x32xf32>
    %c0_6 = arith.constant 0 : index
    %c0_7 = arith.constant 0 : index
    %8 = vector.load %arg4[%c0_6, %c0_7] : memref<8x32xf32, #tpu.memory_space<vmem>>, vector<8x32xf32>
    %9 = arith.addf %7, %8 : vector<8x32xf32>
    %c0_8 = arith.constant 0 : index
    %c0_9 = arith.constant 0 : index
    %c0_10 = arith.constant 0 : index
    %10 = vector.load %arg5[%c0_8, %c0_9, %c0_10] : memref<1x8x32xf32, #tpu.memory_space<vmem>>, vector<1x8x32xf32>
    %11 = vector.shape_cast %10 : vector<1x8x32xf32> to vector<8x32xf32>
    %12 = vector.shape_cast %9 : vector<8x32xf32> to vector<1x8x32xf32>
    tpu.vector_store %arg5[%c0_8, %c0_9, %c0_10], %12 {strides = array<i32>} : memref<1x8x32xf32, #tpu.memory_space<vmem>>, vector<1x8x32xf32>,
    return
  }
  func.func @transform_0(%arg0: i32) -> (i32, i32, i32) {
    %c0_i32 = arith.constant 0 : i32
    %c0_i32_0 = arith.constant 0 : i32
    %c0_i32_1 = arith.constant 0 : i32
    return %arg0, %c0_i32, %c0_i32_0 : i32, i32, i32
  }
  func.func @transform_1(%arg0: i32) -> (i32, i32) {
    %c0_i32 = arith.constant 0 : i32
    %c0_i32_0 = arith.constant 0 : i32
    %c0_i32_1 = arith.constant 0 : i32
    return %c0_i32, %c0_i32_0 : i32, i32
  }
  func.func @transform_2(%arg0: i32) -> (i32, i32) {
    %c0_i32 = arith.constant 0 : i32
    %c0_i32_0 = arith.constant 0 : i32
    %c0_i32_1 = arith.constant 0 : i32
    return %c0_i32, %c0_i32_0 : i32, i32
  }
  func.func @transform_3(%arg0: i32) -> (i32, i32) {
    %c0_i32 = arith.constant 0 : i32
    %c0_i32_0 = arith.constant 0 : i32
    %c0_i32_1 = arith.constant 0 : i32
    return %c0_i32, %c0_i32_0 : i32, i32
  }
  func.func @transform_4(%arg0: i32) -> (i32, i32, i32) {
    %c0_i32 = arith.constant 0 : i32
    %c0_i32_0 = arith.constant 0 : i32
    %c0_i32_1 = arith.constant 0 : i32
    return %arg0, %c0_i32, %c0_i32_0 : i32, i32, i32
  }
}

module attributes {stable_mosaic.version = 11 : i64} {
  func.func @_attn_block_kernel(%arg0: i32, %arg1: memref<1x8x32xf32, #tpu.memory_space<vmem>>, %arg2: memref<1x8x32xf32, #tpu.memory_space<vmem>>, %arg3: memref<1x1x8x8xf32, #tpu.memory_space<vmem>>, %arg4: memref<32x32xbf16, #tpu.memory_space<vmem>>, %arg5: memref<32x32xbf16, #tpu.memory_space<vmem>>, %arg6: memref<32x32xbf16, #tpu.memory_space<vmem>>, %arg7: memref<32x32xbf16, #tpu.memory_space<vmem>>, %arg8: memref<1x32xf32, #tpu.memory_space<vmem>>, %arg9: memref<1x32xf32, #tpu.memory_space<vmem>>, %arg10: memref<1x32xf32, #tpu.memory_space<vmem>>, %arg11: memref<1x8x32xf32, #tpu.memory_space<vmem>>) attributes {dimension_semantics = [#tpu.dimension_semantics<parallel>], iteration_bounds = array<i64: 2>, scalar_prefetch = 0 : i64, scratch_operands = 0 : i64, tpu.core_type = #tpu.core_type<tc>, window_params = [{transform_indices = @transform_0, window_bounds = array<i64: 1, 8, 32>}, {transform_indices = @transform_1, window_bounds = array<i64: 1, 8, 32>}, {transform_indices = @transform_2, window_bounds = array<i64: 1, 1, 8, 8>}, {pipeline_mode = #tpu.pipeline_mode<synchronous>, transform_indices = @transform_3, window_bounds = array<i64: 32, 32>}, {pipeline_mode = #tpu.pipeline_mode<synchronous>, transform_indices = @transform_4, window_bounds = array<i64: 32, 32>}, {pipeline_mode = #tpu.pipeline_mode<synchronous>, transform_indices = @transform_5, window_bounds = array<i64: 32, 32>}, {pipeline_mode = #tpu.pipeline_mode<synchronous>, transform_indices = @transform_6, window_bounds = array<i64: 32, 32>}, {pipeline_mode = #tpu.pipeline_mode<synchronous>, transform_indices = @transform_7, window_bounds = array<i64: 1, 32>}, {pipeline_mode = #tpu.pipeline_mode<synchronous>, transform_indices = @transform_8, window_bounds = array<i64: 1, 32>}, {pipeline_mode = #tpu.pipeline_mode<synchronous>, transform_indices = @transform_9, window_bounds = array<i64: 1, 32>}, {transform_indices = @transform_10, window_bounds = array<i64: 1, 8, 32>}]} {
    %c0 = arith.constant 0 : index
    %c0_0 = arith.constant 0 : index
    %c0_1 = arith.constant 0 : index
    %0 = vector.load %arg1[%c0, %c0_0, %c0_1] : memref<1x8x32xf32, #tpu.memory_space<vmem>>, vector<1x8x32xf32>
    %1 = vector.shape_cast %0 : vector<1x8x32xf32> to vector<8x32xf32>
    %c0_2 = arith.constant 0 : index
    %c0_3 = arith.constant 0 : index
    %c0_4 = arith.constant 0 : index
    %2 = vector.load %arg2[%c0_2, %c0_3, %c0_4] : memref<1x8x32xf32, #tpu.memory_space<vmem>>, vector<1x8x32xf32>
    %3 = vector.shape_cast %2 : vector<1x8x32xf32> to vector<8x32xf32>
    %c0_5 = arith.constant 0 : index
    %c0_6 = arith.constant 0 : index
    %c0_7 = arith.constant 0 : index
    %c0_8 = arith.constant 0 : index
    %4 = vector.load %arg3[%c0_5, %c0_6, %c0_7, %c0_8] : memref<1x1x8x8xf32, #tpu.memory_space<vmem>>, vector<1x1x8x8xf32>
    %5 = vector.shape_cast %4 : vector<1x1x8x8xf32> to vector<8x8xf32>
    %6 = arith.truncf %1 : vector<8x32xf32> to vector<8x32xbf16>
    %7 = arith.truncf %3 : vector<8x32xf32> to vector<8x32xbf16>
    %c0_9 = arith.constant 0 : index
    %c0_10 = arith.constant 0 : index
    %8 = vector.load %arg4[%c0_9, %c0_10] : memref<32x32xbf16, #tpu.memory_space<vmem>>, vector<32x32xbf16>
    %cst = arith.constant dense<0.000000e+00> : vector<8x32xf32>
    %9 = tpu.matmul %6, %8, %cst {dimension_numbers = #tpu.dot_dimension_numbers<[1], [0], [0], [1], [0, 0, 1, 1], [], []>} : vector<8x32xbf16>, vector<32x32xbf16>, vector<8x32xf32> -> vector<8x32xf32>
    %c0_11 = arith.constant 0 : index
    %c0_12 = arith.constant 0 : index
    %10 = vector.load %arg5[%c0_11, %c0_12] : memref<32x32xbf16, #tpu.memory_space<vmem>>, vector<32x32xbf16>
    %cst_13 = arith.constant dense<0.000000e+00> : vector<8x32xf32>
    %11 = tpu.matmul %7, %10, %cst_13 {dimension_numbers = #tpu.dot_dimension_numbers<[1], [0], [0], [1], [0, 0, 1, 1], [], []>} : vector<8x32xbf16>, vector<32x32xbf16>, vector<8x32xf32> -> vector<8x32xf32>
    %c0_14 = arith.constant 0 : index
    %c0_15 = arith.constant 0 : index
    %12 = vector.load %arg6[%c0_14, %c0_15] : memref<32x32xbf16, #tpu.memory_space<vmem>>, vector<32x32xbf16>
    %cst_16 = arith.constant dense<0.000000e+00> : vector<8x32xf32>
    %13 = tpu.matmul %7, %12, %cst_16 {dimension_numbers = #tpu.dot_dimension_numbers<[1], [0], [0], [1], [0, 0, 1, 1], [], []>} : vector<8x32xbf16>, vector<32x32xbf16>, vector<8x32xf32> -> vector<8x32xf32>
    %14 = vector.extract_strided_slice %9 {offsets = [0, 0], sizes = [8, 8], strides = [1, 1]} : vector<8x32xf32> to vector<8x8xf32>
    %15 = vector.extract_strided_slice %11 {offsets = [0, 0], sizes = [8, 8], strides = [1, 1]} : vector<8x32xf32> to vector<8x8xf32>
    %16 = vector.extract_strided_slice %13 {offsets = [0, 0], sizes = [8, 8], strides = [1, 1]} : vector<8x32xf32> to vector<8x8xf32>
    %cst_17 = arith.constant dense<0.000000e+00> : vector<8x8xf32>
    %17 = tpu.matmul %14, %15, %cst_17 {dimension_numbers = #tpu.dot_dimension_numbers<[1], [1], [0], [0], [0, 0, 1, 0], [], []>} : vector<8x8xf32>, vector<8x8xf32>, vector<8x8xf32> -> vector<8x8xf32>
    %cst_18 = arith.constant 0.000000e+00 : f32
    %18 = vector.broadcast %cst_18 : f32 to vector<8x8xf32>
    %19 = arith.cmpf oeq, %5, %18 : vector<8x8xf32>
    %cst_19 = arith.constant -1.000000e+20 : f32
    %20 = vector.broadcast %cst_19 : f32 to vector<8x8xf32>
    %21 = arith.select %19, %20, %17 : vector<8x8xi1>, vector<8x8xf32>
    %cst_20 = arith.constant 0.176776692 : f32
    %22 = vector.broadcast %cst_20 : f32 to vector<8x8xf32>
    %23 = arith.mulf %21, %22 : vector<8x8xf32>
    %cst_21 = arith.constant dense<0xFF800000> : vector<8xf32>
    %24 = vector.multi_reduction <maximumf>, %23, %cst_21 [1] : vector<8x8xf32> to vector<8xf32>
    %25 = vector.shape_cast %24 : vector<8xf32> to vector<8x1xf32>
    %26 = vector.broadcast %25 : vector<8x1xf32> to vector<8x8xf32>
    %27 = arith.subf %23, %26 : vector<8x8xf32>
    %28 = math.exp %27 : vector<8x8xf32>
    %cst_22 = arith.constant dense<0.000000e+00> : vector<8xf32>
    %29 = vector.multi_reduction <add>, %28, %cst_22 [1] : vector<8x8xf32> to vector<8xf32>
    %30 = vector.shape_cast %29 : vector<8xf32> to vector<8x1xf32>
    %31 = tpu.reciprocal %30 {approx = true} : vector<8x1xf32> -> vector<8x1xf32>
    %32 = vector.broadcast %31 : vector<8x1xf32> to vector<8x8xf32>
    %33 = arith.mulf %28, %32 : vector<8x8xf32>
    %cst_23 = arith.constant dense<0.000000e+00> : vector<8x8xf32>
    %34 = tpu.matmul %33, %16, %cst_23 {dimension_numbers = #tpu.dot_dimension_numbers<[1], [0], [0], [1], [0, 0, 1, 1], [], []>} : vector<8x8xf32>, vector<8x8xf32>, vector<8x8xf32> -> vector<8x8xf32>
    %35 = vector.extract_strided_slice %9 {offsets = [0, 8], sizes = [8, 8], strides = [1, 1]} : vector<8x32xf32> to vector<8x8xf32>
    %36 = vector.extract_strided_slice %11 {offsets = [0, 8], sizes = [8, 8], strides = [1, 1]} : vector<8x32xf32> to vector<8x8xf32>
    %37 = vector.extract_strided_slice %13 {offsets = [0, 8], sizes = [8, 8], strides = [1, 1]} : vector<8x32xf32> to vector<8x8xf32>
    %cst_24 = arith.constant dense<0.000000e+00> : vector<8x8xf32>
    %38 = tpu.matmul %35, %36, %cst_24 {dimension_numbers = #tpu.dot_dimension_numbers<[1], [1], [0], [0], [0, 0, 1, 0], [], []>} : vector<8x8xf32>, vector<8x8xf32>, vector<8x8xf32> -> vector<8x8xf32>
    %cst_25 = arith.constant 0.000000e+00 : f32
    %39 = vector.broadcast %cst_25 : f32 to vector<8x8xf32>
    %40 = arith.cmpf oeq, %5, %39 : vector<8x8xf32>
    %cst_26 = arith.constant -1.000000e+20 : f32
    %41 = vector.broadcast %cst_26 : f32 to vector<8x8xf32>
    %42 = arith.select %40, %41, %38 : vector<8x8xi1>, vector<8x8xf32>
    %cst_27 = arith.constant 0.176776692 : f32
    %43 = vector.broadcast %cst_27 : f32 to vector<8x8xf32>
    %44 = arith.mulf %42, %43 : vector<8x8xf32>
    %cst_28 = arith.constant dense<0xFF800000> : vector<8xf32>
    %45 = vector.multi_reduction <maximumf>, %44, %cst_28 [1] : vector<8x8xf32> to vector<8xf32>
    %46 = vector.shape_cast %45 : vector<8xf32> to vector<8x1xf32>
    %47 = vector.broadcast %46 : vector<8x1xf32> to vector<8x8xf32>
    %48 = arith.subf %44, %47 : vector<8x8xf32>
    %49 = math.exp %48 : vector<8x8xf32>
    %cst_29 = arith.constant dense<0.000000e+00> : vector<8xf32>
    %50 = vector.multi_reduction <add>, %49, %cst_29 [1] : vector<8x8xf32> to vector<8xf32>
    %51 = vector.shape_cast %50 : vector<8xf32> to vector<8x1xf32>
    %52 = tpu.reciprocal %51 {approx = true} : vector<8x1xf32> -> vector<8x1xf32>
    %53 = vector.broadcast %52 : vector<8x1xf32> to vector<8x8xf32>
    %54 = arith.mulf %49, %53 : vector<8x8xf32>
    %cst_30 = arith.constant dense<0.000000e+00> : vector<8x8xf32>
    %55 = tpu.matmul %54, %37, %cst_30 {dimension_numbers = #tpu.dot_dimension_numbers<[1], [0], [0], [1], [0, 0, 1, 1], [], []>} : vector<8x8xf32>, vector<8x8xf32>, vector<8x8xf32> -> vector<8x8xf32>
    %56 = vector.extract_strided_slice %9 {offsets = [0, 16], sizes = [8, 8], strides = [1, 1]} : vector<8x32xf32> to vector<8x8xf32>
    %57 = vector.extract_strided_slice %11 {offsets = [0, 16], sizes = [8, 8], strides = [1, 1]} : vector<8x32xf32> to vector<8x8xf32>
    %58 = vector.extract_strided_slice %13 {offsets = [0, 16], sizes = [8, 8], strides = [1, 1]} : vector<8x32xf32> to vector<8x8xf32>
    %cst_31 = arith.constant dense<0.000000e+00> : vector<8x8xf32>
    %59 = tpu.matmul %56, %57, %cst_31 {dimension_numbers = #tpu.dot_dimension_numbers<[1], [1], [0], [0], [0, 0, 1, 0], [], []>} : vector<8x8xf32>, vector<8x8xf32>, vector<8x8xf32> -> vector<8x8xf32>
    %cst_32 = arith.constant 0.000000e+00 : f32
    %60 = vector.broadcast %cst_32 : f32 to vector<8x8xf32>
    %61 = arith.cmpf oeq, %5, %60 : vector<8x8xf32>
    %cst_33 = arith.constant -1.000000e+20 : f32
    %62 = vector.broadcast %cst_33 : f32 to vector<8x8xf32>
    %63 = arith.select %61, %62, %59 : vector<8x8xi1>, vector<8x8xf32>
    %cst_34 = arith.constant 0.176776692 : f32
    %64 = vector.broadcast %cst_34 : f32 to vector<8x8xf32>
    %65 = arith.mulf %63, %64 : vector<8x8xf32>
    %cst_35 = arith.constant dense<0xFF800000> : vector<8xf32>
    %66 = vector.multi_reduction <maximumf>, %65, %cst_35 [1] : vector<8x8xf32> to vector<8xf32>
    %67 = vector.shape_cast %66 : vector<8xf32> to vector<8x1xf32>
    %68 = vector.broadcast %67 : vector<8x1xf32> to vector<8x8xf32>
    %69 = arith.subf %65, %68 : vector<8x8xf32>
    %70 = math.exp %69 : vector<8x8xf32>
    %cst_36 = arith.constant dense<0.000000e+00> : vector<8xf32>
    %71 = vector.multi_reduction <add>, %70, %cst_36 [1] : vector<8x8xf32> to vector<8xf32>
    %72 = vector.shape_cast %71 : vector<8xf32> to vector<8x1xf32>
    %73 = tpu.reciprocal %72 {approx = true} : vector<8x1xf32> -> vector<8x1xf32>
    %74 = vector.broadcast %73 : vector<8x1xf32> to vector<8x8xf32>
    %75 = arith.mulf %70, %74 : vector<8x8xf32>
    %cst_37 = arith.constant dense<0.000000e+00> : vector<8x8xf32>
    %76 = tpu.matmul %75, %58, %cst_37 {dimension_numbers = #tpu.dot_dimension_numbers<[1], [0], [0], [1], [0, 0, 1, 1], [], []>} : vector<8x8xf32>, vector<8x8xf32>, vector<8x8xf32> -> vector<8x8xf32>
    %77 = vector.extract_strided_slice %9 {offsets = [0, 24], sizes = [8, 8], strides = [1, 1]} : vector<8x32xf32> to vector<8x8xf32>
    %78 = vector.extract_strided_slice %11 {offsets = [0, 24], sizes = [8, 8], strides = [1, 1]} : vector<8x32xf32> to vector<8x8xf32>
    %79 = vector.extract_strided_slice %13 {offsets = [0, 24], sizes = [8, 8], strides = [1, 1]} : vector<8x32xf32> to vector<8x8xf32>
    %cst_38 = arith.constant dense<0.000000e+00> : vector<8x8xf32>
    %80 = tpu.matmul %77, %78, %cst_38 {dimension_numbers = #tpu.dot_dimension_numbers<[1], [1], [0], [0], [0, 0, 1, 0], [], []>} : vector<8x8xf32>, vector<8x8xf32>, vector<8x8xf32> -> vector<8x8xf32>
    %cst_39 = arith.constant 0.000000e+00 : f32
    %81 = vector.broadcast %cst_39 : f32 to vector<8x8xf32>
    %82 = arith.cmpf oeq, %5, %81 : vector<8x8xf32>
    %cst_40 = arith.constant -1.000000e+20 : f32
    %83 = vector.broadcast %cst_40 : f32 to vector<8x8xf32>
    %84 = arith.select %82, %83, %80 : vector<8x8xi1>, vector<8x8xf32>
    %cst_41 = arith.constant 0.176776692 : f32
    %85 = vector.broadcast %cst_41 : f32 to vector<8x8xf32>
    %86 = arith.mulf %84, %85 : vector<8x8xf32>
    %cst_42 = arith.constant dense<0xFF800000> : vector<8xf32>
    %87 = vector.multi_reduction <maximumf>, %86, %cst_42 [1] : vector<8x8xf32> to vector<8xf32>
    %88 = vector.shape_cast %87 : vector<8xf32> to vector<8x1xf32>
    %89 = vector.broadcast %88 : vector<8x1xf32> to vector<8x8xf32>
    %90 = arith.subf %86, %89 : vector<8x8xf32>
    %91 = math.exp %90 : vector<8x8xf32>
    %cst_43 = arith.constant dense<0.000000e+00> : vector<8xf32>
    %92 = vector.multi_reduction <add>, %91, %cst_43 [1] : vector<8x8xf32> to vector<8xf32>
    %93 = vector.shape_cast %92 : vector<8xf32> to vector<8x1xf32>
    %94 = tpu.reciprocal %93 {approx = true} : vector<8x1xf32> -> vector<8x1xf32>
    %95 = vector.broadcast %94 : vector<8x1xf32> to vector<8x8xf32>
    %96 = arith.mulf %91, %95 : vector<8x8xf32>
    %cst_44 = arith.constant dense<0.000000e+00> : vector<8x8xf32>
    %97 = tpu.matmul %96, %79, %cst_44 {dimension_numbers = #tpu.dot_dimension_numbers<[1], [0], [0], [1], [0, 0, 1, 1], [], []>} : vector<8x8xf32>, vector<8x8xf32>, vector<8x8xf32> -> vector<8x8xf32>
    %98 = tpu.concatenate %34, %55, %76, %97 in 1 : vector<8x8xf32>, vector<8x8xf32>, vector<8x8xf32>, vector<8x8xf32> -> vector<8x32xf32>
    %99 = arith.truncf %98 : vector<8x32xf32> to vector<8x32xbf16>
    %c0_45 = arith.constant 0 : index
    %c0_46 = arith.constant 0 : index
    %100 = vector.load %arg7[%c0_45, %c0_46] : memref<32x32xbf16, #tpu.memory_space<vmem>>, vector<32x32xbf16>
    %cst_47 = arith.constant dense<0.000000e+00> : vector<8x32xf32>
    %101 = tpu.matmul %99, %100, %cst_47 {dimension_numbers = #tpu.dot_dimension_numbers<[1], [0], [0], [1], [0, 0, 1, 1], [], []>} : vector<8x32xbf16>, vector<32x32xbf16>, vector<8x32xf32> -> vector<8x32xf32>
    %c0_48 = arith.constant 0 : index
    %c0_49 = arith.constant 0 : index
    %102 = vector.load %arg8[%c0_48, %c0_49] : memref<1x32xf32, #tpu.memory_space<vmem>>, vector<1x32xf32>
    %103 = vector.broadcast %102 : vector<1x32xf32> to vector<8x32xf32>
    %104 = arith.addf %101, %103 : vector<8x32xf32>
    %105 = arith.addf %104, %1 : vector<8x32xf32>
    %cst_50 = arith.constant dense<0.000000e+00> : vector<8xf32>
    %106 = vector.multi_reduction <add>, %105, %cst_50 [1] : vector<8x32xf32> to vector<8xf32>
    %107 = vector.shape_cast %106 : vector<8xf32> to vector<8x1xf32>
    %cst_51 = arith.constant 3.200000e+01 : f32
    %108 = vector.broadcast %cst_51 : f32 to vector<8x1xf32>
    %109 = arith.divf %107, %108 : vector<8x1xf32>
    %110 = vector.broadcast %109 : vector<8x1xf32> to vector<8x32xf32>
    %111 = arith.subf %105, %110 : vector<8x32xf32>
    %112 = vector.broadcast %109 : vector<8x1xf32> to vector<8x32xf32>
    %113 = arith.subf %105, %112 : vector<8x32xf32>
    %114 = arith.mulf %111, %113 : vector<8x32xf32>
    %cst_52 = arith.constant dense<0.000000e+00> : vector<8xf32>
    %115 = vector.multi_reduction <add>, %114, %cst_52 [1] : vector<8x32xf32> to vector<8xf32>
    %116 = vector.shape_cast %115 : vector<8xf32> to vector<8x1xf32>
    %cst_53 = arith.constant 3.200000e+01 : f32
    %117 = vector.broadcast %cst_53 : f32 to vector<8x1xf32>
    %118 = arith.divf %116, %117 : vector<8x1xf32>
    %119 = vector.broadcast %109 : vector<8x1xf32> to vector<8x32xf32>
    %120 = arith.subf %105, %119 : vector<8x32xf32>
    %cst_54 = arith.constant 9.99999974E-6 : f32
    %121 = vector.broadcast %cst_54 : f32 to vector<8x1xf32>
    %122 = arith.addf %118, %121 : vector<8x1xf32>
    %123 = math.rsqrt %122 : vector<8x1xf32>
    %124 = vector.broadcast %123 : vector<8x1xf32> to vector<8x32xf32>
    %125 = arith.mulf %120, %124 : vector<8x32xf32>
    %c0_55 = arith.constant 0 : index
    %c0_56 = arith.constant 0 : index
    %126 = vector.load %arg9[%c0_55, %c0_56] : memref<1x32xf32, #tpu.memory_space<vmem>>, vector<1x32xf32>
    %127 = vector.broadcast %126 : vector<1x32xf32> to vector<8x32xf32>
    %128 = arith.mulf %125, %127 : vector<8x32xf32>
    %c0_57 = arith.constant 0 : index
    %c0_58 = arith.constant 0 : index
    %129 = vector.load %arg10[%c0_57, %c0_58] : memref<1x32xf32, #tpu.memory_space<vmem>>, vector<1x32xf32>
    %130 = vector.broadcast %129 : vector<1x32xf32> to vector<8x32xf32>
    %131 = arith.addf %128, %130 : vector<8x32xf32>
    %c0_59 = arith.constant 0 : index
    %c0_60 = arith.constant 0 : index
    %c0_61 = arith.constant 0 : index
    %132 = vector.load %arg11[%c0_59, %c0_60, %c0_61] : memref<1x8x32xf32, #tpu.memory_space<vmem>>, vector<1x8x32xf32>
    %133 = vector.shape_cast %132 : vector<1x8x32xf32> to vector<8x32xf32>
    %134 = vector.shape_cast %131 : vector<8x32xf32> to vector<1x8x32xf32>
    tpu.vector_store %arg11[%c0_59, %c0_60, %c0_61], %134 {strides = array<i32>} : memref<1x8x32xf32, #tpu.memory_space<vmem>>, vector<1x8x32xf32>,
    return
  }
  func.func @transform_0(%arg0: i32) -> (i32, i32, i32) {
    %c0_i32 = arith.constant 0 : i32
    %c0_i32_0 = arith.constant 0 : i32
    %c0_i32_1 = arith.constant 0 : i32
    return %arg0, %c0_i32, %c0_i32_0 : i32, i32, i32
  }
  func.func @transform_1(%arg0: i32) -> (i32, i32, i32) {
    %c0_i32 = arith.constant 0 : i32
    %c0_i32_0 = arith.constant 0 : i32
    %c0_i32_1 = arith.constant 0 : i32
    return %arg0, %c0_i32, %c0_i32_0 : i32, i32, i32
  }
  func.func @transform_2(%arg0: i32) -> (i32, i32, i32, i32) {
    %c0_i32 = arith.constant 0 : i32
    %c0_i32_0 = arith.constant 0 : i32
    %c0_i32_1 = arith.constant 0 : i32
    %c0_i32_2 = arith.constant 0 : i32
    return %arg0, %c0_i32, %c0_i32_0, %c0_i32_1 : i32, i32, i32, i32
  }
  func.func @transform_3(%arg0: i32) -> (i32, i32) {
    %c0_i32 = arith.constant 0 : i32
    %c0_i32_0 = arith.constant 0 : i32
    %c0_i32_1 = arith.constant 0 : i32
    return %c0_i32, %c0_i32_0 : i32, i32
  }
  func.func @transform_4(%arg0: i32) -> (i32, i32) {
    %c0_i32 = arith.constant 0 : i32
    %c0_i32_0 = arith.constant 0 : i32
    %c0_i32_1 = arith.constant 0 : i32
    return %c0_i32, %c0_i32_0 : i32, i32
  }
  func.func @transform_5(%arg0: i32) -> (i32, i32) {
    %c0_i32 = arith.constant 0 : i32
    %c0_i32_0 = arith.constant 0 : i32
    %c0_i32_1 = arith.constant 0 : i32
    return %c0_i32, %c0_i32_0 : i32, i32
  }
  func.func @transform_6(%arg0: i32) -> (i32, i32) {
    %c0_i32 = arith.constant 0 : i32
    %c0_i32_0 = arith.constant 0 : i32
    %c0_i32_1 = arith.constant 0 : i32
    return %c0_i32, %c0_i32_0 : i32, i32
  }
  func.func @transform_7(%arg0: i32) -> (i32, i32) {
    %c0_i32 = arith.constant 0 : i32
    %c0_i32_0 = arith.constant 0 : i32
    %c0_i32_1 = arith.constant 0 : i32
    return %c0_i32, %c0_i32_0 : i32, i32
  }
  func.func @transform_8(%arg0: i32) -> (i32, i32) {
    %c0_i32 = arith.constant 0 : i32
    %c0_i32_0 = arith.constant 0 : i32
    %c0_i32_1 = arith.constant 0 : i32
    return %c0_i32, %c0_i32_0 : i32, i32
  }
  func.func @transform_9(%arg0: i32) -> (i32, i32) {
    %c0_i32 = arith.constant 0 : i32
    %c0_i32_0 = arith.constant 0 : i32
    %c0_i32_1 = arith.constant 0 : i32
    return %c0_i32, %c0_i32_0 : i32, i32
  }
  func.func @transform_10(%arg0: i32) -> (i32, i32, i32) {
    %c0_i32 = arith.constant 0 : i32
    %c0_i32_0 = arith.constant 0 : i32
    %c0_i32_1 = arith.constant 0 : i32
    return %arg0, %c0_i32, %c0_i32_0 : i32, i32, i32
  }
}

module attributes {stable_mosaic.version = 11 : i64} {
  func.func @_ffn_block_kernel(%arg0: i32, %arg1: memref<1x8x32xf32, #tpu.memory_space<vmem>>, %arg2: memref<32x64xbf16, #tpu.memory_space<vmem>>, %arg3: memref<1x64xf32, #tpu.memory_space<vmem>>, %arg4: memref<64x32xbf16, #tpu.memory_space<vmem>>, %arg5: memref<1x32xf32, #tpu.memory_space<vmem>>, %arg6: memref<1x32xf32, #tpu.memory_space<vmem>>, %arg7: memref<1x32xf32, #tpu.memory_space<vmem>>, %arg8: memref<1x8x32xf32, #tpu.memory_space<vmem>>) attributes {dimension_semantics = [#tpu.dimension_semantics<parallel>], iteration_bounds = array<i64: 2>, scalar_prefetch = 0 : i64, scratch_operands = 0 : i64, tpu.core_type = #tpu.core_type<tc>, window_params = [{transform_indices = @transform_0, window_bounds = array<i64: 1, 8, 32>}, {pipeline_mode = #tpu.pipeline_mode<synchronous>, transform_indices = @transform_1, window_bounds = array<i64: 32, 64>}, {pipeline_mode = #tpu.pipeline_mode<synchronous>, transform_indices = @transform_2, window_bounds = array<i64: 1, 64>}, {pipeline_mode = #tpu.pipeline_mode<synchronous>, transform_indices = @transform_3, window_bounds = array<i64: 64, 32>}, {pipeline_mode = #tpu.pipeline_mode<synchronous>, transform_indices = @transform_4, window_bounds = array<i64: 1, 32>}, {pipeline_mode = #tpu.pipeline_mode<synchronous>, transform_indices = @transform_5, window_bounds = array<i64: 1, 32>}, {pipeline_mode = #tpu.pipeline_mode<synchronous>, transform_indices = @transform_6, window_bounds = array<i64: 1, 32>}, {transform_indices = @transform_7, window_bounds = array<i64: 1, 8, 32>}]} {
    %c0 = arith.constant 0 : index
    %c0_0 = arith.constant 0 : index
    %c0_1 = arith.constant 0 : index
    %0 = vector.load %arg1[%c0, %c0_0, %c0_1] : memref<1x8x32xf32, #tpu.memory_space<vmem>>, vector<1x8x32xf32>
    %1 = vector.shape_cast %0 : vector<1x8x32xf32> to vector<8x32xf32>
    %2 = arith.truncf %1 : vector<8x32xf32> to vector<8x32xbf16>
    %c0_2 = arith.constant 0 : index
    %c0_3 = arith.constant 0 : index
    %3 = vector.load %arg2[%c0_2, %c0_3] : memref<32x64xbf16, #tpu.memory_space<vmem>>, vector<32x64xbf16>
    %cst = arith.constant dense<0.000000e+00> : vector<8x64xf32>
    %4 = tpu.matmul %2, %3, %cst {dimension_numbers = #tpu.dot_dimension_numbers<[1], [0], [0], [1], [0, 0, 1, 1], [], []>} : vector<8x32xbf16>, vector<32x64xbf16>, vector<8x64xf32> -> vector<8x64xf32>
    %c0_4 = arith.constant 0 : index
    %c0_5 = arith.constant 0 : index
    %5 = vector.load %arg3[%c0_4, %c0_5] : memref<1x64xf32, #tpu.memory_space<vmem>>, vector<1x64xf32>
    %6 = vector.broadcast %5 : vector<1x64xf32> to vector<8x64xf32>
    %7 = arith.addf %4, %6 : vector<8x64xf32>
    %cst_6 = arith.constant 0.000000e+00 : f32
    %8 = vector.broadcast %cst_6 : f32 to vector<8x64xf32>
    %9 = arith.maximumf %7, %8 : vector<8x64xf32>
    %10 = arith.truncf %9 : vector<8x64xf32> to vector<8x64xbf16>
    %c0_7 = arith.constant 0 : index
    %c0_8 = arith.constant 0 : index
    %11 = vector.load %arg4[%c0_7, %c0_8] : memref<64x32xbf16, #tpu.memory_space<vmem>>, vector<64x32xbf16>
    %cst_9 = arith.constant dense<0.000000e+00> : vector<8x32xf32>
    %12 = tpu.matmul %10, %11, %cst_9 {dimension_numbers = #tpu.dot_dimension_numbers<[1], [0], [0], [1], [0, 0, 1, 1], [], []>} : vector<8x64xbf16>, vector<64x32xbf16>, vector<8x32xf32> -> vector<8x32xf32>
    %c0_10 = arith.constant 0 : index
    %c0_11 = arith.constant 0 : index
    %13 = vector.load %arg5[%c0_10, %c0_11] : memref<1x32xf32, #tpu.memory_space<vmem>>, vector<1x32xf32>
    %14 = vector.broadcast %13 : vector<1x32xf32> to vector<8x32xf32>
    %15 = arith.addf %12, %14 : vector<8x32xf32>
    %16 = arith.addf %15, %1 : vector<8x32xf32>
    %cst_12 = arith.constant dense<0.000000e+00> : vector<8xf32>
    %17 = vector.multi_reduction <add>, %16, %cst_12 [1] : vector<8x32xf32> to vector<8xf32>
    %18 = vector.shape_cast %17 : vector<8xf32> to vector<8x1xf32>
    %cst_13 = arith.constant 3.200000e+01 : f32
    %19 = vector.broadcast %cst_13 : f32 to vector<8x1xf32>
    %20 = arith.divf %18, %19 : vector<8x1xf32>
    %21 = vector.broadcast %20 : vector<8x1xf32> to vector<8x32xf32>
    %22 = arith.subf %16, %21 : vector<8x32xf32>
    %23 = vector.broadcast %20 : vector<8x1xf32> to vector<8x32xf32>
    %24 = arith.subf %16, %23 : vector<8x32xf32>
    %25 = arith.mulf %22, %24 : vector<8x32xf32>
    %cst_14 = arith.constant dense<0.000000e+00> : vector<8xf32>
    %26 = vector.multi_reduction <add>, %25, %cst_14 [1] : vector<8x32xf32> to vector<8xf32>
    %27 = vector.shape_cast %26 : vector<8xf32> to vector<8x1xf32>
    %cst_15 = arith.constant 3.200000e+01 : f32
    %28 = vector.broadcast %cst_15 : f32 to vector<8x1xf32>
    %29 = arith.divf %27, %28 : vector<8x1xf32>
    %30 = vector.broadcast %20 : vector<8x1xf32> to vector<8x32xf32>
    %31 = arith.subf %16, %30 : vector<8x32xf32>
    %cst_16 = arith.constant 9.99999974E-6 : f32
    %32 = vector.broadcast %cst_16 : f32 to vector<8x1xf32>
    %33 = arith.addf %29, %32 : vector<8x1xf32>
    %34 = math.rsqrt %33 : vector<8x1xf32>
    %35 = vector.broadcast %34 : vector<8x1xf32> to vector<8x32xf32>
    %36 = arith.mulf %31, %35 : vector<8x32xf32>
    %c0_17 = arith.constant 0 : index
    %c0_18 = arith.constant 0 : index
    %37 = vector.load %arg6[%c0_17, %c0_18] : memref<1x32xf32, #tpu.memory_space<vmem>>, vector<1x32xf32>
    %38 = vector.broadcast %37 : vector<1x32xf32> to vector<8x32xf32>
    %39 = arith.mulf %36, %38 : vector<8x32xf32>
    %c0_19 = arith.constant 0 : index
    %c0_20 = arith.constant 0 : index
    %40 = vector.load %arg7[%c0_19, %c0_20] : memref<1x32xf32, #tpu.memory_space<vmem>>, vector<1x32xf32>
    %41 = vector.broadcast %40 : vector<1x32xf32> to vector<8x32xf32>
    %42 = arith.addf %39, %41 : vector<8x32xf32>
    %c0_21 = arith.constant 0 : index
    %c0_22 = arith.constant 0 : index
    %c0_23 = arith.constant 0 : index
    %43 = vector.load %arg8[%c0_21, %c0_22, %c0_23] : memref<1x8x32xf32, #tpu.memory_space<vmem>>, vector<1x8x32xf32>
    %44 = vector.shape_cast %43 : vector<1x8x32xf32> to vector<8x32xf32>
    %45 = vector.shape_cast %42 : vector<8x32xf32> to vector<1x8x32xf32>
    tpu.vector_store %arg8[%c0_21, %c0_22, %c0_23], %45 {strides = array<i32>} : memref<1x8x32xf32, #tpu.memory_space<vmem>>, vector<1x8x32xf32>,
    return
  }
  func.func @transform_0(%arg0: i32) -> (i32, i32, i32) {
    %c0_i32 = arith.constant 0 : i32
    %c0_i32_0 = arith.constant 0 : i32
    %c0_i32_1 = arith.constant 0 : i32
    return %arg0, %c0_i32, %c0_i32_0 : i32, i32, i32
  }
  func.func @transform_1(%arg0: i32) -> (i32, i32) {
    %c0_i32 = arith.constant 0 : i32
    %c0_i32_0 = arith.constant 0 : i32
    %c0_i32_1 = arith.constant 0 : i32
    return %c0_i32, %c0_i32_0 : i32, i32
  }
  func.func @transform_2(%arg0: i32) -> (i32, i32) {
    %c0_i32 = arith.constant 0 : i32
    %c0_i32_0 = arith.constant 0 : i32
    %c0_i32_1 = arith.constant 0 : i32
    return %c0_i32, %c0_i32_0 : i32, i32
  }
  func.func @transform_3(%arg0: i32) -> (i32, i32) {
    %c0_i32 = arith.constant 0 : i32
    %c0_i32_0 = arith.constant 0 : i32
    %c0_i32_1 = arith.constant 0 : i32
    return %c0_i32, %c0_i32_0 : i32, i32
  }
  func.func @transform_4(%arg0: i32) -> (i32, i32) {
    %c0_i32 = arith.constant 0 : i32
    %c0_i32_0 = arith.constant 0 : i32
    %c0_i32_1 = arith.constant 0 : i32
    return %c0_i32, %c0_i32_0 : i32, i32
  }
  func.func @transform_5(%arg0: i32) -> (i32, i32) {
    %c0_i32 = arith.constant 0 : i32
    %c0_i32_0 = arith.constant 0 : i32
    %c0_i32_1 = arith.constant 0 : i32
    return %c0_i32, %c0_i32_0 : i32, i32
  }
  func.func @transform_6(%arg0: i32) -> (i32, i32) {
    %c0_i32 = arith.constant 0 : i32
    %c0_i32_0 = arith.constant 0 : i32
    %c0_i32_1 = arith.constant 0 : i32
    return %c0_i32, %c0_i32_0 : i32, i32
  }
  func.func @transform_7(%arg0: i32) -> (i32, i32, i32) {
    %c0_i32 = arith.constant 0 : i32
    %c0_i32_0 = arith.constant 0 : i32
    %c0_i32_1 = arith.constant 0 : i32
    return %arg0, %c0_i32, %c0_i32_0 : i32, i32, i32
  }
}

module attributes {stable_mosaic.version = 11 : i64} {
  func.func @_out_proj_kernel(%arg0: i32, %arg1: memref<1x8x32xf32, #tpu.memory_space<vmem>>, %arg2: memref<32x4xbf16, #tpu.memory_space<vmem>>, %arg3: memref<1x4xf32, #tpu.memory_space<vmem>>, %arg4: memref<1x8x4xf32, #tpu.memory_space<vmem>>) attributes {dimension_semantics = [#tpu.dimension_semantics<parallel>], iteration_bounds = array<i64: 2>, scalar_prefetch = 0 : i64, scratch_operands = 0 : i64, tpu.core_type = #tpu.core_type<tc>, window_params = [{transform_indices = @transform_0, window_bounds = array<i64: 1, 8, 32>}, {pipeline_mode = #tpu.pipeline_mode<synchronous>, transform_indices = @transform_1, window_bounds = array<i64: 32, 4>}, {pipeline_mode = #tpu.pipeline_mode<synchronous>, transform_indices = @transform_2, window_bounds = array<i64: 1, 4>}, {transform_indices = @transform_3, window_bounds = array<i64: 1, 8, 4>}]} {
    %c0 = arith.constant 0 : index
    %c0_0 = arith.constant 0 : index
    %c0_1 = arith.constant 0 : index
    %0 = vector.load %arg1[%c0, %c0_0, %c0_1] : memref<1x8x32xf32, #tpu.memory_space<vmem>>, vector<1x8x32xf32>
    %1 = vector.shape_cast %0 : vector<1x8x32xf32> to vector<8x32xf32>
    %2 = arith.truncf %1 : vector<8x32xf32> to vector<8x32xbf16>
    %c0_2 = arith.constant 0 : index
    %c0_3 = arith.constant 0 : index
    %3 = vector.load %arg2[%c0_2, %c0_3] : memref<32x4xbf16, #tpu.memory_space<vmem>>, vector<32x4xbf16>
    %cst = arith.constant dense<0.000000e+00> : vector<8x4xf32>
    %4 = tpu.matmul %2, %3, %cst {dimension_numbers = #tpu.dot_dimension_numbers<[1], [0], [0], [1], [0, 0, 1, 1], [], []>} : vector<8x32xbf16>, vector<32x4xbf16>, vector<8x4xf32> -> vector<8x4xf32>
    %c0_4 = arith.constant 0 : index
    %c0_5 = arith.constant 0 : index
    %5 = vector.load %arg3[%c0_4, %c0_5] : memref<1x4xf32, #tpu.memory_space<vmem>>, vector<1x4xf32>
    %6 = vector.broadcast %5 : vector<1x4xf32> to vector<8x4xf32>
    %7 = arith.addf %4, %6 : vector<8x4xf32>
    %c0_6 = arith.constant 0 : index
    %c0_7 = arith.constant 0 : index
    %c0_8 = arith.constant 0 : index
    %8 = vector.load %arg4[%c0_6, %c0_7, %c0_8] : memref<1x8x4xf32, #tpu.memory_space<vmem>>, vector<1x8x4xf32>
    %9 = vector.shape_cast %8 : vector<1x8x4xf32> to vector<8x4xf32>
    %10 = vector.shape_cast %7 : vector<8x4xf32> to vector<1x8x4xf32>
    tpu.vector_store %arg4[%c0_6, %c0_7, %c0_8], %10 {strides = array<i32>} : memref<1x8x4xf32, #tpu.memory_space<vmem>>, vector<1x8x4xf32>,
    return
  }
  func.func @transform_0(%arg0: i32) -> (i32, i32, i32) {
    %c0_i32 = arith.constant 0 : i32
    %c0_i32_0 = arith.constant 0 : i32
    %c0_i32_1 = arith.constant 0 : i32
    return %arg0, %c0_i32, %c0_i32_0 : i32, i32, i32
  }
  func.func @transform_1(%arg0: i32) -> (i32, i32) {
    %c0_i32 = arith.constant 0 : i32
    %c0_i32_0 = arith.constant 0 : i32
    %c0_i32_1 = arith.constant 0 : i32
    return %c0_i32, %c0_i32_0 : i32, i32
  }
  func.func @transform_2(%arg0: i32) -> (i32, i32) {
    %c0_i32 = arith.constant 0 : i32
    %c0_i32_0 = arith.constant 0 : i32
    %c0_i32_1 = arith.constant 0 : i32
    return %c0_i32, %c0_i32_0 : i32, i32
  }
  func.func @transform_3(%arg0: i32) -> (i32, i32, i32) {
    %c0_i32 = arith.constant 0 : i32
    %c0_i32_0 = arith.constant 0 : i32
    %c0_i32_1 = arith.constant 0 : i32
    return %arg0, %c0_i32, %c0_i32_0 : i32, i32, i32
  }
}

</mosaic_0001>

<llo_original>
// kernel: decoder_forward.8
$region0: #{decoder_forward.8}
  #allocation0 [shape = 'u32[]', space=smem, size = 0x4, offset = 0x4, fixed_abs, tag = 'smem constant byte address 0x4 - core index']
  #allocation1 [shape = 'u32[144,128]{1,0:T(1,128)}', space=vmem, size = 0x12000, scoped, tag = 'internal scratch']
  %s0 = inlined_call_operand.vmem [shape: f32[2,8,4], index: 0, kind: input, shape index: {}]
  %s1 = inlined_call_operand.vmem [shape: bf16[4,32], index: 1, kind: input, shape index: {}]
  %s2 = inlined_call_operand.vmem [shape: f32[1,32], index: 2, kind: input, shape index: {}]
  %s3 = inlined_call_operand.vmem [shape: f32[8,32], index: 3, kind: input, shape index: {}]
  %s4 = inlined_call_operand.vmem [shape: f32[2,8,32], index: 4, kind: output, shape index: {}]
  %s5 = sld [smem:[#allocation0]]
  $region49: #{decoder_forward.8} parent=0
    _
  %s7 = ssub.s32 1, %s5
  %s8 = scalar_select 0, %s7, %s5
  loop: start=0, step=1, limit=4
  $region2: #{decoder_forward.8} parent=0 // loop_pre_header
    _
  $region3: #{decoder_forward.8} parent=0 // loop_header
    %s10 = sphi 0, %s14
    %p11 = scmp.ge.s32.totalorder %s10, 4
    %s20 = sphi 0, %s22
    %s23 = sphi 0, %s20
    %s24 = sphi 0, %s23
    %s40 = sphi 0, %s24
    %s44 = sphi 0, %s44
    %s46 = sphi 0, %s44
    %s47 = sphi 0, %s46
    %s61 = sphi 0, %s47
    %s65 = sphi 0, %s65
    %s67 = sphi 0, %s65
    %s68 = sphi 0, %s67
    %s82 = sphi 0, %s68
    %s86 = sphi 0, %s86
    %s88 = sphi 0, %s86
    %s89 = sphi 0, %s88
    %s103 = sphi 0, %s89
    %s109 = sphi 0, %s111
    %s112 = sphi 0, %s109
    %s113 = sphi 0, %s112
    %s129 = sphi 0, %s113
  $region4: #{decoder_forward.8} parent=0 // loop_header_branch
    %13 = sbr.rel (%p11) target = $region8
  $region5: #{decoder_forward.8} parent=0 // loop_body
    %s15 = ssub.s32 %s10, 1
    %s16 = ssub.s32 %s10, 2
    %s17 = sadd.s32 %s10, 1
    %s18 = ssub.s32 %s10, %s17
    %p19 = scmp.eq.s32.totalorder %s18, 0
    %s21 = sadd.s32 %s20, 1
    %s22 = scalar_select %p19, %s20, %s21
    %p25 = pneg %p19
    %p26 = scmp.eq.s32.totalorder %s10, 1
    %p27 = por %p25, %p26
    %p28 = scmp.ne.s32.totalorder %s20, %s23
    %p29 = scmp.eq.s32.totalorder %s10, 0
    %p30 = por %p28, %p29
    %p31 = scmp.ne.s32.totalorder %s20, %s23
    %p32 = scmp.eq.s32.totalorder %s15, 1
    %p33 = por %p31, %p32
    %p34 = scmp.ne.s32.totalorder %s23, %s24
    %p35 = scmp.eq.s32.totalorder %s15, 0
    %p36 = por %p34, %p35
    %p37 = scmp.ne.s32.totalorder %s23, %s24
    %p38 = scmp.eq.s32.totalorder %s16, 1
    %p39 = por %p37, %p38
    %p41 = scmp.ne.s32.totalorder %s24, %s40
    %p42 = scmp.eq.s32.totalorder %s16, 0
    %p43 = por %p41, %p42
    %s45 = sadd.s32 %s44, 1
    %p48 = scmp.eq.s32.totalorder %s10, 1
    %p49 = scmp.ne.s32.totalorder %s44, %s46
    %p50 = scmp.eq.s32.totalorder %s10, 0
    %p51 = por %p49, %p50
    %p52 = scmp.ne.s32.totalorder %s44, %s46
    %p53 = scmp.eq.s32.totalorder %s15, 1
    %p54 = por %p52, %p53
    %p55 = scmp.ne.s32.totalorder %s46, %s47
    %p56 = scmp.eq.s32.totalorder %s15, 0
    %p57 = por %p55, %p56
    %p58 = scmp.ne.s32.totalorder %s46, %s47
    %p59 = scmp.eq.s32.totalorder %s16, 1
    %p60 = por %p58, %p59
    %p62 = scmp.ne.s32.totalorder %s47, %s61
    %p63 = scmp.eq.s32.totalorder %s16, 0
    %p64 = por %p62, %p63
    %s66 = sadd.s32 %s65, 1
    %p69 = scmp.eq.s32.totalorder %s10, 1
    %p70 = scmp.ne.s32.totalorder %s65, %s67
    %p71 = scmp.eq.s32.totalorder %s10, 0
    %p72 = por %p70, %p71
    %p73 = scmp.ne.s32.totalorder %s65, %s67
    %p74 = scmp.eq.s32.totalorder %s15, 1
    %p75 = por %p73, %p74
    %p76 = scmp.ne.s32.totalorder %s67, %s68
    %p77 = scmp.eq.s32.totalorder %s15, 0
    %p78 = por %p76, %p77
    %p79 = scmp.ne.s32.totalorder %s67, %s68
    %p80 = scmp.eq.s32.totalorder %s16, 1
    %p81 = por %p79, %p80
    %p83 = scmp.ne.s32.totalorder %s68, %s82
    %p84 = scmp.eq.s32.totalorder %s16, 0
    %p85 = por %p83, %p84
    %s87 = sadd.s32 %s86, 1
    %p90 = scmp.eq.s32.totalorder %s10, 1
    %p91 = scmp.ne.s32.totalorder %s86, %s88
    %p92 = scmp.eq.s32.totalorder %s10, 0
    %p93 = por %p91, %p92
    %p94 = scmp.ne.s32.totalorder %s86, %s88
    %p95 = scmp.eq.s32.totalorder %s15, 1
    %p96 = por %p94, %p95
    %p97 = scmp.ne.s32.totalorder %s88, %s89
    %p98 = scmp.eq.s32.totalorder %s15, 0
    %p99 = por %p97, %p98
    %p100 = scmp.ne.s32.totalorder %s88, %s89
    %p101 = scmp.eq.s32.totalorder %s16, 1
    %p102 = por %p100, %p101
    %p104 = scmp.ne.s32.totalorder %s89, %s103
    %p105 = scmp.eq.s32.totalorder %s16, 0
    %p106 = por %p104, %p105
    %s107 = ssub.s32 %s10, %s17
    %p108 = scmp.eq.s32.totalorder %s107, 0
    %s110 = sadd.s32 %s109, 1
    %s111 = scalar_select %p108, %s109, %s110
    %p114 = pneg %p108
    %p115 = scmp.eq.s32.totalorder %s10, 1
    %p116 = por %p114, %p115
    %p117 = scmp.ne.s32.totalorder %s109, %s112
    %p118 = scmp.eq.s32.totalorder %s10, 0
    %p119 = por %p117, %p118
    %p120 = scmp.ne.s32.totalorder %s109, %s112
    %p121 = scmp.eq.s32.totalorder %s15, 1
    %p122 = por %p120, %p121
    %p123 = scmp.ne.s32.totalorder %s112, %s113
    %p124 = scmp.eq.s32.totalorder %s15, 0
    %p125 = por %p123, %p124
    %p126 = scmp.ne.s32.totalorder %s112, %s113
    %p127 = scmp.eq.s32.totalorder %s16, 1
    %p128 = por %p126, %p127
    %p130 = scmp.ne.s32.totalorder %s113, %s129
    %p131 = scmp.eq.s32.totalorder %s16, 0
    %p132 = por %p130, %p131
    %p133 = scmp.le.s32.totalorder 1, %s10
    %p134 = scmp.lt.s32.totalorder %s10, 3
    %p135 = pnand %p133, %p134
    %p136 = pneg %p135
    // Predicated region
    $region9: #{decoder_forward.8} parent=5 // pred_check
      _
    $region10: #{decoder_forward.8} parent=5 // pred_check_branch
      %138 = sbr.rel (%p135) target = $region12
    $region11: #{decoder_forward.8} parent=5 // pred_region
      %s139 = ssub.s32 %s10, 1
      // Predicated region
      $region13: #{decoder_forward.8} parent=11 // pred_check
        %p140 = pneg %p57
      $region14: #{decoder_forward.8} parent=11 // pred_check_branch
        %142 = sbr.rel (%p140) target = $region16
      $region15: #{decoder_forward.8} parent=11 // pred_region
        _
      $region16: #{decoder_forward.8} parent=11 // pred_fallthru
        _
      // Predicated region
      $region17: #{decoder_forward.8} parent=11 // pred_check
        %p143 = pneg %p78
      $region18: #{decoder_forward.8} parent=11 // pred_check_branch
        %145 = sbr.rel (%p143) target = $region20
      $region19: #{decoder_forward.8} parent=11 // pred_region
        _
      $region20: #{decoder_forward.8} parent=11 // pred_fallthru
        _
      // Predicated region
      $region21: #{decoder_forward.8} parent=11 // pred_check
        %p146 = pneg %p99
      $region22: #{decoder_forward.8} parent=11 // pred_check_branch
        %148 = sbr.rel (%p146) target = $region24
      $region23: #{decoder_forward.8} parent=11 // pred_region
        _
      $region24: #{decoder_forward.8} parent=11 // pred_fallthru
        _
    $region12: #{decoder_forward.8} parent=5 // pred_fallthru
      _
    %p149 = scmp.lt.s32.totalorder %s10, 2
    // Predicated region
    $region25: #{decoder_forward.8} parent=5 // pred_check
      %p150 = pneg %p149
    $region26: #{decoder_forward.8} parent=5 // pred_check_branch
      %152 = sbr.rel (%p150) target = $region28
    $region27: #{decoder_forward.8} parent=5 // pred_region
      // Predicated region
      $region29: #{decoder_forward.8} parent=27 // pred_check
        %p153 = pneg %p30
      $region30: #{decoder_forward.8} parent=27 // pred_check_branch
        %155 = sbr.rel (%p153) target = $region32
      $region31: #{decoder_forward.8} parent=27 // pred_region
        %p156 = scmp.lt.s32.totalorder %s10, 1
        %s157 = scalar_select %p156, %s10, 1
        %s158 = smul.addr %s157, 8
        %s159 = scalar_lea.vmem %s0, %s158
      $region32: #{decoder_forward.8} parent=27 // pred_fallthru
        _
    $region28: #{decoder_forward.8} parent=5 // pred_fallthru
      _
    %p160 = scmp.le.s32.totalorder 1, %s10
    %p161 = scmp.lt.s32.totalorder %s10, 3
    %p162 = pnand %p160, %p161
    %p163 = pneg %p162
    // Predicated region
    $region33: #{decoder_forward.8} parent=5 // pred_check
      _
    $region34: #{decoder_forward.8} parent=5 // pred_check_branch
      %165 = sbr.rel (%p162) target = $region36
    $region35: #{decoder_forward.8} parent=5 // pred_region
      %s166 = ssub.s32 %s10, 1
      %p167 = scmp.lt.s32.totalorder %s15, 1
      %s168 = scalar_select %p167, %s15, 1
      %s169 = smul.addr %s168, 8
      %s170 = scalar_lea.vmem %s0, %s169
      %p171 = pneg %p36
      %p172 = pneg %p33
      %p173 = pneg %p57
      %p174 = pneg %p54
      %p175 = pneg %p78
      %p176 = pneg %p75
      %p177 = pneg %p99
      %p178 = pneg %p96
      %p179 = pneg %p125
      %p180 = pneg %p122
      %p181 = scmp.lt.s32.totalorder %s15, 1
      %s182 = scalar_select %p181, %s15, 1
      %s183 = smul.addr %s182, 8
      %s184 = scalar_lea.vmem %s4, %s183
      %p185 = scmp.lt.s32.totalorder %s15, 1
      %s186 = scalar_select %p185, %s15, 1
      %s187 = smul.addr %s186, 8
      %s188 = scalar_lea.vmem %s0, %s187
      %p189 = scmp.lt.s32.totalorder %s15, 1
      %s190 = scalar_select %p189, %s15, 1
      %s191 = smul.addr %s190, 8
      %s192 = scalar_lea.vmem %s4, %s191
      %v194 = vld [vmem:[%s188] sm:$0xff]
      %v195 = vpack.c.bf16 %v194, %v194
      %v196 = vld [vmem:[%s1] sm:$0x3]
      %v197 = vld [vmem:[%s2] sm:$0x1]
      %v199 = vlaneseq
      %v200 = vshrl.u32 %v199, 7
      %v201 = vsub.s32 0, %v200
      %v202 = vrot.slane %v197, %v201
      %vm204 = vcmask 31744
      %v206 = vsel %vm204, %v195, 0
      %vm208 = vcmask 1041408
      %v210 = vsel %vm208, %v196, 0
      %212 = vmatprep.subr.bf16.mxu0 0
      %213 = vmatpush1.bf16.msra.mxu0 0
      %214 = vmatprep.subr.bf16.mxu0 0
      %215 = vmatpush1.bf16.msra.mxu0 0
      %216 = vmatprep.subr.bf16.mxu0 0
      %217 = vmatpush1.bf16.msra.mxu0 0
      %218 = vmatprep.subr.bf16.mxu0 0
      %219 = vmatpush1.bf16.msra.mxu0 0
      %220 = vmatprep.subr.bf16.mxu0 0
      %221 = vmatpush1.bf16.msra.mxu0 0
      %222 = vmatprep.subr.bf16.mxu0 0
      %223 = vmatpush1.bf16.msra.mxu0 0
      %224 = vmatprep.subr.bf16.mxu0 0
      %225 = vmatpush1.bf16.msra.mxu0 0
      %226 = vmatprep.subr.bf16.mxu0 0
      %227 = vmatpush1.bf16.msra.mxu0 %v210
      %228 = vmatprep.subr.bf16.mxu0 0
      %229 = vmatpush2.bf16.msra.mxu0 0
      %230 = vmatprep.subr.bf16.mxu0 0
      %231 = vmatpush2.bf16.msra.mxu0 0
      %232 = vmatprep.subr.bf16.mxu0 0
      %233 = vmatpush2.bf16.msra.mxu0 0
      %234 = vmatprep.subr.bf16.mxu0 0
      %235 = vmatpush2.bf16.msra.mxu0 0
      %236 = vmatprep.subr.bf16.mxu0 0
      %237 = vmatpush2.bf16.msra.mxu0 0
      %238 = vmatprep.subr.bf16.mxu0 0
      %239 = vmatpush2.bf16.msra.mxu0 0
      %240 = vmatprep.subr.bf16.mxu0 0
      %241 = vmatpush2.bf16.msra.mxu0 0
      %242 = vmatprep.subr.bf16.mxu0 0
      %243 = vmatpush2.bf16.msra.mxu0 0
      %244 = vmatprep.mubr.bf16.mxu0 0
      %245 = vmatmul.mubr.bf16.gmra.mxu0 %v206
      %v246 = vpop.f32.mrf.mxu0
      %v247 = vadd.f32 %v202, %v246
      %v248 = vpop.f32.mrf.mxu0
      %v249 = vpop.f32.mrf.mxu0
      %v250 = vpop.f32.mrf.mxu0
      %251 = vdwg.mxu0
      %v252 = vld [vmem:[%s3] sm:$0xff]
      %v253 = vadd.f32 %v247, %v252
      %vm254 = vcmask 261120
      %255 = vst.msk [vmem:[%s192] sm:$0xff] %vm254, %v253
      %p256 = scmp.lt.s32.totalorder %s15, 1
      %s257 = scalar_select %p256, %s15, 1
      %s258 = smul.addr %s257, 8
      %s259 = scalar_lea.vmem %s4, %s258
      // Predicated region
      $region37: #{decoder_forward.8} parent=35 // pred_check
        %p260 = pneg %p122
      $region38: #{decoder_forward.8} parent=35 // pred_check_branch
        %262 = sbr.rel (%p260) target = $region40
      $region39: #{decoder_forward.8} parent=35 // pred_region
        _
      $region40: #{decoder_forward.8} parent=35 // pred_fallthru
        _
    $region36: #{decoder_forward.8} parent=5 // pred_fallthru
      _
    %p263 = scmp.le.s32.totalorder 2, %s10
    // Predicated region
    $region41: #{decoder_forward.8} parent=5 // pred_check
      %p264 = pneg %p263
    $region42: #{decoder_forward.8} parent=5 // pred_check_branch
      %266 = sbr.rel (%p264) target = $region44
    $region43: #{decoder_forward.8} parent=5 // pred_region
      %s267 = ssub.s32 %s10, 2
      // Predicated region
      $region45: #{decoder_forward.8} parent=43 // pred_check
        %p268 = pneg %p128
      $region46: #{decoder_forward.8} parent=43 // pred_check_branch
        %270 = sbr.rel (%p268) target = $region48
      $region47: #{decoder_forward.8} parent=43 // pred_region
        %p271 = scmp.lt.s32.totalorder %s16, 1
        %s272 = scalar_select %p271, %s16, 1
        %s273 = smul.addr %s272, 8
        %s274 = scalar_lea.vmem %s4, %s273
      $region48: #{decoder_forward.8} parent=43 // pred_fallthru
        _
    $region44: #{decoder_forward.8} parent=5 // pred_fallthru
      _
  $region6: #{decoder_forward.8} parent=0 // loop_footer
    %s14 = sadd.s32 1, %s10
  $region7: #{decoder_forward.8} parent=0 // loop_footer_branch
    %9 = sbr.rel target = $region3
  $region8: #{decoder_forward.8} parent=0 // loop_exit
    _

// kernel: decoder_forward.10
$region0: #{decoder_forward.10}
  #allocation0 [shape = 'u32[]', space=smem, size = 0x4, offset = 0x4, fixed_abs, tag = 'smem constant byte address 0x4 - core index']
  #allocation1 [shape = 'u32[144,128]{1,0:T(1,128)}', space=vmem, size = 0x12000, scoped, tag = 'internal scratch']
  %s0 = inlined_call_operand.vmem [shape: f32[2,8,32], index: 0, kind: input, shape index: {}]
  %s1 = inlined_call_operand.vmem [shape: f32[2,8,32], index: 1, kind: input, shape index: {}]
  %s2 = inlined_call_operand.vmem [shape: f32[2,1,1,8], index: 2, kind: input, shape index: {}]
  %s3 = inlined_call_operand.vmem [shape: bf16[32,32], index: 3, kind: input, shape index: {}]
  %s4 = inlined_call_operand.vmem [shape: bf16[32,32], index: 4, kind: input, shape index: {}]
  %s5 = inlined_call_operand.vmem [shape: bf16[32,32], index: 5, kind: input, shape index: {}]
  %s6 = inlined_call_operand.vmem [shape: bf16[32,32], index: 6, kind: input, shape index: {}]
  %s7 = inlined_call_operand.vmem [shape: f32[1,32], index: 7, kind: input, shape index: {}]
  %s8 = inlined_call_operand.vmem [shape: f32[1,32], index: 8, kind: input, shape index: {}]
  %s9 = inlined_call_operand.vmem [shape: f32[1,32], index: 9, kind: input, shape index: {}]
  %s10 = inlined_call_operand.vmem [shape: f32[2,8,32], index: 10, kind: output, shape index: {}]
  %s11 = sld [smem:[#allocation0]]
  $region73: #{decoder_forward.10} parent=0
    _
  %s13 = ssub.s32 1, %s11
  %s14 = scalar_select 0, %s13, %s11
  loop: start=0, step=1, limit=4
  $region2: #{decoder_forward.10} parent=0 // loop_pre_header
    _
  $region3: #{decoder_forward.10} parent=0 // loop_header
    %s16 = sphi 0, %s20
    %p17 = scmp.ge.s32.totalorder %s16, 4
    %s26 = sphi 0, %s28
    %s29 = sphi 0, %s26
    %s30 = sphi 0, %s29
    %s46 = sphi 0, %s30
    %s52 = sphi 0, %s54
    %s55 = sphi 0, %s52
    %s56 = sphi 0, %s55
    %s72 = sphi 0, %s56
    %s78 = sphi 0, %s80
    %s81 = sphi 0, %s78
    %s82 = sphi 0, %s81
    %s98 = sphi 0, %s82
    %s102 = sphi 0, %s102
    %s104 = sphi 0, %s102
    %s105 = sphi 0, %s104
    %s119 = sphi 0, %s105
    %s123 = sphi 0, %s123
    %s125 = sphi 0, %s123
    %s126 = sphi 0, %s125
    %s140 = sphi 0, %s126
    %s144 = sphi 0, %s144
    %s146 = sphi 0, %s144
    %s147 = sphi 0, %s146
    %s161 = sphi 0, %s147
    %s165 = sphi 0, %s165
    %s167 = sphi 0, %s165
    %s168 = sphi 0, %s167
    %s182 = sphi 0, %s168
    %s186 = sphi 0, %s186
    %s188 = sphi 0, %s186
    %s189 = sphi 0, %s188
    %s203 = sphi 0, %s189
    %s207 = sphi 0, %s207
    %s209 = sphi 0, %s207
    %s210 = sphi 0, %s209
    %s224 = sphi 0, %s210
    %s228 = sphi 0, %s228
    %s230 = sphi 0, %s228
    %s231 = sphi 0, %s230
    %s245 = sphi 0, %s231
    %s251 = sphi 0, %s253
    %s254 = sphi 0, %s251
    %s255 = sphi 0, %s254
    %s271 = sphi 0, %s255
  $region4: #{decoder_forward.10} parent=0 // loop_header_branch
    %19 = sbr.rel (%p17) target = $region8
  $region5: #{decoder_forward.10} parent=0 // loop_body
    %s21 = ssub.s32 %s16, 1
    %s22 = ssub.s32 %s16, 2
    %s23 = sadd.s32 %s16, 1
    %s24 = ssub.s32 %s16, %s23
    %p25 = scmp.eq.s32.totalorder %s24, 0
    %s27 = sadd.s32 %s26, 1
    %s28 = scalar_select %p25, %s26, %s27
    %p31 = pneg %p25
    %p32 = scmp.eq.s32.totalorder %s16, 1
    %p33 = por %p31, %p32
    %p34 = scmp.ne.s32.totalorder %s26, %s29
    %p35 = scmp.eq.s32.totalorder %s16, 0
    %p36 = por %p34, %p35
    %p37 = scmp.ne.s32.totalorder %s26, %s29
    %p38 = scmp.eq.s32.totalorder %s21, 1
    %p39 = por %p37, %p38
    %p40 = scmp.ne.s32.totalorder %s29, %s30
    %p41 = scmp.eq.s32.totalorder %s21, 0
    %p42 = por %p40, %p41
    %p43 = scmp.ne.s32.totalorder %s29, %s30
    %p44 = scmp.eq.s32.totalorder %s22, 1
    %p45 = por %p43, %p44
    %p47 = scmp.ne.s32.totalorder %s30, %s46
    %p48 = scmp.eq.s32.totalorder %s22, 0
    %p49 = por %p47, %p48
    %s50 = ssub.s32 %s16, %s23
    %p51 = scmp.eq.s32.totalorder %s50, 0
    %s53 = sadd.s32 %s52, 1
    %s54 = scalar_select %p51, %s52, %s53
    %p57 = pneg %p51
    %p58 = scmp.eq.s32.totalorder %s16, 1
    %p59 = por %p57, %p58
    %p60 = scmp.ne.s32.totalorder %s52, %s55
    %p61 = scmp.eq.s32.totalorder %s16, 0
    %p62 = por %p60, %p61
    %p63 = scmp.ne.s32.totalorder %s52, %s55
    %p64 = scmp.eq.s32.totalorder %s21, 1
    %p65 = por %p63, %p64
    %p66 = scmp.ne.s32.totalorder %s55, %s56
    %p67 = scmp.eq.s32.totalorder %s21, 0
    %p68 = por %p66, %p67
    %p69 = scmp.ne.s32.totalorder %s55, %s56
    %p70 = scmp.eq.s32.totalorder %s22, 1
    %p71 = por %p69, %p70
    %p73 = scmp.ne.s32.totalorder %s56, %s72
    %p74 = scmp.eq.s32.totalorder %s22, 0
    %p75 = por %p73, %p74
    %s76 = ssub.s32 %s16, %s23
    %p77 = scmp.eq.s32.totalorder %s76, 0
    %s79 = sadd.s32 %s78, 1
    %s80 = scalar_select %p77, %s78, %s79
    %p83 = pneg %p77
    %p84 = scmp.eq.s32.totalorder %s16, 1
    %p85 = por %p83, %p84
    %p86 = scmp.ne.s32.totalorder %s78, %s81
    %p87 = scmp.eq.s32.totalorder %s16, 0
    %p88 = por %p86, %p87
    %p89 = scmp.ne.s32.totalorder %s78, %s81
    %p90 = scmp.eq.s32.totalorder %s21, 1
    %p91 = por %p89, %p90
    %p92 = scmp.ne.s32.totalorder %s81, %s82
    %p93 = scmp.eq.s32.totalorder %s21, 0
    %p94 = por %p92, %p93
    %p95 = scmp.ne.s32.totalorder %s81, %s82
    %p96 = scmp.eq.s32.totalorder %s22, 1
    %p97 = por %p95, %p96
    %p99 = scmp.ne.s32.totalorder %s82, %s98
    %p100 = scmp.eq.s32.totalorder %s22, 0
    %p101 = por %p99, %p100
    %s103 = sadd.s32 %s102, 1
    %p106 = scmp.eq.s32.totalorder %s16, 1
    %p107 = scmp.ne.s32.totalorder %s102, %s104
    %p108 = scmp.eq.s32.totalorder %s16, 0
    %p109 = por %p107, %p108
    %p110 = scmp.ne.s32.totalorder %s102, %s104
    %p111 = scmp.eq.s32.totalorder %s21, 1
    %p112 = por %p110, %p111
    %p113 = scmp.ne.s32.totalorder %s104, %s105
    %p114 = scmp.eq.s32.totalorder %s21, 0
    %p115 = por %p113, %p114
    %p116 = scmp.ne.s32.totalorder %s104, %s105
    %p117 = scmp.eq.s32.totalorder %s22, 1
    %p118 = por %p116, %p117
    %p120 = scmp.ne.s32.totalorder %s105, %s119
    %p121 = scmp.eq.s32.totalorder %s22, 0
    %p122 = por %p120, %p121
    %s124 = sadd.s32 %s123, 1
    %p127 = scmp.eq.s32.totalorder %s16, 1
    %p128 = scmp.ne.s32.totalorder %s123, %s125
    %p129 = scmp.eq.s32.totalorder %s16, 0
    %p130 = por %p128, %p129
    %p131 = scmp.ne.s32.totalorder %s123, %s125
    %p132 = scmp.eq.s32.totalorder %s21, 1
    %p133 = por %p131, %p132
    %p134 = scmp.ne.s32.totalorder %s125, %s126
    %p135 = scmp.eq.s32.totalorder %s21, 0
    %p136 = por %p134, %p135
    %p137 = scmp.ne.s32.totalorder %s125, %s126
    %p138 = scmp.eq.s32.totalorder %s22, 1
    %p139 = por %p137, %p138
    %p141 = scmp.ne.s32.totalorder %s126, %s140
    %p142 = scmp.eq.s32.totalorder %s22, 0
    %p143 = por %p141, %p142
    %s145 = sadd.s32 %s144, 1
    %p148 = scmp.eq.s32.totalorder %s16, 1
    %p149 = scmp.ne.s32.totalorder %s144, %s146
    %p150 = scmp.eq.s32.totalorder %s16, 0
    %p151 = por %p149, %p150
    %p152 = scmp.ne.s32.totalorder %s144, %s146
    %p153 = scmp.eq.s32.totalorder %s21, 1
    %p154 = por %p152, %p153
    %p155 = scmp.ne.s32.totalorder %s146, %s147
    %p156 = scmp.eq.s32.totalorder %s21, 0
    %p157 = por %p155, %p156
    %p158 = scmp.ne.s32.totalorder %s146, %s147
    %p159 = scmp.eq.s32.totalorder %s22, 1
    %p160 = por %p158, %p159
    %p162 = scmp.ne.s32.totalorder %s147, %s161
    %p163 = scmp.eq.s32.totalorder %s22, 0
    %p164 = por %p162, %p163
    %s166 = sadd.s32 %s165, 1
    %p169 = scmp.eq.s32.totalorder %s16, 1
    %p170 = scmp.ne.s32.totalorder %s165, %s167
    %p171 = scmp.eq.s32.totalorder %s16, 0
    %p172 = por %p170, %p171
    %p173 = scmp.ne.s32.totalorder %s165, %s167
    %p174 = scmp.eq.s32.totalorder %s21, 1
    %p175 = por %p173, %p174
    %p176 = scmp.ne.s32.totalorder %s167, %s168
    %p177 = scmp.eq.s32.totalorder %s21, 0
    %p178 = por %p176, %p177
    %p179 = scmp.ne.s32.totalorder %s167, %s168
    %p180 = scmp.eq.s32.totalorder %s22, 1
    %p181 = por %p179, %p180
    %p183 = scmp.ne.s32.totalorder %s168, %s182
    %p184 = scmp.eq.s32.totalorder %s22, 0
    %p185 = por %p183, %p184
    %s187 = sadd.s32 %s186, 1
    %p190 = scmp.eq.s32.totalorder %s16, 1
    %p191 = scmp.ne.s32.totalorder %s186, %s188
    %p192 = scmp.eq.s32.totalorder %s16, 0
    %p193 = por %p191, %p192
    %p194 = scmp.ne.s32.totalorder %s186, %s188
    %p195 = scmp.eq.s32.totalorder %s21, 1
    %p196 = por %p194, %p195
    %p197 = scmp.ne.s32.totalorder %s188, %s189
    %p198 = scmp.eq.s32.totalorder %s21, 0
    %p199 = por %p197, %p198
    %p200 = scmp.ne.s32.totalorder %s188, %s189
    %p201 = scmp.eq.s32.totalorder %s22, 1
    %p202 = por %p200, %p201
    %p204 = scmp.ne.s32.totalorder %s189, %s203
    %p205 = scmp.eq.s32.totalorder %s22, 0
    %p206 = por %p204, %p205
    %s208 = sadd.s32 %s207, 1
    %p211 = scmp.eq.s32.totalorder %s16, 1
    %p212 = scmp.ne.s32.totalorder %s207, %s209
    %p213 = scmp.eq.s32.totalorder %s16, 0
    %p214 = por %p212, %p213
    %p215 = scmp.ne.s32.totalorder %s207, %s209
    %p216 = scmp.eq.s32.totalorder %s21, 1
    %p217 = por %p215, %p216
    %p218 = scmp.ne.s32.totalorder %s209, %s210
    %p219 = scmp.eq.s32.totalorder %s21, 0
    %p220 = por %p218, %p219
    %p221 = scmp.ne.s32.totalorder %s209, %s210
    %p222 = scmp.eq.s32.totalorder %s22, 1
    %p223 = por %p221, %p222
    %p225 = scmp.ne.s32.totalorder %s210, %s224
    %p226 = scmp.eq.s32.totalorder %s22, 0
    %p227 = por %p225, %p226
    %s229 = sadd.s32 %s228, 1
    %p232 = scmp.eq.s32.totalorder %s16, 1
    %p233 = scmp.ne.s32.totalorder %s228, %s230
    %p234 = scmp.eq.s32.totalorder %s16, 0
    %p235 = por %p233, %p234
    %p236 = scmp.ne.s32.totalorder %s228, %s230
    %p237 = scmp.eq.s32.totalorder %s21, 1
    %p238 = por %p236, %p237
    %p239 = scmp.ne.s32.totalorder %s230, %s231
    %p240 = scmp.eq.s32.totalorder %s21, 0
    %p241 = por %p239, %p240
    %p242 = scmp.ne.s32.totalorder %s230, %s231
    %p243 = scmp.eq.s32.totalorder %s22, 1
    %p244 = por %p242, %p243
    %p246 = scmp.ne.s32.totalorder %s231, %s245
    %p247 = scmp.eq.s32.totalorder %s22, 0
    %p248 = por %p246, %p247
    %s249 = ssub.s32 %s16, %s23
    %p250 = scmp.eq.s32.totalorder %s249, 0
    %s252 = sadd.s32 %s251, 1
    %s253 = scalar_select %p250, %s251, %s252
    %p256 = pneg %p250
    %p257 = scmp.eq.s32.totalorder %s16, 1
    %p258 = por %p256, %p257
    %p259 = scmp.ne.s32.totalorder %s251, %s254
    %p260 = scmp.eq.s32.totalorder %s16, 0
    %p261 = por %p259, %p260
    %p262 = scmp.ne.s32.totalorder %s251, %s254
    %p263 = scmp.eq.s32.totalorder %s21, 1
    %p264 = por %p262, %p263
    %p265 = scmp.ne.s32.totalorder %s254, %s255
    %p266 = scmp.eq.s32.totalorder %s21, 0
    %p267 = por %p265, %p266
    %p268 = scmp.ne.s32.totalorder %s254, %s255
    %p269 = scmp.eq.s32.totalorder %s22, 1
    %p270 = por %p268, %p269
    %p272 = scmp.ne.s32.totalorder %s255, %s271
    %p273 = scmp.eq.s32.totalorder %s22, 0
    %p274 = por %p272, %p273
    %p275 = scmp.le.s32.totalorder 1, %s16
    %p276 = scmp.lt.s32.totalorder %s16, 3
    %p277 = pnand %p275, %p276
    %p278 = pneg %p277
    // Predicated region
    $region9: #{decoder_forward.10} parent=5 // pred_check
      _
    $region10: #{decoder_forward.10} parent=5 // pred_check_branch
      %280 = sbr.rel (%p277) target = $region12
    $region11: #{decoder_forward.10} parent=5 // pred_region
      %s281 = ssub.s32 %s16, 1
      // Predicated region
      $region13: #{decoder_forward.10} parent=11 // pred_check
        %p282 = pneg %p115
      $region14: #{decoder_forward.10} parent=11 // pred_check_branch
        %284 = sbr.rel (%p282) target = $region16
      $region15: #{decoder_forward.10} parent=11 // pred_region
        _
      $region16: #{decoder_forward.10} parent=11 // pred_fallthru
        _
      // Predicated region
      $region17: #{decoder_forward.10} parent=11 // pred_check
        %p285 = pneg %p136
      $region18: #{decoder_forward.10} parent=11 // pred_check_branch
        %287 = sbr.rel (%p285) target = $region20
      $region19: #{decoder_forward.10} parent=11 // pred_region
        _
      $region20: #{decoder_forward.10} parent=11 // pred_fallthru
        _
      // Predicated region
      $region21: #{decoder_forward.10} parent=11 // pred_check
        %p288 = pneg %p157
      $region22: #{decoder_forward.10} parent=11 // pred_check_branch
        %290 = sbr.rel (%p288) target = $region24
      $region23: #{decoder_forward.10} parent=11 // pred_region
        _
      $region24: #{decoder_forward.10} parent=11 // pred_fallthru
        _
      // Predicated region
      $region25: #{decoder_forward.10} parent=11 // pred_check
        %p291 = pneg %p178
      $region26: #{decoder_forward.10} parent=11 // pred_check_branch
        %293 = sbr.rel (%p291) target = $region28
      $region27: #{decoder_forward.10} parent=11 // pred_region
        _
      $region28: #{decoder_forward.10} parent=11 // pred_fallthru
        _
      // Predicated region
      $region29: #{decoder_forward.10} parent=11 // pred_check
        %p294 = pneg %p199
      $region30: #{decoder_forward.10} parent=11 // pred_check_branch
        %296 = sbr.rel (%p294) target = $region32
      $region31: #{decoder_forward.10} parent=11 // pred_region
        _
      $region32: #{decoder_forward.10} parent=11 // pred_fallthru
        _
      // Predicated region
      $region33: #{decoder_forward.10} parent=11 // pred_check
        %p297 = pneg %p220
      $region34: #{decoder_forward.10} parent=11 // pred_check_branch
        %299 = sbr.rel (%p297) target = $region36
      $region35: #{decoder_forward.10} parent=11 // pred_region
        _
      $region36: #{decoder_forward.10} parent=11 // pred_fallthru
        _
      // Predicated region
      $region37: #{decoder_forward.10} parent=11 // pred_check
        %p300 = pneg %p241
      $region38: #{decoder_forward.10} parent=11 // pred_check_branch
        %302 = sbr.rel (%p300) target = $region40
      $region39: #{decoder_forward.10} parent=11 // pred_region
        _
      $region40: #{decoder_forward.10} parent=11 // pred_fallthru
        _
    $region12: #{decoder_forward.10} parent=5 // pred_fallthru
      _
    %p303 = scmp.lt.s32.totalorder %s16, 2
    // Predicated region
    $region41: #{decoder_forward.10} parent=5 // pred_check
      %p304 = pneg %p303
    $region42: #{decoder_forward.10} parent=5 // pred_check_branch
      %306 = sbr.rel (%p304) target = $region44
    $region43: #{decoder_forward.10} parent=5 // pred_region
      // Predicated region
      $region45: #{decoder_forward.10} parent=43 // pred_check
        %p307 = pneg %p36
      $region46: #{decoder_forward.10} parent=43 // pred_check_branch
        %309 = sbr.rel (%p307) target = $region48
      $region47: #{decoder_forward.10} parent=43 // pred_region
        %p310 = scmp.lt.s32.totalorder %s16, 1
        %s311 = scalar_select %p310, %s16, 1
        %s312 = smul.addr %s311, 8
        %s313 = scalar_lea.vmem %s0, %s312
      $region48: #{decoder_forward.10} parent=43 // pred_fallthru
        _
      // Predicated region
      $region49: #{decoder_forward.10} parent=43 // pred_check
        %p314 = pneg %p62
      $region50: #{decoder_forward.10} parent=43 // pred_check_branch
        %316 = sbr.rel (%p314) target = $region52
      $region51: #{decoder_forward.10} parent=43 // pred_region
        %p317 = scmp.lt.s32.totalorder %s16, 1
        %s318 = scalar_select %p317, %s16, 1
        %s319 = smul.addr %s318, 8
        %s320 = scalar_lea.vmem %s1, %s319
      $region52: #{decoder_forward.10} parent=43 // pred_fallthru
        _
      // Predicated region
      $region53: #{decoder_forward.10} parent=43 // pred_check
        %p321 = pneg %p88
      $region54: #{decoder_forward.10} parent=43 // pred_check_branch
        %323 = sbr.rel (%p321) target = $region56
      $region55: #{decoder_forward.10} parent=43 // pred_region
        %p324 = scmp.lt.s32.totalorder %s16, 1
        %s325 = scalar_select %p324, %s16, 1
        %s326 = scalar_lea.vmem %s2, %s325
      $region56: #{decoder_forward.10} parent=43 // pred_fallthru
        _
    $region44: #{decoder_forward.10} parent=5 // pred_fallthru
      _
    %p327 = scmp.le.s32.totalorder 1, %s16
    %p328 = scmp.lt.s32.totalorder %s16, 3
    %p329 = pnand %p327, %p328
    %p330 = pneg %p329
    // Predicated region
    $region57: #{decoder_forward.10} parent=5 // pred_check
      _
    $region58: #{decoder_forward.10} parent=5 // pred_check_branch
      %332 = sbr.rel (%p329) target = $region60
    $region59: #{decoder_forward.10} parent=5 // pred_region
      %s333 = ssub.s32 %s16, 1
      %p334 = scmp.lt.s32.totalorder %s21, 1
      %s335 = scalar_select %p334, %s21, 1
      %s336 = smul.addr %s335, 8
      %s337 = scalar_lea.vmem %s0, %s336
      %p338 = pneg %p42
      %p339 = pneg %p39
      %p340 = scmp.lt.s32.totalorder %s21, 1
      %s341 = scalar_select %p340, %s21, 1
      %s342 = smul.addr %s341, 8
      %s343 = scalar_lea.vmem %s1, %s342
      %p344 = pneg %p68
      %p345 = pneg %p65
      %p346 = scmp.lt.s32.totalorder %s21, 1
      %s347 = scalar_select %p346, %s21, 1
      %s348 = scalar_lea.vmem %s2, %s347
      %p349 = pneg %p94
      %p350 = pneg %p91
      %p351 = pneg %p115
      %p352 = pneg %p112
      %p353 = pneg %p136
      %p354 = pneg %p133
      %p355 = pneg %p157
      %p356 = pneg %p154
      %p357 = pneg %p178
      %p358 = pneg %p175
      %p359 = pneg %p199
      %p360 = pneg %p196
      %p361 = pneg %p220
      %p362 = pneg %p217
      %p363 = pneg %p241
      %p364 = pneg %p238
      %p365 = pneg %p267
      %p366 = pneg %p264
      %p367 = scmp.lt.s32.totalorder %s21, 1
      %s368 = scalar_select %p367, %s21, 1
      %s369 = smul.addr %s368, 8
      %s370 = scalar_lea.vmem %s10, %s369
      %p371 = scmp.lt.s32.totalorder %s21, 1
      %s372 = scalar_select %p371, %s21, 1
      %s373 = smul.addr %s372, 8
      %s374 = scalar_lea.vmem %s0, %s373
      %p375 = scmp.lt.s32.totalorder %s21, 1
      %s376 = scalar_select %p375, %s21, 1
      %s377 = smul.addr %s376, 8
      %s378 = scalar_lea.vmem %s1, %s377
      %p379 = scmp.lt.s32.totalorder %s21, 1
      %s380 = scalar_select %p379, %s21, 1
      %s381 = scalar_lea.vmem %s2, %s380
      %p382 = scmp.lt.s32.totalorder %s21, 1
      %s383 = scalar_select %p382, %s21, 1
      %s384 = smul.addr %s383, 8
      %s385 = scalar_lea.vmem %s10, %s384
      %v387 = vld [vmem:[%s374] sm:$0xff]
      %v388 = vld [vmem:[%s378] sm:$0xff]
      %v389 = vld [vmem:[%s381] sm:$0x1]
      %v390 = vpack.c.bf16 %v387, %v387
      %v391 = vpack.c.bf16 %v388, %v388
      %v392 = vld [vmem:[%s3] sm:$0xf]
      %v393 = vld [vmem:[%s3 + $0x4] sm:$0xf]
      %v394 = vld [vmem:[%s3 + $0x8] sm:$0xf]
      %v395 = vld [vmem:[%s3 + $0xc] sm:$0xf]
      %v400 = vunpack.c.l.b16 %v392
      %v401 = vunpack.c.l.b16 %v393
      %v402 = vunpack.c.l.b16 %v394
      %v403 = vunpack.c.l.b16 %v395
      %v404 = vpack.c.b16 %v401, %v400
      %v405 = vpack.c.b16 %v403, %v402
      %vm408 = vcmask 261120
      %v410 = vsel %vm408, %v390, 0
      %412 = vmatprep.subr.bf16.mxu0 0
      %413 = vmatpush1.bf16.msra.mxu0 0
      %414 = vmatprep.subr.bf16.mxu0 0
      %415 = vmatpush1.bf16.msra.mxu0 0
      %416 = vmatprep.subr.bf16.mxu0 0
      %417 = vmatpush1.bf16.msra.mxu0 0
      %418 = vmatprep.subr.bf16.mxu0 0
      %419 = vmatpush1.bf16.msra.mxu0 0
      %420 = vmatprep.subr.bf16.mxu0 0
      %421 = vmatpush1.bf16.msra.mxu0 0
      %422 = vmatprep.subr.bf16.mxu0 0
      %423 = vmatpush1.bf16.msra.mxu0 0
      %424 = vmatprep.subr.bf16.mxu0 0
      %425 = vmatpush1.bf16.msra.mxu0 %v405
      %426 = vmatprep.subr.bf16.mxu0 0
      %427 = vmatpush1.bf16.msra.mxu0 %v404
      %428 = vmatprep.subr.bf16.mxu0 0
      %429 = vmatpush2.bf16.msra.mxu0 0
      %430 = vmatprep.subr.bf16.mxu0 0
      %431 = vmatpush2.bf16.msra.mxu0 0
      %432 = vmatprep.subr.bf16.mxu0 0
      %433 = vmatpush2.bf16.msra.mxu0 0
      %434 = vmatprep.subr.bf16.mxu0 0
      %435 = vmatpush2.bf16.msra.mxu0 0
      %436 = vmatprep.subr.bf16.mxu0 0
      %437 = vmatpush2.bf16.msra.mxu0 0
      %438 = vmatprep.subr.bf16.mxu0 0
      %439 = vmatpush2.bf16.msra.mxu0 0
      %440 = vmatprep.subr.bf16.mxu0 0
      %441 = vmatpush2.bf16.msra.mxu0 0
      %442 = vmatprep.subr.bf16.mxu0 0
      %443 = vmatpush2.bf16.msra.mxu0 0
      %444 = vmatprep.mubr.bf16.mxu0 0
      %445 = vmatmul.mubr.bf16.gmra.mxu0 %v410
      %v446 = vpop.f32.mrf.mxu0
      %v447 = vadd.f32 0.0, %v446
      %v448 = vpop.f32.mrf.mxu0
      %v449 = vpop.f32.mrf.mxu0
      %v450 = vpop.f32.mrf.mxu0
      %451 = vdwg.mxu0
      %v452 = vld [vmem:[%s4] sm:$0xf]
      %v453 = vld [vmem:[%s4 + $0x4] sm:$0xf]
      %v454 = vld [vmem:[%s4 + $0x8] sm:$0xf]
      %v455 = vld [vmem:[%s4 + $0xc] sm:$0xf]
      %v460 = vunpack.c.l.b16 %v452
      %v461 = vunpack.c.l.b16 %v453
      %v462 = vunpack.c.l.b16 %v454
      %v463 = vunpack.c.l.b16 %v455
      %v464 = vpack.c.b16 %v461, %v460
      %v465 = vpack.c.b16 %v463, %v462
      %v469 = vsel %vm408, %v391, 0
      %471 = vmatprep.subr.bf16.mxu0 0
      %472 = vmatpush1.bf16.msra.mxu0 0
      %473 = vmatprep.subr.bf16.mxu0 0
      %474 = vmatpush1.bf16.msra.mxu0 0
      %475 = vmatprep.subr.bf16.mxu0 0
      %476 = vmatpush1.bf16.msra.mxu0 0
      %477 = vmatprep.subr.bf16.mxu0 0
      %478 = vmatpush1.bf16.msra.mxu0 0
      %479 = vmatprep.subr.bf16.mxu0 0
      %480 = vmatpush1.bf16.msra.mxu0 0
      %481 = vmatprep.subr.bf16.mxu0 0
      %482 = vmatpush1.bf16.msra.mxu0 0
      %483 = vmatprep.subr.bf16.mxu0 0
      %484 = vmatpush1.bf16.msra.mxu0 %v465
      %485 = vmatprep.subr.bf16.mxu0 0
      %486 = vmatpush1.bf16.msra.mxu0 %v464
      %487 = vmatprep.subr.bf16.mxu0 0
      %488 = vmatpush2.bf16.msra.mxu0 0
      %489 = vmatprep.subr.bf16.mxu0 0
      %490 = vmatpush2.bf16.msra.mxu0 0
      %491 = vmatprep.subr.bf16.mxu0 0
      %492 = vmatpush2.bf16.msra.mxu0 0
      %493 = vmatprep.subr.bf16.mxu0 0
      %494 = vmatpush2.bf16.msra.mxu0 0
      %495 = vmatprep.subr.bf16.mxu0 0
      %496 = vmatpush2.bf16.msra.mxu0 0
      %497 = vmatprep.subr.bf16.mxu0 0
      %498 = vmatpush2.bf16.msra.mxu0 0
      %499 = vmatprep.subr.bf16.mxu0 0
      %500 = vmatpush2.bf16.msra.mxu0 0
      %501 = vmatprep.subr.bf16.mxu0 0
      %502 = vmatpush2.bf16.msra.mxu0 0
      %503 = vmatprep.mubr.bf16.mxu0 0
      %504 = vmatmul.mubr.bf16.gmra.mxu0 %v469
      %v505 = vpop.f32.mrf.mxu0
      %v506 = vadd.f32 0.0, %v505
      %v507 = vpop.f32.mrf.mxu0
      %v508 = vpop.f32.mrf.mxu0
      %v509 = vpop.f32.mrf.mxu0
      %510 = vdwg.mxu0
      %v511 = vld [vmem:[%s5] sm:$0xf]
      %v512 = vld [vmem:[%s5 + $0x4] sm:$0xf]
      %v513 = vld [vmem:[%s5 + $0x8] sm:$0xf]
      %v514 = vld [vmem:[%s5 + $0xc] sm:$0xf]
      %v519 = vunpack.c.l.b16 %v511
      %v520 = vunpack.c.l.b16 %v512
      %v521 = vunpack.c.l.b16 %v513
      %v522 = vunpack.c.l.b16 %v514
      %v523 = vpack.c.b16 %v520, %v519
      %v524 = vpack.c.b16 %v522, %v521
      %527 = vmatprep.subr.bf16.mxu0 0
      %528 = vmatpush1.bf16.msra.mxu0 0
      %529 = vmatprep.subr.bf16.mxu0 0
      %530 = vmatpush1.bf16.msra.mxu0 0
      %531 = vmatprep.subr.bf16.mxu0 0
      %532 = vmatpush1.bf16.msra.mxu0 0
      %533 = vmatprep.subr.bf16.mxu0 0
      %534 = vmatpush1.bf16.msra.mxu0 0
      %535 = vmatprep.subr.bf16.mxu0 0
      %536 = vmatpush1.bf16.msra.mxu0 0
      %537 = vmatprep.subr.bf16.mxu0 0
      %538 = vmatpush1.bf16.msra.mxu0 0
      %539 = vmatprep.subr.bf16.mxu0 0
      %540 = vmatpush1.bf16.msra.mxu0 %v524
      %541 = vmatprep.subr.bf16.mxu0 0
      %542 = vmatpush1.bf16.msra.mxu0 %v523
      %543 = vmatprep.subr.bf16.mxu0 0
      %544 = vmatpush2.bf16.msra.mxu0 0
      %545 = vmatprep.subr.bf16.mxu0 0
      %546 = vmatpush2.bf16.msra.mxu0 0
      %547 = vmatprep.subr.bf16.mxu0 0
      %548 = vmatpush2.bf16.msra.mxu0 0
      %549 = vmatprep.subr.bf16.mxu0 0
      %550 = vmatpush2.bf16.msra.mxu0 0
      %551 = vmatprep.subr.bf16.mxu0 0
      %552 = vmatpush2.bf16.msra.mxu0 0
      %553 = vmatprep.subr.bf16.mxu0 0
      %554 = vmatpush2.bf16.msra.mxu0 0
      %555 = vmatprep.subr.bf16.mxu0 0
      %556 = vmatpush2.bf16.msra.mxu0 0
      %557 = vmatprep.subr.bf16.mxu0 0
      %558 = vmatpush2.bf16.msra.mxu0 0
      %559 = vmatprep.mubr.bf16.mxu0 0
      %560 = vmatmul.mubr.bf16.gmra.mxu0 %v469
      %v561 = vpop.f32.mrf.mxu0
      %v562 = vadd.f32 0.0, %v561
      %v563 = vpop.f32.mrf.mxu0
      %v564 = vpop.f32.mrf.mxu0
      %v565 = vpop.f32.mrf.mxu0
      %566 = vdwg.mxu0
      %vm567 = vcmask 64512
      %v569 = vsel %vm567, %v447, 0
      %v572 = vsel %vm567, %v506, 0
      %574 = vmatprep.subr.mxu0 0.0
      %575 = vmatpush1.xpose.msra.mxu0 0.0
      %576 = vmatprep.subr.mxu0 0.0
      %577 = vmatpush1.xpose.msra.mxu0 0.0
      %578 = vmatprep.subr.mxu0 0.0
      %579 = vmatpush1.xpose.msra.mxu0 0.0
      %580 = vmatprep.subr.mxu0 0.0
      %581 = vmatpush1.xpose.msra.mxu0 0.0
      %582 = vmatprep.subr.mxu0 0.0
      %583 = vmatpush1.xpose.msra.mxu0 0.0
      %584 = vmatprep.subr.mxu0 0.0
      %585 = vmatpush1.xpose.msra.mxu0 0.0
      %586 = vmatprep.subr.mxu0 0.0
      %587 = vmatpush1.xpose.msra.mxu0 0.0
      %588 = vmatprep.subr.mxu0 0.0
      %589 = vmatpush1.xpose.msra.mxu0 0.0
      %590 = vmatprep.subr.mxu0 0.0
      %591 = vmatpush1.xpose.msra.mxu0 0.0
      %592 = vmatprep.subr.mxu0 0.0
      %593 = vmatpush1.xpose.msra.mxu0 0.0
      %594 = vmatprep.subr.mxu0 0.0
      %595 = vmatpush1.xpose.msra.mxu0 0.0
      %596 = vmatprep.subr.mxu0 0.0
      %597 = vmatpush1.xpose.msra.mxu0 0.0
      %598 = vmatprep.subr.mxu0 0.0
      %599 = vmatpush1.xpose.msra.mxu0 0.0
      %600 = vmatprep.subr.mxu0 0.0
      %601 = vmatpush1.xpose.msra.mxu0 0.0
      %602 = vmatprep.subr.mxu0 0.0
      %603 = vmatpush1.xpose.msra.mxu0 0.0
      %604 = vmatprep.subr.mxu0 0.0
      %605 = vmatpush1.xpose.msra.mxu0 %v572
      %606 = vmatprep.subr.mxu0 0.0
      %607 = vmatpush2.xpose.msra.mxu0 0.0
      %608 = vmatprep.subr.mxu0 0.0
      %609 = vmatpush2.xpose.msra.mxu0 0.0
      %610 = vmatprep.subr.mxu0 0.0
      %611 = vmatpush2.xpose.msra.mxu0 0.0
      %612 = vmatprep.subr.mxu0 0.0
      %613 = vmatpush2.xpose.msra.mxu0 0.0
      %614 = vmatprep.subr.mxu0 0.0
      %615 = vmatpush2.xpose.msra.mxu0 0.0
      %616 = vmatprep.subr.mxu0 0.0
      %617 = vmatpush2.xpose.msra.mxu0 0.0
      %618 = vmatprep.subr.mxu0 0.0
      %619 = vmatpush2.xpose.msra.mxu0 0.0
      %620 = vmatprep.subr.mxu0 0.0
      %621 = vmatpush2.xpose.msra.mxu0 0.0
      %622 = vmatprep.subr.mxu0 0.0
      %623 = vmatpush2.xpose.msra.mxu0 0.0
      %624 = vmatprep.subr.mxu0 0.0
      %625 = vmatpush2.xpose.msra.mxu0 0.0
      %626 = vmatprep.subr.mxu0 0.0
      %627 = vmatpush2.xpose.msra.mxu0 0.0
      %628 = vmatprep.subr.mxu0 0.0
      %629 = vmatpush2.xpose.msra.mxu0 0.0
      %630 = vmatprep.subr.mxu0 0.0
      %631 = vmatpush2.xpose.msra.mxu0 0.0
      %632 = vmatprep.subr.mxu0 0.0
      %633 = vmatpush2.xpose.msra.mxu0 0.0
      %634 = vmatprep.subr.mxu0 0.0
      %635 = vmatpush2.xpose.msra.mxu0 0.0
      %636 = vmatprep.subr.mxu0 0.0
      %637 = vmatpush2.xpose.msra.mxu0 0.0
      %638 = vmatprep.mubr.f32.mxu0 0.0
      %639 = vmatmul.mubr.f32.gmra.mxu0 %v569
      %v640 = vpop.f32.mrf.mxu0
      %v641 = vadd.f32 0.0, %v640
      %v642 = vpop.f32.mrf.mxu0
      %643 = vdwg.mxu0
      %vm644 = vcmp.eq.f32.partialorder %v389, 0.0
      %v645 = vsel %vm644, 1, 0
      %v646 = vlaneseq
      %v647 = vshrl.u32 %v646, 7
      %v648 = vsub.s32 0, %v647
      %v649 = vrot.slane %v645, %v648
      %vm650 = vcmp.eq.s32.totalorder %v649, 1
      %v651 = vsel %vm650, -1e+20, %v641
      %v652 = vmul.f32 %v651, 0.17677669
      %v653 = vsel %vm567, %v652, -inf
      %654 = vmax.xlane.f32.xlu0 %v653
      %v655 = vpop.xlane.xlu0 %654
      %v656 = vsub.f32 %v652, %v655
      %v657 = vmul.f32 %v656, 1.442695
      %v658 = vpow.pop %v657
      %v659 = vsel %vm567, %v658, 0.0
      %660 = vadd.xlane.f32.xlu0 %v659
      %v661 = vpop.xlane.xlu0 %660
      %v662 = vrcp.pop %v661
      %v663 = vmul.f32 %v658, %v662
      %v665 = vsel %vm567, %v663, 0
      %667 = vmatprep.subr.mxu0 0.0
      %668 = vmatpush1.msra.mxu0 0.0
      %669 = vmatprep.subr.mxu0 0.0
      %670 = vmatpush1.msra.mxu0 0.0
      %671 = vmatprep.subr.mxu0 0.0
      %672 = vmatpush1.msra.mxu0 0.0
      %673 = vmatprep.subr.mxu0 0.0
      %674 = vmatpush1.msra.mxu0 0.0
      %675 = vmatprep.subr.mxu0 0.0
      %676 = vmatpush1.msra.mxu0 0.0
      %677 = vmatprep.subr.mxu0 0.0
      %678 = vmatpush1.msra.mxu0 0.0
      %679 = vmatprep.subr.mxu0 0.0
      %680 = vmatpush1.msra.mxu0 0.0
      %681 = vmatprep.subr.mxu0 0.0
      %682 = vmatpush1.msra.mxu0 0.0
      %683 = vmatprep.subr.mxu0 0.0
      %684 = vmatpush1.msra.mxu0 0.0
      %685 = vmatprep.subr.mxu0 0.0
      %686 = vmatpush1.msra.mxu0 0.0
      %687 = vmatprep.subr.mxu0 0.0
      %688 = vmatpush1.msra.mxu0 0.0
      %689 = vmatprep.subr.mxu0 0.0
      %690 = vmatpush1.msra.mxu0 0.0
      %691 = vmatprep.subr.mxu0 0.0
      %692 = vmatpush1.msra.mxu0 0.0
      %693 = vmatprep.subr.mxu0 0.0
      %694 = vmatpush1.msra.mxu0 0.0
      %695 = vmatprep.subr.mxu0 0.0
      %696 = vmatpush1.msra.mxu0 0.0
      %697 = vmatprep.subr.mxu0 0.0
      %698 = vmatpush1.msra.mxu0 %v562
      %699 = vmatprep.subr.mxu0 0.0
      %700 = vmatpush2.msra.mxu0 0.0
      %701 = vmatprep.subr.mxu0 0.0
      %702 = vmatpush2.msra.mxu0 0.0
      %703 = vmatprep.subr.mxu0 0.0
      %704 = vmatpush2.msra.mxu0 0.0
      %705 = vmatprep.subr.mxu0 0.0
      %706 = vmatpush2.msra.mxu0 0.0
      %707 = vmatprep.subr.mxu0 0.0
      %708 = vmatpush2.msra.mxu0 0.0
      %709 = vmatprep.subr.mxu0 0.0
      %710 = vmatpush2.msra.mxu0 0.0
      %711 = vmatprep.subr.mxu0 0.0
      %712 = vmatpush2.msra.mxu0 0.0
      %713 = vmatprep.subr.mxu0 0.0
      %714 = vmatpush2.msra.mxu0 0.0
      %715 = vmatprep.subr.mxu0 0.0
      %716 = vmatpush2.msra.mxu0 0.0
      %717 = vmatprep.subr.mxu0 0.0
      %718 = vmatpush2.msra.mxu0 0.0
      %719 = vmatprep.subr.mxu0 0.0
      %720 = vmatpush2.msra.mxu0 0.0
      %721 = vmatprep.subr.mxu0 0.0
      %722 = vmatpush2.msra.mxu0 0.0
      %723 = vmatprep.subr.mxu0 0.0
      %724 = vmatpush2.msra.mxu0 0.0
      %725 = vmatprep.subr.mxu0 0.0
      %726 = vmatpush2.msra.mxu0 0.0
      %727 = vmatprep.subr.mxu0 0.0
      %728 = vmatpush2.msra.mxu0 0.0
      %729 = vmatprep.subr.mxu0 0.0
      %730 = vmatpush2.msra.mxu0 0.0
      %731 = vmatprep.mubr.f32.mxu0 0.0
      %732 = vmatmul.mubr.f32.gmra.mxu0 %v665
      %v733 = vpop.f32.mrf.mxu0
      %v734 = vadd.f32 0.0, %v733
      %v735 = vpop.f32.mrf.mxu0
      %736 = vdwg.mxu0
      %737 = vrot.lane.b32.xlu0 %v447, 120
      %v738 = vpop.permute.xlu0 %737
      %739 = vrot.lane.b32.xlu0 %v506, 120
      %v740 = vpop.permute.xlu0 %739
      %v741 = vsel %vm567, %v738, 0
      %v743 = vsel %vm567, %v740, 0
      %745 = vmatprep.subr.mxu0 0.0
      %746 = vmatpush1.xpose.msra.mxu0 0.0
      %747 = vmatprep.subr.mxu0 0.0
      %748 = vmatpush1.xpose.msra.mxu0 0.0
      %749 = vmatprep.subr.mxu0 0.0
      %750 = vmatpush1.xpose.msra.mxu0 0.0
      %751 = vmatprep.subr.mxu0 0.0
      %752 = vmatpush1.xpose.msra.mxu0 0.0
      %753 = vmatprep.subr.mxu0 0.0
      %754 = vmatpush1.xpose.msra.mxu0 0.0
      %755 = vmatprep.subr.mxu0 0.0
      %756 = vmatpush1.xpose.msra.mxu0 0.0
      %757 = vmatprep.subr.mxu0 0.0
      %758 = vmatpush1.xpose.msra.mxu0 0.0
      %759 = vmatprep.subr.mxu0 0.0
      %760 = vmatpush1.xpose.msra.mxu0 0.0
      %761 = vmatprep.subr.mxu0 0.0
      %762 = vmatpush1.xpose.msra.mxu0 0.0
      %763 = vmatprep.subr.mxu0 0.0
      %764 = vmatpush1.xpose.msra.mxu0 0.0
      %765 = vmatprep.subr.mxu0 0.0
      %766 = vmatpush1.xpose.msra.mxu0 0.0
      %767 = vmatprep.subr.mxu0 0.0
      %768 = vmatpush1.xpose.msra.mxu0 0.0
      %769 = vmatprep.subr.mxu0 0.0
      %770 = vmatpush1.xpose.msra.mxu0 0.0
      %771 = vmatprep.subr.mxu0 0.0
      %772 = vmatpush1.xpose.msra.mxu0 0.0
      %773 = vmatprep.subr.mxu0 0.0
      %774 = vmatpush1.xpose.msra.mxu0 0.0
      %775 = vmatprep.subr.mxu0 0.0
      %776 = vmatpush1.xpose.msra.mxu0 %v743
      %777 = vmatprep.subr.mxu0 0.0
      %778 = vmatpush2.xpose.msra.mxu0 0.0
      %779 = vmatprep.subr.mxu0 0.0
      %780 = vmatpush2.xpose.msra.mxu0 0.0
      %781 = vmatprep.subr.mxu0 0.0
      %782 = vmatpush2.xpose.msra.mxu0 0.0
      %783 = vmatprep.subr.mxu0 0.0
      %784 = vmatpush2.xpose.msra.mxu0 0.0
      %785 = vmatprep.subr.mxu0 0.0
      %786 = vmatpush2.xpose.msra.mxu0 0.0
      %787 = vmatprep.subr.mxu0 0.0
      %788 = vmatpush2.xpose.msra.mxu0 0.0
      %789 = vmatprep.subr.mxu0 0.0
      %790 = vmatpush2.xpose.msra.mxu0 0.0
      %791 = vmatprep.subr.mxu0 0.0
      %792 = vmatpush2.xpose.msra.mxu0 0.0
      %793 = vmatprep.subr.mxu0 0.0
      %794 = vmatpush2.xpose.msra.mxu0 0.0
      %795 = vmatprep.subr.mxu0 0.0
      %796 = vmatpush2.xpose.msra.mxu0 0.0
      %797 = vmatprep.subr.mxu0 0.0
      %798 = vmatpush2.xpose.msra.mxu0 0.0
      %799 = vmatprep.subr.mxu0 0.0
      %800 = vmatpush2.xpose.msra.mxu0 0.0
      %801 = vmatprep.subr.mxu0 0.0
      %802 = vmatpush2.xpose.msra.mxu0 0.0
      %803 = vmatprep.subr.mxu0 0.0
      %804 = vmatpush2.xpose.msra.mxu0 0.0
      %805 = vmatprep.subr.mxu0 0.0
      %806 = vmatpush2.xpose.msra.mxu0 0.0
      %807 = vmatprep.subr.mxu0 0.0
      %808 = vmatpush2.xpose.msra.mxu0 0.0
      %809 = vmatprep.mubr.f32.mxu0 0.0
      %810 = vmatmul.mubr.f32.gmra.mxu0 %v741
      %v811 = vpop.f32.mrf.mxu0
      %v812 = vadd.f32 0.0, %v811
      %v813 = vpop.f32.mrf.mxu0
      %814 = vdwg.mxu0
      %v815 = vsel %vm650, -1e+20, %v812
      %v816 = vmul.f32 %v815, 0.17677669
      %v817 = vsel %vm567, %v816, -inf
      %818 = vmax.xlane.f32.xlu0 %v817
      %v819 = vpop.xlane.xlu0 %818
      %v820 = vsub.f32 %v816, %v819
      %v821 = vmul.f32 %v820, 1.442695
      %v822 = vpow.pop %v821
      %v823 = vsel %vm567, %v822, 0.0
      %824 = vadd.xlane.f32.xlu0 %v823
      %v825 = vpop.xlane.xlu0 %824
      %v826 = vrcp.pop %v825
      %v827 = vmul.f32 %v822, %v826
      %829 = vrot.lane.b32.xlu0 %v562, 120
      %v830 = vpop.permute.xlu0 %829
      %v833 = vsel %vm567, %v827, 0
      %835 = vmatprep.subr.mxu0 0.0
      %836 = vmatpush1.msra.mxu0 0.0
      %837 = vmatprep.subr.mxu0 0.0
      %838 = vmatpush1.msra.mxu0 0.0
      %839 = vmatprep.subr.mxu0 0.0
      %840 = vmatpush1.msra.mxu0 0.0
      %841 = vmatprep.subr.mxu0 0.0
      %842 = vmatpush1.msra.mxu0 0.0
      %843 = vmatprep.subr.mxu0 0.0
      %844 = vmatpush1.msra.mxu0 0.0
      %845 = vmatprep.subr.mxu0 0.0
      %846 = vmatpush1.msra.mxu0 0.0
      %847 = vmatprep.subr.mxu0 0.0
      %848 = vmatpush1.msra.mxu0 0.0
      %849 = vmatprep.subr.mxu0 0.0
      %850 = vmatpush1.msra.mxu0 0.0
      %851 = vmatprep.subr.mxu0 0.0
      %852 = vmatpush1.msra.mxu0 0.0
      %853 = vmatprep.subr.mxu0 0.0
      %854 = vmatpush1.msra.mxu0 0.0
      %855 = vmatprep.subr.mxu0 0.0
      %856 = vmatpush1.msra.mxu0 0.0
      %857 = vmatprep.subr.mxu0 0.0
      %858 = vmatpush1.msra.mxu0 0.0
      %859 = vmatprep.subr.mxu0 0.0
      %860 = vmatpush1.msra.mxu0 0.0
      %861 = vmatprep.subr.mxu0 0.0
      %862 = vmatpush1.msra.mxu0 0.0
      %863 = vmatprep.subr.mxu0 0.0
      %864 = vmatpush1.msra.mxu0 0.0
      %865 = vmatprep.subr.mxu0 0.0
      %866 = vmatpush1.msra.mxu0 %v830
      %867 = vmatprep.subr.mxu0 0.0
      %868 = vmatpush2.msra.mxu0 0.0
      %869 = vmatprep.subr.mxu0 0.0
      %870 = vmatpush2.msra.mxu0 0.0
      %871 = vmatprep.subr.mxu0 0.0
      %872 = vmatpush2.msra.mxu0 0.0
      %873 = vmatprep.subr.mxu0 0.0
      %874 = vmatpush2.msra.mxu0 0.0
      %875 = vmatprep.subr.mxu0 0.0
      %876 = vmatpush2.msra.mxu0 0.0
      %877 = vmatprep.subr.mxu0 0.0
      %878 = vmatpush2.msra.mxu0 0.0
      %879 = vmatprep.subr.mxu0 0.0
      %880 = vmatpush2.msra.mxu0 0.0
      %881 = vmatprep.subr.mxu0 0.0
      %882 = vmatpush2.msra.mxu0 0.0
      %883 = vmatprep.subr.mxu0 0.0
      %884 = vmatpush2.msra.mxu0 0.0
      %885 = vmatprep.subr.mxu0 0.0
      %886 = vmatpush2.msra.mxu0 0.0
      %887 = vmatprep.subr.mxu0 0.0
      %888 = vmatpush2.msra.mxu0 0.0
      %889 = vmatprep.subr.mxu0 0.0
      %890 = vmatpush2.msra.mxu0 0.0
      %891 = vmatprep.subr.mxu0 0.0
      %892 = vmatpush2.msra.mxu0 0.0
      %893 = vmatprep.subr.mxu0 0.0
      %894 = vmatpush2.msra.mxu0 0.0
      %895 = vmatprep.subr.mxu0 0.0
      %896 = vmatpush2.msra.mxu0 0.0
      %897 = vmatprep.subr.mxu0 0.0
      %898 = vmatpush2.msra.mxu0 0.0
      %899 = vmatprep.mubr.f32.mxu0 0.0
      %900 = vmatmul.mubr.f32.gmra.mxu0 %v833
      %v901 = vpop.f32.mrf.mxu0
      %v902 = vadd.f32 0.0, %v901
      %v903 = vpop.f32.mrf.mxu0
      %904 = vdwg.mxu0
      %905 = vrot.lane.b32.xlu0 %v447, 112
      %v906 = vpop.permute.xlu0 %905
      %907 = vrot.lane.b32.xlu0 %v506, 112
      %v908 = vpop.permute.xlu0 %907
      %v909 = vsel %vm567, %v906, 0
      %v911 = vsel %vm567, %v908, 0
      %913 = vmatprep.subr.mxu0 0.0
      %914 = vmatpush1.xpose.msra.mxu0 0.0
      %915 = vmatprep.subr.mxu0 0.0
      %916 = vmatpush1.xpose.msra.mxu0 0.0
      %917 = vmatprep.subr.mxu0 0.0
      %918 = vmatpush1.xpose.msra.mxu0 0.0
      %919 = vmatprep.subr.mxu0 0.0
      %920 = vmatpush1.xpose.msra.mxu0 0.0
      %921 = vmatprep.subr.mxu0 0.0
      %922 = vmatpush1.xpose.msra.mxu0 0.0
      %923 = vmatprep.subr.mxu0 0.0
      %924 = vmatpush1.xpose.msra.mxu0 0.0
      %925 = vmatprep.subr.mxu0 0.0
      %926 = vmatpush1.xpose.msra.mxu0 0.0
      %927 = vmatprep.subr.mxu0 0.0
      %928 = vmatpush1.xpose.msra.mxu0 0.0
      %929 = vmatprep.subr.mxu0 0.0
      %930 = vmatpush1.xpose.msra.mxu0 0.0
      %931 = vmatprep.subr.mxu0 0.0
      %932 = vmatpush1.xpose.msra.mxu0 0.0
      %933 = vmatprep.subr.mxu0 0.0
      %934 = vmatpush1.xpose.msra.mxu0 0.0
      %935 = vmatprep.subr.mxu0 0.0
      %936 = vmatpush1.xpose.msra.mxu0 0.0
      %937 = vmatprep.subr.mxu0 0.0
      %938 = vmatpush1.xpose.msra.mxu0 0.0
      %939 = vmatprep.subr.mxu0 0.0
      %940 = vmatpush1.xpose.msra.mxu0 0.0
      %941 = vmatprep.subr.mxu0 0.0
      %942 = vmatpush1.xpose.msra.mxu0 0.0
      %943 = vmatprep.subr.mxu0 0.0
      %944 = vmatpush1.xpose.msra.mxu0 %v911
      %945 = vmatprep.subr.mxu0 0.0
      %946 = vmatpush2.xpose.msra.mxu0 0.0
      %947 = vmatprep.subr.mxu0 0.0
      %948 = vmatpush2.xpose.msra.mxu0 0.0
      %949 = vmatprep.subr.mxu0 0.0
      %950 = vmatpush2.xpose.msra.mxu0 0.0
      %951 = vmatprep.subr.mxu0 0.0
      %952 = vmatpush2.xpose.msra.mxu0 0.0
      %953 = vmatprep.subr.mxu0 0.0
      %954 = vmatpush2.xpose.msra.mxu0 0.0
      %955 = vmatprep.subr.mxu0 0.0
      %956 = vmatpush2.xpose.msra.mxu0 0.0
      %957 = vmatprep.subr.mxu0 0.0
      %958 = vmatpush2.xpose.msra.mxu0 0.0
      %959 = vmatprep.subr.mxu0 0.0
      %960 = vmatpush2.xpose.msra.mxu0 0.0
      %961 = vmatprep.subr.mxu0 0.0
      %962 = vmatpush2.xpose.msra.mxu0 0.0
      %963 = vmatprep.subr.mxu0 0.0
      %964 = vmatpush2.xpose.msra.mxu0 0.0
      %965 = vmatprep.subr.mxu0 0.0
      %966 = vmatpush2.xpose.msra.mxu0 0.0
      %967 = vmatprep.subr.mxu0 0.0
      %968 = vmatpush2.xpose.msra.mxu0 0.0
      %969 = vmatprep.subr.mxu0 0.0
      %970 = vmatpush2.xpose.msra.mxu0 0.0
      %971 = vmatprep.subr.mxu0 0.0
      %972 = vmatpush2.xpose.msra.mxu0 0.0
      %973 = vmatprep.subr.mxu0 0.0
      %974 = vmatpush2.xpose.msra.mxu0 0.0
      %975 = vmatprep.subr.mxu0 0.0
      %976 = vmatpush2.xpose.msra.mxu0 0.0
      %977 = vmatprep.mubr.f32.mxu0 0.0
      %978 = vmatmul.mubr.f32.gmra.mxu0 %v909
      %v979 = vpop.f32.mrf.mxu0
      %v980 = vadd.f32 0.0, %v979
      %v981 = vpop.f32.mrf.mxu0
      %982 = vdwg.mxu0
      %v983 = vsel %vm650, -1e+20, %v980
      %v984 = vmul.f32 %v983, 0.17677669
      %v985 = vsel %vm567, %v984, -inf
      %986 = vmax.xlane.f32.xlu0 %v985
      %v987 = vpop.xlane.xlu0 %986
      %v988 = vsub.f32 %v984, %v987
      %v989 = vmul.f32 %v988, 1.442695
      %v990 = vpow.pop %v989
      %v991 = vsel %vm567, %v990, 0.0
      %992 = vadd.xlane.f32.xlu0 %v991
      %v993 = vpop.xlane.xlu0 %992
      %v994 = vrcp.pop %v993
      %v995 = vmul.f32 %v990, %v994
      %996 = vrot.lane.b32.xlu0 %v562, 112
      %v997 = vpop.permute.xlu0 %996
      %v1000 = vsel %vm567, %v995, 0
      %1002 = vmatprep.subr.mxu0 0.0
      %1003 = vmatpush1.msra.mxu0 0.0
      %1004 = vmatprep.subr.mxu0 0.0
      %1005 = vmatpush1.msra.mxu0 0.0
      %1006 = vmatprep.subr.mxu0 0.0
      %1007 = vmatpush1.msra.mxu0 0.0
      %1008 = vmatprep.subr.mxu0 0.0
      %1009 = vmatpush1.msra.mxu0 0.0
      %1010 = vmatprep.subr.mxu0 0.0
      %1011 = vmatpush1.msra.mxu0 0.0
      %1012 = vmatprep.subr.mxu0 0.0
      %1013 = vmatpush1.msra.mxu0 0.0
      %1014 = vmatprep.subr.mxu0 0.0
      %1015 = vmatpush1.msra.mxu0 0.0
      %1016 = vmatprep.subr.mxu0 0.0
      %1017 = vmatpush1.msra.mxu0 0.0
      %1018 = vmatprep.subr.mxu0 0.0
      %1019 = vmatpush1.msra.mxu0 0.0
      %1020 = vmatprep.subr.mxu0 0.0
      %1021 = vmatpush1.msra.mxu0 0.0
      %1022 = vmatprep.subr.mxu0 0.0
      %1023 = vmatpush1.msra.mxu0 0.0
      %1024 = vmatprep.subr.mxu0 0.0
      %1025 = vmatpush1.msra.mxu0 0.0
      %1026 = vmatprep.subr.mxu0 0.0
      %1027 = vmatpush1.msra.mxu0 0.0
      %1028 = vmatprep.subr.mxu0 0.0
      %1029 = vmatpush1.msra.mxu0 0.0
      %1030 = vmatprep.subr.mxu0 0.0
      %1031 = vmatpush1.msra.mxu0 0.0
      %1032 = vmatprep.subr.mxu0 0.0
      %1033 = vmatpush1.msra.mxu0 %v997
      %1034 = vmatprep.subr.mxu0 0.0
      %1035 = vmatpush2.msra.mxu0 0.0
      %1036 = vmatprep.subr.mxu0 0.0
      %1037 = vmatpush2.msra.mxu0 0.0
      %1038 = vmatprep.subr.mxu0 0.0
      %1039 = vmatpush2.msra.mxu0 0.0
      %1040 = vmatprep.subr.mxu0 0.0
      %1041 = vmatpush2.msra.mxu0 0.0
      %1042 = vmatprep.subr.mxu0 0.0
      %1043 = vmatpush2.msra.mxu0 0.0
      %1044 = vmatprep.subr.mxu0 0.0
      %1045 = vmatpush2.msra.mxu0 0.0
      %1046 = vmatprep.subr.mxu0 0.0
      %1047 = vmatpush2.msra.mxu0 0.0
      %1048 = vmatprep.subr.mxu0 0.0
      %1049 = vmatpush2.msra.mxu0 0.0
      %1050 = vmatprep.subr.mxu0 0.0
      %1051 = vmatpush2.msra.mxu0 0.0
      %1052 = vmatprep.subr.mxu0 0.0
      %1053 = vmatpush2.msra.mxu0 0.0
      %1054 = vmatprep.subr.mxu0 0.0
      %1055 = vmatpush2.msra.mxu0 0.0
      %1056 = vmatprep.subr.mxu0 0.0
      %1057 = vmatpush2.msra.mxu0 0.0
      %1058 = vmatprep.subr.mxu0 0.0
      %1059 = vmatpush2.msra.mxu0 0.0
      %1060 = vmatprep.subr.mxu0 0.0
      %1061 = vmatpush2.msra.mxu0 0.0
      %1062 = vmatprep.subr.mxu0 0.0
      %1063 = vmatpush2.msra.mxu0 0.0
      %1064 = vmatprep.subr.mxu0 0.0
      %1065 = vmatpush2.msra.mxu0 0.0
      %1066 = vmatprep.mubr.f32.mxu0 0.0
      %1067 = vmatmul.mubr.f32.gmra.mxu0 %v1000
      %v1068 = vpop.f32.mrf.mxu0
      %v1069 = vadd.f32 0.0, %v1068
      %v1070 = vpop.f32.mrf.mxu0
      %1071 = vdwg.mxu0
      %1072 = vrot.lane.b32.xlu0 %v447, 104
      %v1073 = vpop.permute.xlu0 %1072
      %1074 = vrot.lane.b32.xlu0 %v506, 104
      %v1075 = vpop.permute.xlu0 %1074
      %v1076 = vsel %vm567, %v1073, 0
      %v1078 = vsel %vm567, %v1075, 0
      %1080 = vmatprep.subr.mxu0 0.0
      %1081 = vmatpush1.xpose.msra.mxu0 0.0
      %1082 = vmatprep.subr.mxu0 0.0
      %1083 = vmatpush1.xpose.msra.mxu0 0.0
      %1084 = vmatprep.subr.mxu0 0.0
      %1085 = vmatpush1.xpose.msra.mxu0 0.0
      %1086 = vmatprep.subr.mxu0 0.0
      %1087 = vmatpush1.xpose.msra.mxu0 0.0
      %1088 = vmatprep.subr.mxu0 0.0
      %1089 = vmatpush1.xpose.msra.mxu0 0.0
      %1090 = vmatprep.subr.mxu0 0.0
      %1091 = vmatpush1.xpose.msra.mxu0 0.0
      %1092 = vmatprep.subr.mxu0 0.0
      %1093 = vmatpush1.xpose.msra.mxu0 0.0
      %1094 = vmatprep.subr.mxu0 0.0
      %1095 = vmatpush1.xpose.msra.mxu0 0.0
      %1096 = vmatprep.subr.mxu0 0.0
      %1097 = vmatpush1.xpose.msra.mxu0 0.0
      %1098 = vmatprep.subr.mxu0 0.0
      %1099 = vmatpush1.xpose.msra.mxu0 0.0
      %1100 = vmatprep.subr.mxu0 0.0
      %1101 = vmatpush1.xpose.msra.mxu0 0.0
      %1102 = vmatprep.subr.mxu0 0.0
      %1103 = vmatpush1.xpose.msra.mxu0 0.0
      %1104 = vmatprep.subr.mxu0 0.0
      %1105 = vmatpush1.xpose.msra.mxu0 0.0
      %1106 = vmatprep.subr.mxu0 0.0
      %1107 = vmatpush1.xpose.msra.mxu0 0.0
      %1108 = vmatprep.subr.mxu0 0.0
      %1109 = vmatpush1.xpose.msra.mxu0 0.0
      %1110 = vmatprep.subr.mxu0 0.0
      %1111 = vmatpush1.xpose.msra.mxu0 %v1078
      %1112 = vmatprep.subr.mxu0 0.0
      %1113 = vmatpush2.xpose.msra.mxu0 0.0
      %1114 = vmatprep.subr.mxu0 0.0
      %1115 = vmatpush2.xpose.msra.mxu0 0.0
      %1116 = vmatprep.subr.mxu0 0.0
      %1117 = vmatpush2.xpose.msra.mxu0 0.0
      %1118 = vmatprep.subr.mxu0 0.0
      %1119 = vmatpush2.xpose.msra.mxu0 0.0
      %1120 = vmatprep.subr.mxu0 0.0
      %1121 = vmatpush2.xpose.msra.mxu0 0.0
      %1122 = vmatprep.subr.mxu0 0.0
      %1123 = vmatpush2.xpose.msra.mxu0 0.0
      %1124 = vmatprep.subr.mxu0 0.0
      %1125 = vmatpush2.xpose.msra.mxu0 0.0
      %1126 = vmatprep.subr.mxu0 0.0
      %1127 = vmatpush2.xpose.msra.mxu0 0.0
      %1128 = vmatprep.subr.mxu0 0.0
      %1129 = vmatpush2.xpose.msra.mxu0 0.0
      %1130 = vmatprep.subr.mxu0 0.0
      %1131 = vmatpush2.xpose.msra.mxu0 0.0
      %1132 = vmatprep.subr.mxu0 0.0
      %1133 = vmatpush2.xpose.msra.mxu0 0.0
      %1134 = vmatprep.subr.mxu0 0.0
      %1135 = vmatpush2.xpose.msra.mxu0 0.0
      %1136 = vmatprep.subr.mxu0 0.0
      %1137 = vmatpush2.xpose.msra.mxu0 0.0
      %1138 = vmatprep.subr.mxu0 0.0
      %1139 = vmatpush2.xpose.msra.mxu0 0.0
      %1140 = vmatprep.subr.mxu0 0.0
      %1141 = vmatpush2.xpose.msra.mxu0 0.0
      %1142 = vmatprep.subr.mxu0 0.0
      %1143 = vmatpush2.xpose.msra.mxu0 0.0
      %1144 = vmatprep.mubr.f32.mxu0 0.0
      %1145 = vmatmul.mubr.f32.gmra.mxu0 %v1076
      %v1146 = vpop.f32.mrf.mxu0
      %v1147 = vadd.f32 0.0, %v1146
      %v1148 = vpop.f32.mrf.mxu0
      %1149 = vdwg.mxu0
      %v1150 = vsel %vm650, -1e+20, %v1147
      %v1151 = vmul.f32 %v1150, 0.17677669
      %v1152 = vsel %vm567, %v1151, -inf
      %1153 = vmax.xlane.f32.xlu0 %v1152
      %v1154 = vpop.xlane.xlu0 %1153
      %v1155 = vsub.f32 %v1151, %v1154
      %v1156 = vmul.f32 %v1155, 1.442695
      %v1157 = vpow.pop %v1156
      %v1158 = vsel %vm567, %v1157, 0.0
      %1159 = vadd.xlane.f32.xlu0 %v1158
      %v1160 = vpop.xlane.xlu0 %1159
      %v1161 = vrcp.pop %v1160
      %v1162 = vmul.f32 %v1157, %v1161
      %1163 = vrot.lane.b32.xlu0 %v562, 104
      %v1164 = vpop.permute.xlu0 %1163
      %v1167 = vsel %vm567, %v1162, 0
      %1169 = vmatprep.subr.mxu0 0.0
      %1170 = vmatpush1.msra.mxu0 0.0
      %1171 = vmatprep.subr.mxu0 0.0
      %1172 = vmatpush1.msra.mxu0 0.0
      %1173 = vmatprep.subr.mxu0 0.0
      %1174 = vmatpush1.msra.mxu0 0.0
      %1175 = vmatprep.subr.mxu0 0.0
      %1176 = vmatpush1.msra.mxu0 0.0
      %1177 = vmatprep.subr.mxu0 0.0
      %1178 = vmatpush1.msra.mxu0 0.0
      %1179 = vmatprep.subr.mxu0 0.0
      %1180 = vmatpush1.msra.mxu0 0.0
      %1181 = vmatprep.subr.mxu0 0.0
      %1182 = vmatpush1.msra.mxu0 0.0
      %1183 = vmatprep.subr.mxu0 0.0
      %1184 = vmatpush1.msra.mxu0 0.0
      %1185 = vmatprep.subr.mxu0 0.0
      %1186 = vmatpush1.msra.mxu0 0.0
      %1187 = vmatprep.subr.mxu0 0.0
      %1188 = vmatpush1.msra.mxu0 0.0
      %1189 = vmatprep.subr.mxu0 0.0
      %1190 = vmatpush1.msra.mxu0 0.0
      %1191 = vmatprep.subr.mxu0 0.0
      %1192 = vmatpush1.msra.mxu0 0.0
      %1193 = vmatprep.subr.mxu0 0.0
      %1194 = vmatpush1.msra.mxu0 0.0
      %1195 = vmatprep.subr.mxu0 0.0
      %1196 = vmatpush1.msra.mxu0 0.0
      %1197 = vmatprep.subr.mxu0 0.0
      %1198 = vmatpush1.msra.mxu0 0.0
      %1199 = vmatprep.subr.mxu0 0.0
      %1200 = vmatpush1.msra.mxu0 %v1164
      %1201 = vmatprep.subr.mxu0 0.0
      %1202 = vmatpush2.msra.mxu0 0.0
      %1203 = vmatprep.subr.mxu0 0.0
      %1204 = vmatpush2.msra.mxu0 0.0
      %1205 = vmatprep.subr.mxu0 0.0
      %1206 = vmatpush2.msra.mxu0 0.0
      %1207 = vmatprep.subr.mxu0 0.0
      %1208 = vmatpush2.msra.mxu0 0.0
      %1209 = vmatprep.subr.mxu0 0.0
      %1210 = vmatpush2.msra.mxu0 0.0
      %1211 = vmatprep.subr.mxu0 0.0
      %1212 = vmatpush2.msra.mxu0 0.0
      %1213 = vmatprep.subr.mxu0 0.0
      %1214 = vmatpush2.msra.mxu0 0.0
      %1215 = vmatprep.subr.mxu0 0.0
      %1216 = vmatpush2.msra.mxu0 0.0
      %1217 = vmatprep.subr.mxu0 0.0
      %1218 = vmatpush2.msra.mxu0 0.0
      %1219 = vmatprep.subr.mxu0 0.0
      %1220 = vmatpush2.msra.mxu0 0.0
      %1221 = vmatprep.subr.mxu0 0.0
      %1222 = vmatpush2.msra.mxu0 0.0
      %1223 = vmatprep.subr.mxu0 0.0
      %1224 = vmatpush2.msra.mxu0 0.0
      %1225 = vmatprep.subr.mxu0 0.0
      %1226 = vmatpush2.msra.mxu0 0.0
      %1227 = vmatprep.subr.mxu0 0.0
      %1228 = vmatpush2.msra.mxu0 0.0
      %1229 = vmatprep.subr.mxu0 0.0
      %1230 = vmatpush2.msra.mxu0 0.0
      %1231 = vmatprep.subr.mxu0 0.0
      %1232 = vmatpush2.msra.mxu0 0.0
      %1233 = vmatprep.mubr.f32.mxu0 0.0
      %1234 = vmatmul.mubr.f32.gmra.mxu0 %v1167
      %v1235 = vpop.f32.mrf.mxu0
      %v1236 = vadd.f32 0.0, %v1235
      %v1237 = vpop.f32.mrf.mxu0
      %1238 = vdwg.mxu0
      %1240 = vrot.lane.b32.xlu0 %v902, 8
      %v1241 = vpop.permute.xlu0 %1240
      %1244 = vrot.lane.b32.xlu0 %v1069, 16
      %v1245 = vpop.permute.xlu0 %1244
      %1248 = vrot.lane.b32.xlu0 %v1236, 24
      %v1249 = vpop.permute.xlu0 %1248
      %v1251 = vsel %vm567, %v734, %v1241
      %vm1252 = vcmask 130048
      %v1253 = vsel %vm1252, %v1251, %v1245
      %vm1254 = vcmask 195584
      %v1255 = vsel %vm1254, %v1253, %v1249
      %v1256 = vpack.c.bf16 %v1255, %v1255
      %v1257 = vld [vmem:[%s6] sm:$0xf]
      %v1258 = vld [vmem:[%s6 + $0x4] sm:$0xf]
      %v1259 = vld [vmem:[%s6 + $0x8] sm:$0xf]
      %v1260 = vld [vmem:[%s6 + $0xc] sm:$0xf]
      %v1261 = vld [vmem:[%s7] sm:$0x1]
      %v1263 = vlaneseq
      %v1264 = vshrl.u32 %v1263, 7
      %v1265 = vsub.s32 0, %v1264
      %v1266 = vrot.slane %v1261, %v1265
      %v1272 = vunpack.c.l.b16 %v1257
      %v1273 = vunpack.c.l.b16 %v1258
      %v1274 = vunpack.c.l.b16 %v1259
      %v1275 = vunpack.c.l.b16 %v1260
      %v1276 = vpack.c.b16 %v1273, %v1272
      %v1277 = vpack.c.b16 %v1275, %v1274
      %v1281 = vsel %vm408, %v1256, 0
      %1283 = vmatprep.subr.bf16.mxu0 0
      %1284 = vmatpush1.bf16.msra.mxu0 0
      %1285 = vmatprep.subr.bf16.mxu0 0
      %1286 = vmatpush1.bf16.msra.mxu0 0
      %1287 = vmatprep.subr.bf16.mxu0 0
      %1288 = vmatpush1.bf16.msra.mxu0 0
      %1289 = vmatprep.subr.bf16.mxu0 0
      %1290 = vmatpush1.bf16.msra.mxu0 0
      %1291 = vmatprep.subr.bf16.mxu0 0
      %1292 = vmatpush1.bf16.msra.mxu0 0
      %1293 = vmatprep.subr.bf16.mxu0 0
      %1294 = vmatpush1.bf16.msra.mxu0 0
      %1295 = vmatprep.subr.bf16.mxu0 0
      %1296 = vmatpush1.bf16.msra.mxu0 %v1277
      %1297 = vmatprep.subr.bf16.mxu0 0
      %1298 = vmatpush1.bf16.msra.mxu0 %v1276
      %1299 = vmatprep.subr.bf16.mxu0 0
      %1300 = vmatpush2.bf16.msra.mxu0 0
      %1301 = vmatprep.subr.bf16.mxu0 0
      %1302 = vmatpush2.bf16.msra.mxu0 0
      %1303 = vmatprep.subr.bf16.mxu0 0
      %1304 = vmatpush2.bf16.msra.mxu0 0
      %1305 = vmatprep.subr.bf16.mxu0 0
      %1306 = vmatpush2.bf16.msra.mxu0 0
      %1307 = vmatprep.subr.bf16.mxu0 0
      %1308 = vmatpush2.bf16.msra.mxu0 0
      %1309 = vmatprep.subr.bf16.mxu0 0
      %1310 = vmatpush2.bf16.msra.mxu0 0
      %1311 = vmatprep.subr.bf16.mxu0 0
      %1312 = vmatpush2.bf16.msra.mxu0 0
      %1313 = vmatprep.subr.bf16.mxu0 0
      %1314 = vmatpush2.bf16.msra.mxu0 0
      %1315 = vmatprep.mubr.bf16.mxu0 0
      %1316 = vmatmul.mubr.bf16.gmra.mxu0 %v1281
      %v1317 = vpop.f32.mrf.mxu0
      %v1318 = vadd.f32 %v1266, %v1317
      %v1319 = vpop.f32.mrf.mxu0
      %v1320 = vpop.f32.mrf.mxu0
      %v1321 = vpop.f32.mrf.mxu0
      %1322 = vdwg.mxu0
      %v1323 = vadd.f32 %v1318, %v387
      %v1324 = vsel %vm408, %v1323, 0.0
      %1325 = vadd.xlane.f32.xlu0 %v1324
      %v1326 = vpop.xlane.xlu0 %1325
      %v1327 = vrcp.pop 32.0
      %v1328 = vmul.f32 %v1326, %v1327
      %v1329 = vsub.f32 %v1323, %v1328
      %v1330 = vmul.f32 %v1329, %v1329
      %v1331 = vsel %vm408, %v1330, 0.0
      %1332 = vadd.xlane.f32.xlu0 %v1331
      %v1333 = vpop.xlane.xlu0 %1332
      %v1334 = vmul.f32 %v1333, %v1327
      %v1335 = vadd.f32 %v1334, 1e-05
      %v1336 = vrsqrt.pop %v1335
      %v1337 = vmul.f32 %v1329, %v1336
      %v1338 = vld [vmem:[%s8] sm:$0x1]
      %v1340 = vlaneseq
      %v1341 = vshrl.u32 %v1340, 7
      %v1342 = vsub.s32 0, %v1341
      %v1343 = vrot.slane %v1338, %v1342
      %v1345 = vmul.f32 %v1337, %v1343
      %v1346 = vld [vmem:[%s9] sm:$0x1]
      %v1348 = vlaneseq
      %v1349 = vshrl.u32 %v1348, 7
      %v1350 = vsub.s32 0, %v1349
      %v1351 = vrot.slane %v1346, %v1350
      %v1353 = vadd.f32 %v1345, %v1351
      %1354 = vst.msk [vmem:[%s385] sm:$0xff] %vm408, %v1353
      %p1355 = scmp.lt.s32.totalorder %s21, 1
      %s1356 = scalar_select %p1355, %s21, 1
      %s1357 = smul.addr %s1356, 8
      %s1358 = scalar_lea.vmem %s10, %s1357
      // Predicated region
      $region61: #{decoder_forward.10} parent=59 // pred_check
        %p1359 = pneg %p264
      $region62: #{decoder_forward.10} parent=59 // pred_check_branch
        %1361 = sbr.rel (%p1359) target = $region64
      $region63: #{decoder_forward.10} parent=59 // pred_region
        _
      $region64: #{decoder_forward.10} parent=59 // pred_fallthru
        _
    $region60: #{decoder_forward.10} parent=5 // pred_fallthru
      _
    %p1362 = scmp.le.s32.totalorder 2, %s16
    // Predicated region
    $region65: #{decoder_forward.10} parent=5 // pred_check
      %p1363 = pneg %p1362
    $region66: #{decoder_forward.10} parent=5 // pred_check_branch
      %1365 = sbr.rel (%p1363) target = $region68
    $region67: #{decoder_forward.10} parent=5 // pred_region
      %s1366 = ssub.s32 %s16, 2
      // Predicated region
      $region69: #{decoder_forward.10} parent=67 // pred_check
        %p1367 = pneg %p270
      $region70: #{decoder_forward.10} parent=67 // pred_check_branch
        %1369 = sbr.rel (%p1367) target = $region72
      $region71: #{decoder_forward.10} parent=67 // pred_region
        %p1370 = scmp.lt.s32.totalorder %s22, 1
        %s1371 = scalar_select %p1370, %s22, 1
        %s1372 = smul.addr %s1371, 8
        %s1373 = scalar_lea.vmem %s10, %s1372
      $region72: #{decoder_forward.10} parent=67 // pred_fallthru
        _
    $region68: #{decoder_forward.10} parent=5 // pred_fallthru
      _
  $region6: #{decoder_forward.10} parent=0 // loop_footer
    %s20 = sadd.s32 1, %s16
  $region7: #{decoder_forward.10} parent=0 // loop_footer_branch
    %15 = sbr.rel target = $region3
  $region8: #{decoder_forward.10} parent=0 // loop_exit
    _

// kernel: decoder_forward.9
$region0: #{decoder_forward.9}
  #allocation0 [shape = 'u32[]', space=smem, size = 0x4, offset = 0x4, fixed_abs, tag = 'smem constant byte address 0x4 - core index']
  #allocation1 [shape = 'u32[144,128]{1,0:T(1,128)}', space=vmem, size = 0x12000, scoped, tag = 'internal scratch']
  %s0 = inlined_call_operand.vmem [shape: f32[2,8,32], index: 0, kind: input, shape index: {}, may-alias: {0,1}]
  %s1 = inlined_call_operand.vmem [shape: f32[2,8,32], index: 1, kind: input, shape index: {}, may-alias: {0,1}]
  %s2 = inlined_call_operand.vmem [shape: f32[2,1,8,8], index: 2, kind: input, shape index: {}]
  %s3 = inlined_call_operand.vmem [shape: bf16[32,32], index: 3, kind: input, shape index: {}]
  %s4 = inlined_call_operand.vmem [shape: bf16[32,32], index: 4, kind: input, shape index: {}]
  %s5 = inlined_call_operand.vmem [shape: bf16[32,32], index: 5, kind: input, shape index: {}]
  %s6 = inlined_call_operand.vmem [shape: bf16[32,32], index: 6, kind: input, shape index: {}]
  %s7 = inlined_call_operand.vmem [shape: f32[1,32], index: 7, kind: input, shape index: {}]
  %s8 = inlined_call_operand.vmem [shape: f32[1,32], index: 8, kind: input, shape index: {}]
  %s9 = inlined_call_operand.vmem [shape: f32[1,32], index: 9, kind: input, shape index: {}]
  %s10 = inlined_call_operand.vmem [shape: f32[2,8,32], index: 10, kind: output, shape index: {}]
  %s11 = sld [smem:[#allocation0]]
  $region73: #{decoder_forward.9} parent=0
    _
  %s13 = ssub.s32 1, %s11
  %s14 = scalar_select 0, %s13, %s11
  loop: start=0, step=1, limit=4
  $region2: #{decoder_forward.9} parent=0 // loop_pre_header
    _
  $region3: #{decoder_forward.9} parent=0 // loop_header
    %s16 = sphi 0, %s20
    %p17 = scmp.ge.s32.totalorder %s16, 4
    %s26 = sphi 0, %s28
    %s29 = sphi 0, %s26
    %s30 = sphi 0, %s29
    %s46 = sphi 0, %s30
    %s52 = sphi 0, %s54
    %s55 = sphi 0, %s52
    %s56 = sphi 0, %s55
    %s72 = sphi 0, %s56
    %s78 = sphi 0, %s80
    %s81 = sphi 0, %s78
    %s82 = sphi 0, %s81
    %s98 = sphi 0, %s82
    %s102 = sphi 0, %s102
    %s104 = sphi 0, %s102
    %s105 = sphi 0, %s104
    %s119 = sphi 0, %s105
    %s123 = sphi 0, %s123
    %s125 = sphi 0, %s123
    %s126 = sphi 0, %s125
    %s140 = sphi 0, %s126
    %s144 = sphi 0, %s144
    %s146 = sphi 0, %s144
    %s147 = sphi 0, %s146
    %s161 = sphi 0, %s147
    %s165 = sphi 0, %s165
    %s167 = sphi 0, %s165
    %s168 = sphi 0, %s167
    %s182 = sphi 0, %s168
    %s186 = sphi 0, %s186
    %s188 = sphi 0, %s186
    %s189 = sphi 0, %s188
    %s203 = sphi 0, %s189
    %s207 = sphi 0, %s207
    %s209 = sphi 0, %s207
    %s210 = sphi 0, %s209
    %s224 = sphi 0, %s210
    %s228 = sphi 0, %s228
    %s230 = sphi 0, %s228
    %s231 = sphi 0, %s230
    %s245 = sphi 0, %s231
    %s251 = sphi 0, %s253
    %s254 = sphi 0, %s251
    %s255 = sphi 0, %s254
    %s271 = sphi 0, %s255
  $region4: #{decoder_forward.9} parent=0 // loop_header_branch
    %19 = sbr.rel (%p17) target = $region8
  $region5: #{decoder_forward.9} parent=0 // loop_body
    %s21 = ssub.s32 %s16, 1
    %s22 = ssub.s32 %s16, 2
    %s23 = sadd.s32 %s16, 1
    %s24 = ssub.s32 %s16, %s23
    %p25 = scmp.eq.s32.totalorder %s24, 0
    %s27 = sadd.s32 %s26, 1
    %s28 = scalar_select %p25, %s26, %s27
    %p31 = pneg %p25
    %p32 = scmp.eq.s32.totalorder %s16, 1
    %p33 = por %p31, %p32
    %p34 = scmp.ne.s32.totalorder %s26, %s29
    %p35 = scmp.eq.s32.totalorder %s16, 0
    %p36 = por %p34, %p35
    %p37 = scmp.ne.s32.totalorder %s26, %s29
    %p38 = scmp.eq.s32.totalorder %s21, 1
    %p39 = por %p37, %p38
    %p40 = scmp.ne.s32.totalorder %s29, %s30
    %p41 = scmp.eq.s32.totalorder %s21, 0
    %p42 = por %p40, %p41
    %p43 = scmp.ne.s32.totalorder %s29, %s30
    %p44 = scmp.eq.s32.totalorder %s22, 1
    %p45 = por %p43, %p44
    %p47 = scmp.ne.s32.totalorder %s30, %s46
    %p48 = scmp.eq.s32.totalorder %s22, 0
    %p49 = por %p47, %p48
    %s50 = ssub.s32 %s16, %s23
    %p51 = scmp.eq.s32.totalorder %s50, 0
    %s53 = sadd.s32 %s52, 1
    %s54 = scalar_select %p51, %s52, %s53
    %p57 = pneg %p51
    %p58 = scmp.eq.s32.totalorder %s16, 1
    %p59 = por %p57, %p58
    %p60 = scmp.ne.s32.totalorder %s52, %s55
    %p61 = scmp.eq.s32.totalorder %s16, 0
    %p62 = por %p60, %p61
    %p63 = scmp.ne.s32.totalorder %s52, %s55
    %p64 = scmp.eq.s32.totalorder %s21, 1
    %p65 = por %p63, %p64
    %p66 = scmp.ne.s32.totalorder %s55, %s56
    %p67 = scmp.eq.s32.totalorder %s21, 0
    %p68 = por %p66, %p67
    %p69 = scmp.ne.s32.totalorder %s55, %s56
    %p70 = scmp.eq.s32.totalorder %s22, 1
    %p71 = por %p69, %p70
    %p73 = scmp.ne.s32.totalorder %s56, %s72
    %p74 = scmp.eq.s32.totalorder %s22, 0
    %p75 = por %p73, %p74
    %s76 = ssub.s32 %s16, %s23
    %p77 = scmp.eq.s32.totalorder %s76, 0
    %s79 = sadd.s32 %s78, 1
    %s80 = scalar_select %p77, %s78, %s79
    %p83 = pneg %p77
    %p84 = scmp.eq.s32.totalorder %s16, 1
    %p85 = por %p83, %p84
    %p86 = scmp.ne.s32.totalorder %s78, %s81
    %p87 = scmp.eq.s32.totalorder %s16, 0
    %p88 = por %p86, %p87
    %p89 = scmp.ne.s32.totalorder %s78, %s81
    %p90 = scmp.eq.s32.totalorder %s21, 1
    %p91 = por %p89, %p90
    %p92 = scmp.ne.s32.totalorder %s81, %s82
    %p93 = scmp.eq.s32.totalorder %s21, 0
    %p94 = por %p92, %p93
    %p95 = scmp.ne.s32.totalorder %s81, %s82
    %p96 = scmp.eq.s32.totalorder %s22, 1
    %p97 = por %p95, %p96
    %p99 = scmp.ne.s32.totalorder %s82, %s98
    %p100 = scmp.eq.s32.totalorder %s22, 0
    %p101 = por %p99, %p100
    %s103 = sadd.s32 %s102, 1
    %p106 = scmp.eq.s32.totalorder %s16, 1
    %p107 = scmp.ne.s32.totalorder %s102, %s104
    %p108 = scmp.eq.s32.totalorder %s16, 0
    %p109 = por %p107, %p108
    %p110 = scmp.ne.s32.totalorder %s102, %s104
    %p111 = scmp.eq.s32.totalorder %s21, 1
    %p112 = por %p110, %p111
    %p113 = scmp.ne.s32.totalorder %s104, %s105
    %p114 = scmp.eq.s32.totalorder %s21, 0
    %p115 = por %p113, %p114
    %p116 = scmp.ne.s32.totalorder %s104, %s105
    %p117 = scmp.eq.s32.totalorder %s22, 1
    %p118 = por %p116, %p117
    %p120 = scmp.ne.s32.totalorder %s105, %s119
    %p121 = scmp.eq.s32.totalorder %s22, 0
    %p122 = por %p120, %p121
    %s124 = sadd.s32 %s123, 1
    %p127 = scmp.eq.s32.totalorder %s16, 1
    %p128 = scmp.ne.s32.totalorder %s123, %s125
    %p129 = scmp.eq.s32.totalorder %s16, 0
    %p130 = por %p128, %p129
    %p131 = scmp.ne.s32.totalorder %s123, %s125
    %p132 = scmp.eq.s32.totalorder %s21, 1
    %p133 = por %p131, %p132
    %p134 = scmp.ne.s32.totalorder %s125, %s126
    %p135 = scmp.eq.s32.totalorder %s21, 0
    %p136 = por %p134, %p135
    %p137 = scmp.ne.s32.totalorder %s125, %s126
    %p138 = scmp.eq.s32.totalorder %s22, 1
    %p139 = por %p137, %p138
    %p141 = scmp.ne.s32.totalorder %s126, %s140
    %p142 = scmp.eq.s32.totalorder %s22, 0
    %p143 = por %p141, %p142
    %s145 = sadd.s32 %s144, 1
    %p148 = scmp.eq.s32.totalorder %s16, 1
    %p149 = scmp.ne.s32.totalorder %s144, %s146
    %p150 = scmp.eq.s32.totalorder %s16, 0
    %p151 = por %p149, %p150
    %p152 = scmp.ne.s32.totalorder %s144, %s146
    %p153 = scmp.eq.s32.totalorder %s21, 1
    %p154 = por %p152, %p153
    %p155 = scmp.ne.s32.totalorder %s146, %s147
    %p156 = scmp.eq.s32.totalorder %s21, 0
    %p157 = por %p155, %p156
    %p158 = scmp.ne.s32.totalorder %s146, %s147
    %p159 = scmp.eq.s32.totalorder %s22, 1
    %p160 = por %p158, %p159
    %p162 = scmp.ne.s32.totalorder %s147, %s161
    %p163 = scmp.eq.s32.totalorder %s22, 0
    %p164 = por %p162, %p163
    %s166 = sadd.s32 %s165, 1
    %p169 = scmp.eq.s32.totalorder %s16, 1
    %p170 = scmp.ne.s32.totalorder %s165, %s167
    %p171 = scmp.eq.s32.totalorder %s16, 0
    %p172 = por %p170, %p171
    %p173 = scmp.ne.s32.totalorder %s165, %s167
    %p174 = scmp.eq.s32.totalorder %s21, 1
    %p175 = por %p173, %p174
    %p176 = scmp.ne.s32.totalorder %s167, %s168
    %p177 = scmp.eq.s32.totalorder %s21, 0
    %p178 = por %p176, %p177
    %p179 = scmp.ne.s32.totalorder %s167, %s168
    %p180 = scmp.eq.s32.totalorder %s22, 1
    %p181 = por %p179, %p180
    %p183 = scmp.ne.s32.totalorder %s168, %s182
    %p184 = scmp.eq.s32.totalorder %s22, 0
    %p185 = por %p183, %p184
    %s187 = sadd.s32 %s186, 1
    %p190 = scmp.eq.s32.totalorder %s16, 1
    %p191 = scmp.ne.s32.totalorder %s186, %s188
    %p192 = scmp.eq.s32.totalorder %s16, 0
    %p193 = por %p191, %p192
    %p194 = scmp.ne.s32.totalorder %s186, %s188
    %p195 = scmp.eq.s32.totalorder %s21, 1
    %p196 = por %p194, %p195
    %p197 = scmp.ne.s32.totalorder %s188, %s189
    %p198 = scmp.eq.s32.totalorder %s21, 0
    %p199 = por %p197, %p198
    %p200 = scmp.ne.s32.totalorder %s188, %s189
    %p201 = scmp.eq.s32.totalorder %s22, 1
    %p202 = por %p200, %p201
    %p204 = scmp.ne.s32.totalorder %s189, %s203
    %p205 = scmp.eq.s32.totalorder %s22, 0
    %p206 = por %p204, %p205
    %s208 = sadd.s32 %s207, 1
    %p211 = scmp.eq.s32.totalorder %s16, 1
    %p212 = scmp.ne.s32.totalorder %s207, %s209
    %p213 = scmp.eq.s32.totalorder %s16, 0
    %p214 = por %p212, %p213
    %p215 = scmp.ne.s32.totalorder %s207, %s209
    %p216 = scmp.eq.s32.totalorder %s21, 1
    %p217 = por %p215, %p216
    %p218 = scmp.ne.s32.totalorder %s209, %s210
    %p219 = scmp.eq.s32.totalorder %s21, 0
    %p220 = por %p218, %p219
    %p221 = scmp.ne.s32.totalorder %s209, %s210
    %p222 = scmp.eq.s32.totalorder %s22, 1
    %p223 = por %p221, %p222
    %p225 = scmp.ne.s32.totalorder %s210, %s224
    %p226 = scmp.eq.s32.totalorder %s22, 0
    %p227 = por %p225, %p226
    %s229 = sadd.s32 %s228, 1
    %p232 = scmp.eq.s32.totalorder %s16, 1
    %p233 = scmp.ne.s32.totalorder %s228, %s230
    %p234 = scmp.eq.s32.totalorder %s16, 0
    %p235 = por %p233, %p234
    %p236 = scmp.ne.s32.totalorder %s228, %s230
    %p237 = scmp.eq.s32.totalorder %s21, 1
    %p238 = por %p236, %p237
    %p239 = scmp.ne.s32.totalorder %s230, %s231
    %p240 = scmp.eq.s32.totalorder %s21, 0
    %p241 = por %p239, %p240
    %p242 = scmp.ne.s32.totalorder %s230, %s231
    %p243 = scmp.eq.s32.totalorder %s22, 1
    %p244 = por %p242, %p243
    %p246 = scmp.ne.s32.totalorder %s231, %s245
    %p247 = scmp.eq.s32.totalorder %s22, 0
    %p248 = por %p246, %p247
    %s249 = ssub.s32 %s16, %s23
    %p250 = scmp.eq.s32.totalorder %s249, 0
    %s252 = sadd.s32 %s251, 1
    %s253 = scalar_select %p250, %s251, %s252
    %p256 = pneg %p250
    %p257 = scmp.eq.s32.totalorder %s16, 1
    %p258 = por %p256, %p257
    %p259 = scmp.ne.s32.totalorder %s251, %s254
    %p260 = scmp.eq.s32.totalorder %s16, 0
    %p261 = por %p259, %p260
    %p262 = scmp.ne.s32.totalorder %s251, %s254
    %p263 = scmp.eq.s32.totalorder %s21, 1
    %p264 = por %p262, %p263
    %p265 = scmp.ne.s32.totalorder %s254, %s255
    %p266 = scmp.eq.s32.totalorder %s21, 0
    %p267 = por %p265, %p266
    %p268 = scmp.ne.s32.totalorder %s254, %s255
    %p269 = scmp.eq.s32.totalorder %s22, 1
    %p270 = por %p268, %p269
    %p272 = scmp.ne.s32.totalorder %s255, %s271
    %p273 = scmp.eq.s32.totalorder %s22, 0
    %p274 = por %p272, %p273
    %p275 = scmp.le.s32.totalorder 1, %s16
    %p276 = scmp.lt.s32.totalorder %s16, 3
    %p277 = pnand %p275, %p276
    %p278 = pneg %p277
    // Predicated region
    $region9: #{decoder_forward.9} parent=5 // pred_check
      _
    $region10: #{decoder_forward.9} parent=5 // pred_check_branch
      %280 = sbr.rel (%p277) target = $region12
    $region11: #{decoder_forward.9} parent=5 // pred_region
      %s281 = ssub.s32 %s16, 1
      // Predicated region
      $region13: #{decoder_forward.9} parent=11 // pred_check
        %p282 = pneg %p115
      $region14: #{decoder_forward.9} parent=11 // pred_check_branch
        %284 = sbr.rel (%p282) target = $region16
      $region15: #{decoder_forward.9} parent=11 // pred_region
        _
      $region16: #{decoder_forward.9} parent=11 // pred_fallthru
        _
      // Predicated region
      $region17: #{decoder_forward.9} parent=11 // pred_check
        %p285 = pneg %p136
      $region18: #{decoder_forward.9} parent=11 // pred_check_branch
        %287 = sbr.rel (%p285) target = $region20
      $region19: #{decoder_forward.9} parent=11 // pred_region
        _
      $region20: #{decoder_forward.9} parent=11 // pred_fallthru
        _
      // Predicated region
      $region21: #{decoder_forward.9} parent=11 // pred_check
        %p288 = pneg %p157
      $region22: #{decoder_forward.9} parent=11 // pred_check_branch
        %290 = sbr.rel (%p288) target = $region24
      $region23: #{decoder_forward.9} parent=11 // pred_region
        _
      $region24: #{decoder_forward.9} parent=11 // pred_fallthru
        _
      // Predicated region
      $region25: #{decoder_forward.9} parent=11 // pred_check
        %p291 = pneg %p178
      $region26: #{decoder_forward.9} parent=11 // pred_check_branch
        %293 = sbr.rel (%p291) target = $region28
      $region27: #{decoder_forward.9} parent=11 // pred_region
        _
      $region28: #{decoder_forward.9} parent=11 // pred_fallthru
        _
      // Predicated region
      $region29: #{decoder_forward.9} parent=11 // pred_check
        %p294 = pneg %p199
      $region30: #{decoder_forward.9} parent=11 // pred_check_branch
        %296 = sbr.rel (%p294) target = $region32
      $region31: #{decoder_forward.9} parent=11 // pred_region
        _
      $region32: #{decoder_forward.9} parent=11 // pred_fallthru
        _
      // Predicated region
      $region33: #{decoder_forward.9} parent=11 // pred_check
        %p297 = pneg %p220
      $region34: #{decoder_forward.9} parent=11 // pred_check_branch
        %299 = sbr.rel (%p297) target = $region36
      $region35: #{decoder_forward.9} parent=11 // pred_region
        _
      $region36: #{decoder_forward.9} parent=11 // pred_fallthru
        _
      // Predicated region
      $region37: #{decoder_forward.9} parent=11 // pred_check
        %p300 = pneg %p241
      $region38: #{decoder_forward.9} parent=11 // pred_check_branch
        %302 = sbr.rel (%p300) target = $region40
      $region39: #{decoder_forward.9} parent=11 // pred_region
        _
      $region40: #{decoder_forward.9} parent=11 // pred_fallthru
        _
    $region12: #{decoder_forward.9} parent=5 // pred_fallthru
      _
    %p303 = scmp.lt.s32.totalorder %s16, 2
    // Predicated region
    $region41: #{decoder_forward.9} parent=5 // pred_check
      %p304 = pneg %p303
    $region42: #{decoder_forward.9} parent=5 // pred_check_branch
      %306 = sbr.rel (%p304) target = $region44
    $region43: #{decoder_forward.9} parent=5 // pred_region
      // Predicated region
      $region45: #{decoder_forward.9} parent=43 // pred_check
        %p307 = pneg %p36
      $region46: #{decoder_forward.9} parent=43 // pred_check_branch
        %309 = sbr.rel (%p307) target = $region48
      $region47: #{decoder_forward.9} parent=43 // pred_region
        %p310 = scmp.lt.s32.totalorder %s16, 1
        %s311 = scalar_select %p310, %s16, 1
        %s312 = smul.addr %s311, 8
        %s313 = scalar_lea.vmem %s0, %s312
      $region48: #{decoder_forward.9} parent=43 // pred_fallthru
        _
      // Predicated region
      $region49: #{decoder_forward.9} parent=43 // pred_check
        %p314 = pneg %p62
      $region50: #{decoder_forward.9} parent=43 // pred_check_branch
        %316 = sbr.rel (%p314) target = $region52
      $region51: #{decoder_forward.9} parent=43 // pred_region
        %p317 = scmp.lt.s32.totalorder %s16, 1
        %s318 = scalar_select %p317, %s16, 1
        %s319 = smul.addr %s318, 8
        %s320 = scalar_lea.vmem %s1, %s319
      $region52: #{decoder_forward.9} parent=43 // pred_fallthru
        _
      // Predicated region
      $region53: #{decoder_forward.9} parent=43 // pred_check
        %p321 = pneg %p88
      $region54: #{decoder_forward.9} parent=43 // pred_check_branch
        %323 = sbr.rel (%p321) target = $region56
      $region55: #{decoder_forward.9} parent=43 // pred_region
        %p324 = scmp.lt.s32.totalorder %s16, 1
        %s325 = scalar_select %p324, %s16, 1
        %s326 = smul.addr %s325, 8
        %s327 = scalar_lea.vmem %s2, %s326
      $region56: #{decoder_forward.9} parent=43 // pred_fallthru
        _
    $region44: #{decoder_forward.9} parent=5 // pred_fallthru
      _
    %p328 = scmp.le.s32.totalorder 1, %s16
    %p329 = scmp.lt.s32.totalorder %s16, 3
    %p330 = pnand %p328, %p329
    %p331 = pneg %p330
    // Predicated region
    $region57: #{decoder_forward.9} parent=5 // pred_check
      _
    $region58: #{decoder_forward.9} parent=5 // pred_check_branch
      %333 = sbr.rel (%p330) target = $region60
    $region59: #{decoder_forward.9} parent=5 // pred_region
      %s334 = ssub.s32 %s16, 1
      %p335 = scmp.lt.s32.totalorder %s21, 1
      %s336 = scalar_select %p335, %s21, 1
      %s337 = smul.addr %s336, 8
      %s338 = scalar_lea.vmem %s0, %s337
      %p339 = pneg %p42
      %p340 = pneg %p39
      %p341 = scmp.lt.s32.totalorder %s21, 1
      %s342 = scalar_select %p341, %s21, 1
      %s343 = smul.addr %s342, 8
      %s344 = scalar_lea.vmem %s1, %s343
      %p345 = pneg %p68
      %p346 = pneg %p65
      %p347 = scmp.lt.s32.totalorder %s21, 1
      %s348 = scalar_select %p347, %s21, 1
      %s349 = smul.addr %s348, 8
      %s350 = scalar_lea.vmem %s2, %s349
      %p351 = pneg %p94
      %p352 = pneg %p91
      %p353 = pneg %p115
      %p354 = pneg %p112
      %p355 = pneg %p136
      %p356 = pneg %p133
      %p357 = pneg %p157
      %p358 = pneg %p154
      %p359 = pneg %p178
      %p360 = pneg %p175
      %p361 = pneg %p199
      %p362 = pneg %p196
      %p363 = pneg %p220
      %p364 = pneg %p217
      %p365 = pneg %p241
      %p366 = pneg %p238
      %p367 = pneg %p267
      %p368 = pneg %p264
      %p369 = scmp.lt.s32.totalorder %s21, 1
      %s370 = scalar_select %p369, %s21, 1
      %s371 = smul.addr %s370, 8
      %s372 = scalar_lea.vmem %s10, %s371
      %p373 = scmp.lt.s32.totalorder %s21, 1
      %s374 = scalar_select %p373, %s21, 1
      %s375 = smul.addr %s374, 8
      %s376 = scalar_lea.vmem %s0, %s375
      %p377 = scmp.lt.s32.totalorder %s21, 1
      %s378 = scalar_select %p377, %s21, 1
      %s379 = smul.addr %s378, 8
      %s380 = scalar_lea.vmem %s1, %s379
      %p381 = scmp.lt.s32.totalorder %s21, 1
      %s382 = scalar_select %p381, %s21, 1
      %s383 = smul.addr %s382, 8
      %s384 = scalar_lea.vmem %s2, %s383
      %p385 = scmp.lt.s32.totalorder %s21, 1
      %s386 = scalar_select %p385, %s21, 1
      %s387 = smul.addr %s386, 8
      %s388 = scalar_lea.vmem %s10, %s387
      %v390 = vld [vmem:[%s376] sm:$0xff]
      %v391 = vld [vmem:[%s380] sm:$0xff]
      %v392 = vld [vmem:[%s384] sm:$0xff]
      %v393 = vpack.c.bf16 %v390, %v390
      %v394 = vpack.c.bf16 %v391, %v391
      %v395 = vld [vmem:[%s3] sm:$0xf]
      %v396 = vld [vmem:[%s3 + $0x4] sm:$0xf]
      %v397 = vld [vmem:[%s3 + $0x8] sm:$0xf]
      %v398 = vld [vmem:[%s3 + $0xc] sm:$0xf]
      %v403 = vunpack.c.l.b16 %v395
      %v404 = vunpack.c.l.b16 %v396
      %v405 = vunpack.c.l.b16 %v397
      %v406 = vunpack.c.l.b16 %v398
      %v407 = vpack.c.b16 %v404, %v403
      %v408 = vpack.c.b16 %v406, %v405
      %vm411 = vcmask 261120
      %v413 = vsel %vm411, %v393, 0
      %415 = vmatprep.subr.bf16.mxu0 0
      %416 = vmatpush1.bf16.msra.mxu0 0
      %417 = vmatprep.subr.bf16.mxu0 0
      %418 = vmatpush1.bf16.msra.mxu0 0
      %419 = vmatprep.subr.bf16.mxu0 0
      %420 = vmatpush1.bf16.msra.mxu0 0
      %421 = vmatprep.subr.bf16.mxu0 0
      %422 = vmatpush1.bf16.msra.mxu0 0
      %423 = vmatprep.subr.bf16.mxu0 0
      %424 = vmatpush1.bf16.msra.mxu0 0
      %425 = vmatprep.subr.bf16.mxu0 0
      %426 = vmatpush1.bf16.msra.mxu0 0
      %427 = vmatprep.subr.bf16.mxu0 0
      %428 = vmatpush1.bf16.msra.mxu0 %v408
      %429 = vmatprep.subr.bf16.mxu0 0
      %430 = vmatpush1.bf16.msra.mxu0 %v407
      %431 = vmatprep.subr.bf16.mxu0 0
      %432 = vmatpush2.bf16.msra.mxu0 0
      %433 = vmatprep.subr.bf16.mxu0 0
      %434 = vmatpush2.bf16.msra.mxu0 0
      %435 = vmatprep.subr.bf16.mxu0 0
      %436 = vmatpush2.bf16.msra.mxu0 0
      %437 = vmatprep.subr.bf16.mxu0 0
      %438 = vmatpush2.bf16.msra.mxu0 0
      %439 = vmatprep.subr.bf16.mxu0 0
      %440 = vmatpush2.bf16.msra.mxu0 0
      %441 = vmatprep.subr.bf16.mxu0 0
      %442 = vmatpush2.bf16.msra.mxu0 0
      %443 = vmatprep.subr.bf16.mxu0 0
      %444 = vmatpush2.bf16.msra.mxu0 0
      %445 = vmatprep.subr.bf16.mxu0 0
      %446 = vmatpush2.bf16.msra.mxu0 0
      %447 = vmatprep.mubr.bf16.mxu0 0
      %448 = vmatmul.mubr.bf16.gmra.mxu0 %v413
      %v449 = vpop.f32.mrf.mxu0
      %v450 = vadd.f32 0.0, %v449
      %v451 = vpop.f32.mrf.mxu0
      %v452 = vpop.f32.mrf.mxu0
      %v453 = vpop.f32.mrf.mxu0
      %454 = vdwg.mxu0
      %v455 = vld [vmem:[%s4] sm:$0xf]
      %v456 = vld [vmem:[%s4 + $0x4] sm:$0xf]
      %v457 = vld [vmem:[%s4 + $0x8] sm:$0xf]
      %v458 = vld [vmem:[%s4 + $0xc] sm:$0xf]
      %v463 = vunpack.c.l.b16 %v455
      %v464 = vunpack.c.l.b16 %v456
      %v465 = vunpack.c.l.b16 %v457
      %v466 = vunpack.c.l.b16 %v458
      %v467 = vpack.c.b16 %v464, %v463
      %v468 = vpack.c.b16 %v466, %v465
      %v472 = vsel %vm411, %v394, 0
      %474 = vmatprep.subr.bf16.mxu0 0
      %475 = vmatpush1.bf16.msra.mxu0 0
      %476 = vmatprep.subr.bf16.mxu0 0
      %477 = vmatpush1.bf16.msra.mxu0 0
      %478 = vmatprep.subr.bf16.mxu0 0
      %479 = vmatpush1.bf16.msra.mxu0 0
      %480 = vmatprep.subr.bf16.mxu0 0
      %481 = vmatpush1.bf16.msra.mxu0 0
      %482 = vmatprep.subr.bf16.mxu0 0
      %483 = vmatpush1.bf16.msra.mxu0 0
      %484 = vmatprep.subr.bf16.mxu0 0
      %485 = vmatpush1.bf16.msra.mxu0 0
      %486 = vmatprep.subr.bf16.mxu0 0
      %487 = vmatpush1.bf16.msra.mxu0 %v468
      %488 = vmatprep.subr.bf16.mxu0 0
      %489 = vmatpush1.bf16.msra.mxu0 %v467
      %490 = vmatprep.subr.bf16.mxu0 0
      %491 = vmatpush2.bf16.msra.mxu0 0
      %492 = vmatprep.subr.bf16.mxu0 0
      %493 = vmatpush2.bf16.msra.mxu0 0
      %494 = vmatprep.subr.bf16.mxu0 0
      %495 = vmatpush2.bf16.msra.mxu0 0
      %496 = vmatprep.subr.bf16.mxu0 0
      %497 = vmatpush2.bf16.msra.mxu0 0
      %498 = vmatprep.subr.bf16.mxu0 0
      %499 = vmatpush2.bf16.msra.mxu0 0
      %500 = vmatprep.subr.bf16.mxu0 0
      %501 = vmatpush2.bf16.msra.mxu0 0
      %502 = vmatprep.subr.bf16.mxu0 0
      %503 = vmatpush2.bf16.msra.mxu0 0
      %504 = vmatprep.subr.bf16.mxu0 0
      %505 = vmatpush2.bf16.msra.mxu0 0
      %506 = vmatprep.mubr.bf16.mxu0 0
      %507 = vmatmul.mubr.bf16.gmra.mxu0 %v472
      %v508 = vpop.f32.mrf.mxu0
      %v509 = vadd.f32 0.0, %v508
      %v510 = vpop.f32.mrf.mxu0
      %v511 = vpop.f32.mrf.mxu0
      %v512 = vpop.f32.mrf.mxu0
      %513 = vdwg.mxu0
      %v514 = vld [vmem:[%s5] sm:$0xf]
      %v515 = vld [vmem:[%s5 + $0x4] sm:$0xf]
      %v516 = vld [vmem:[%s5 + $0x8] sm:$0xf]
      %v517 = vld [vmem:[%s5 + $0xc] sm:$0xf]
      %v522 = vunpack.c.l.b16 %v514
      %v523 = vunpack.c.l.b16 %v515
      %v524 = vunpack.c.l.b16 %v516
      %v525 = vunpack.c.l.b16 %v517
      %v526 = vpack.c.b16 %v523, %v522
      %v527 = vpack.c.b16 %v525, %v524
      %530 = vmatprep.subr.bf16.mxu0 0
      %531 = vmatpush1.bf16.msra.mxu0 0
      %532 = vmatprep.subr.bf16.mxu0 0
      %533 = vmatpush1.bf16.msra.mxu0 0
      %534 = vmatprep.subr.bf16.mxu0 0
      %535 = vmatpush1.bf16.msra.mxu0 0
      %536 = vmatprep.subr.bf16.mxu0 0
      %537 = vmatpush1.bf16.msra.mxu0 0
      %538 = vmatprep.subr.bf16.mxu0 0
      %539 = vmatpush1.bf16.msra.mxu0 0
      %540 = vmatprep.subr.bf16.mxu0 0
      %541 = vmatpush1.bf16.msra.mxu0 0
      %542 = vmatprep.subr.bf16.mxu0 0
      %543 = vmatpush1.bf16.msra.mxu0 %v527
      %544 = vmatprep.subr.bf16.mxu0 0
      %545 = vmatpush1.bf16.msra.mxu0 %v526
      %546 = vmatprep.subr.bf16.mxu0 0
      %547 = vmatpush2.bf16.msra.mxu0 0
      %548 = vmatprep.subr.bf16.mxu0 0
      %549 = vmatpush2.bf16.msra.mxu0 0
      %550 = vmatprep.subr.bf16.mxu0 0
      %551 = vmatpush2.bf16.msra.mxu0 0
      %552 = vmatprep.subr.bf16.mxu0 0
      %553 = vmatpush2.bf16.msra.mxu0 0
      %554 = vmatprep.subr.bf16.mxu0 0
      %555 = vmatpush2.bf16.msra.mxu0 0
      %556 = vmatprep.subr.bf16.mxu0 0
      %557 = vmatpush2.bf16.msra.mxu0 0
      %558 = vmatprep.subr.bf16.mxu0 0
      %559 = vmatpush2.bf16.msra.mxu0 0
      %560 = vmatprep.subr.bf16.mxu0 0
      %561 = vmatpush2.bf16.msra.mxu0 0
      %562 = vmatprep.mubr.bf16.mxu0 0
      %563 = vmatmul.mubr.bf16.gmra.mxu0 %v472
      %v564 = vpop.f32.mrf.mxu0
      %v565 = vadd.f32 0.0, %v564
      %v566 = vpop.f32.mrf.mxu0
      %v567 = vpop.f32.mrf.mxu0
      %v568 = vpop.f32.mrf.mxu0
      %569 = vdwg.mxu0
      %vm570 = vcmask 64512
      %v572 = vsel %vm570, %v450, 0
      %v575 = vsel %vm570, %v509, 0
      %577 = vmatprep.subr.mxu0 0.0
      %578 = vmatpush1.xpose.msra.mxu0 0.0
      %579 = vmatprep.subr.mxu0 0.0
      %580 = vmatpush1.xpose.msra.mxu0 0.0
      %581 = vmatprep.subr.mxu0 0.0
      %582 = vmatpush1.xpose.msra.mxu0 0.0
      %583 = vmatprep.subr.mxu0 0.0
      %584 = vmatpush1.xpose.msra.mxu0 0.0
      %585 = vmatprep.subr.mxu0 0.0
      %586 = vmatpush1.xpose.msra.mxu0 0.0
      %587 = vmatprep.subr.mxu0 0.0
      %588 = vmatpush1.xpose.msra.mxu0 0.0
      %589 = vmatprep.subr.mxu0 0.0
      %590 = vmatpush1.xpose.msra.mxu0 0.0
      %591 = vmatprep.subr.mxu0 0.0
      %592 = vmatpush1.xpose.msra.mxu0 0.0
      %593 = vmatprep.subr.mxu0 0.0
      %594 = vmatpush1.xpose.msra.mxu0 0.0
      %595 = vmatprep.subr.mxu0 0.0
      %596 = vmatpush1.xpose.msra.mxu0 0.0
      %597 = vmatprep.subr.mxu0 0.0
      %598 = vmatpush1.xpose.msra.mxu0 0.0
      %599 = vmatprep.subr.mxu0 0.0
      %600 = vmatpush1.xpose.msra.mxu0 0.0
      %601 = vmatprep.subr.mxu0 0.0
      %602 = vmatpush1.xpose.msra.mxu0 0.0
      %603 = vmatprep.subr.mxu0 0.0
      %604 = vmatpush1.xpose.msra.mxu0 0.0
      %605 = vmatprep.subr.mxu0 0.0
      %606 = vmatpush1.xpose.msra.mxu0 0.0
      %607 = vmatprep.subr.mxu0 0.0
      %608 = vmatpush1.xpose.msra.mxu0 %v575
      %609 = vmatprep.subr.mxu0 0.0
      %610 = vmatpush2.xpose.msra.mxu0 0.0
      %611 = vmatprep.subr.mxu0 0.0
      %612 = vmatpush2.xpose.msra.mxu0 0.0
      %613 = vmatprep.subr.mxu0 0.0
      %614 = vmatpush2.xpose.msra.mxu0 0.0
      %615 = vmatprep.subr.mxu0 0.0
      %616 = vmatpush2.xpose.msra.mxu0 0.0
      %617 = vmatprep.subr.mxu0 0.0
      %618 = vmatpush2.xpose.msra.mxu0 0.0
      %619 = vmatprep.subr.mxu0 0.0
      %620 = vmatpush2.xpose.msra.mxu0 0.0
      %621 = vmatprep.subr.mxu0 0.0
      %622 = vmatpush2.xpose.msra.mxu0 0.0
      %623 = vmatprep.subr.mxu0 0.0
      %624 = vmatpush2.xpose.msra.mxu0 0.0
      %625 = vmatprep.subr.mxu0 0.0
      %626 = vmatpush2.xpose.msra.mxu0 0.0
      %627 = vmatprep.subr.mxu0 0.0
      %628 = vmatpush2.xpose.msra.mxu0 0.0
      %629 = vmatprep.subr.mxu0 0.0
      %630 = vmatpush2.xpose.msra.mxu0 0.0
      %631 = vmatprep.subr.mxu0 0.0
      %632 = vmatpush2.xpose.msra.mxu0 0.0
      %633 = vmatprep.subr.mxu0 0.0
      %634 = vmatpush2.xpose.msra.mxu0 0.0
      %635 = vmatprep.subr.mxu0 0.0
      %636 = vmatpush2.xpose.msra.mxu0 0.0
      %637 = vmatprep.subr.mxu0 0.0
      %638 = vmatpush2.xpose.msra.mxu0 0.0
      %639 = vmatprep.subr.mxu0 0.0
      %640 = vmatpush2.xpose.msra.mxu0 0.0
      %641 = vmatprep.mubr.f32.mxu0 0.0
      %642 = vmatmul.mubr.f32.gmra.mxu0 %v572
      %v643 = vpop.f32.mrf.mxu0
      %v644 = vadd.f32 0.0, %v643
      %v645 = vpop.f32.mrf.mxu0
      %646 = vdwg.mxu0
      %vm647 = vcmp.eq.f32.partialorder %v392, 0.0
      %v648 = vsel %vm647, -1e+20, %v644
      %v649 = vmul.f32 %v648, 0.17677669
      %v650 = vsel %vm570, %v649, -inf
      %651 = vmax.xlane.f32.xlu0 %v650
      %v652 = vpop.xlane.xlu0 %651
      %v653 = vsub.f32 %v649, %v652
      %v654 = vmul.f32 %v653, 1.442695
      %v655 = vpow.pop %v654
      %v656 = vsel %vm570, %v655, 0.0
      %657 = vadd.xlane.f32.xlu0 %v656
      %v658 = vpop.xlane.xlu0 %657
      %v659 = vrcp.pop %v658
      %v660 = vmul.f32 %v655, %v659
      %v662 = vsel %vm570, %v660, 0
      %664 = vmatprep.subr.mxu0 0.0
      %665 = vmatpush1.msra.mxu0 0.0
      %666 = vmatprep.subr.mxu0 0.0
      %667 = vmatpush1.msra.mxu0 0.0
      %668 = vmatprep.subr.mxu0 0.0
      %669 = vmatpush1.msra.mxu0 0.0
      %670 = vmatprep.subr.mxu0 0.0
      %671 = vmatpush1.msra.mxu0 0.0
      %672 = vmatprep.subr.mxu0 0.0
      %673 = vmatpush1.msra.mxu0 0.0
      %674 = vmatprep.subr.mxu0 0.0
      %675 = vmatpush1.msra.mxu0 0.0
      %676 = vmatprep.subr.mxu0 0.0
      %677 = vmatpush1.msra.mxu0 0.0
      %678 = vmatprep.subr.mxu0 0.0
      %679 = vmatpush1.msra.mxu0 0.0
      %680 = vmatprep.subr.mxu0 0.0
      %681 = vmatpush1.msra.mxu0 0.0
      %682 = vmatprep.subr.mxu0 0.0
      %683 = vmatpush1.msra.mxu0 0.0
      %684 = vmatprep.subr.mxu0 0.0
      %685 = vmatpush1.msra.mxu0 0.0
      %686 = vmatprep.subr.mxu0 0.0
      %687 = vmatpush1.msra.mxu0 0.0
      %688 = vmatprep.subr.mxu0 0.0
      %689 = vmatpush1.msra.mxu0 0.0
      %690 = vmatprep.subr.mxu0 0.0
      %691 = vmatpush1.msra.mxu0 0.0
      %692 = vmatprep.subr.mxu0 0.0
      %693 = vmatpush1.msra.mxu0 0.0
      %694 = vmatprep.subr.mxu0 0.0
      %695 = vmatpush1.msra.mxu0 %v565
      %696 = vmatprep.subr.mxu0 0.0
      %697 = vmatpush2.msra.mxu0 0.0
      %698 = vmatprep.subr.mxu0 0.0
      %699 = vmatpush2.msra.mxu0 0.0
      %700 = vmatprep.subr.mxu0 0.0
      %701 = vmatpush2.msra.mxu0 0.0
      %702 = vmatprep.subr.mxu0 0.0
      %703 = vmatpush2.msra.mxu0 0.0
      %704 = vmatprep.subr.mxu0 0.0
      %705 = vmatpush2.msra.mxu0 0.0
      %706 = vmatprep.subr.mxu0 0.0
      %707 = vmatpush2.msra.mxu0 0.0
      %708 = vmatprep.subr.mxu0 0.0
      %709 = vmatpush2.msra.mxu0 0.0
      %710 = vmatprep.subr.mxu0 0.0
      %711 = vmatpush2.msra.mxu0 0.0
      %712 = vmatprep.subr.mxu0 0.0
      %713 = vmatpush2.msra.mxu0 0.0
      %714 = vmatprep.subr.mxu0 0.0
      %715 = vmatpush2.msra.mxu0 0.0
      %716 = vmatprep.subr.mxu0 0.0
      %717 = vmatpush2.msra.mxu0 0.0
      %718 = vmatprep.subr.mxu0 0.0
      %719 = vmatpush2.msra.mxu0 0.0
      %720 = vmatprep.subr.mxu0 0.0
      %721 = vmatpush2.msra.mxu0 0.0
      %722 = vmatprep.subr.mxu0 0.0
      %723 = vmatpush2.msra.mxu0 0.0
      %724 = vmatprep.subr.mxu0 0.0
      %725 = vmatpush2.msra.mxu0 0.0
      %726 = vmatprep.subr.mxu0 0.0
      %727 = vmatpush2.msra.mxu0 0.0
      %728 = vmatprep.mubr.f32.mxu0 0.0
      %729 = vmatmul.mubr.f32.gmra.mxu0 %v662
      %v730 = vpop.f32.mrf.mxu0
      %v731 = vadd.f32 0.0, %v730
      %v732 = vpop.f32.mrf.mxu0
      %733 = vdwg.mxu0
      %734 = vrot.lane.b32.xlu0 %v450, 120
      %v735 = vpop.permute.xlu0 %734
      %736 = vrot.lane.b32.xlu0 %v509, 120
      %v737 = vpop.permute.xlu0 %736
      %v738 = vsel %vm570, %v735, 0
      %v740 = vsel %vm570, %v737, 0
      %742 = vmatprep.subr.mxu0 0.0
      %743 = vmatpush1.xpose.msra.mxu0 0.0
      %744 = vmatprep.subr.mxu0 0.0
      %745 = vmatpush1.xpose.msra.mxu0 0.0
      %746 = vmatprep.subr.mxu0 0.0
      %747 = vmatpush1.xpose.msra.mxu0 0.0
      %748 = vmatprep.subr.mxu0 0.0
      %749 = vmatpush1.xpose.msra.mxu0 0.0
      %750 = vmatprep.subr.mxu0 0.0
      %751 = vmatpush1.xpose.msra.mxu0 0.0
      %752 = vmatprep.subr.mxu0 0.0
      %753 = vmatpush1.xpose.msra.mxu0 0.0
      %754 = vmatprep.subr.mxu0 0.0
      %755 = vmatpush1.xpose.msra.mxu0 0.0
      %756 = vmatprep.subr.mxu0 0.0
      %757 = vmatpush1.xpose.msra.mxu0 0.0
      %758 = vmatprep.subr.mxu0 0.0
      %759 = vmatpush1.xpose.msra.mxu0 0.0
      %760 = vmatprep.subr.mxu0 0.0
      %761 = vmatpush1.xpose.msra.mxu0 0.0
      %762 = vmatprep.subr.mxu0 0.0
      %763 = vmatpush1.xpose.msra.mxu0 0.0
      %764 = vmatprep.subr.mxu0 0.0
      %765 = vmatpush1.xpose.msra.mxu0 0.0
      %766 = vmatprep.subr.mxu0 0.0
      %767 = vmatpush1.xpose.msra.mxu0 0.0
      %768 = vmatprep.subr.mxu0 0.0
      %769 = vmatpush1.xpose.msra.mxu0 0.0
      %770 = vmatprep.subr.mxu0 0.0
      %771 = vmatpush1.xpose.msra.mxu0 0.0
      %772 = vmatprep.subr.mxu0 0.0
      %773 = vmatpush1.xpose.msra.mxu0 %v740
      %774 = vmatprep.subr.mxu0 0.0
      %775 = vmatpush2.xpose.msra.mxu0 0.0
      %776 = vmatprep.subr.mxu0 0.0
      %777 = vmatpush2.xpose.msra.mxu0 0.0
      %778 = vmatprep.subr.mxu0 0.0
      %779 = vmatpush2.xpose.msra.mxu0 0.0
      %780 = vmatprep.subr.mxu0 0.0
      %781 = vmatpush2.xpose.msra.mxu0 0.0
      %782 = vmatprep.subr.mxu0 0.0
      %783 = vmatpush2.xpose.msra.mxu0 0.0
      %784 = vmatprep.subr.mxu0 0.0
      %785 = vmatpush2.xpose.msra.mxu0 0.0
      %786 = vmatprep.subr.mxu0 0.0
      %787 = vmatpush2.xpose.msra.mxu0 0.0
      %788 = vmatprep.subr.mxu0 0.0
      %789 = vmatpush2.xpose.msra.mxu0 0.0
      %790 = vmatprep.subr.mxu0 0.0
      %791 = vmatpush2.xpose.msra.mxu0 0.0
      %792 = vmatprep.subr.mxu0 0.0
      %793 = vmatpush2.xpose.msra.mxu0 0.0
      %794 = vmatprep.subr.mxu0 0.0
      %795 = vmatpush2.xpose.msra.mxu0 0.0
      %796 = vmatprep.subr.mxu0 0.0
      %797 = vmatpush2.xpose.msra.mxu0 0.0
      %798 = vmatprep.subr.mxu0 0.0
      %799 = vmatpush2.xpose.msra.mxu0 0.0
      %800 = vmatprep.subr.mxu0 0.0
      %801 = vmatpush2.xpose.msra.mxu0 0.0
      %802 = vmatprep.subr.mxu0 0.0
      %803 = vmatpush2.xpose.msra.mxu0 0.0
      %804 = vmatprep.subr.mxu0 0.0
      %805 = vmatpush2.xpose.msra.mxu0 0.0
      %806 = vmatprep.mubr.f32.mxu0 0.0
      %807 = vmatmul.mubr.f32.gmra.mxu0 %v738
      %v808 = vpop.f32.mrf.mxu0
      %v809 = vadd.f32 0.0, %v808
      %v810 = vpop.f32.mrf.mxu0
      %811 = vdwg.mxu0
      %v812 = vsel %vm647, -1e+20, %v809
      %v813 = vmul.f32 %v812, 0.17677669
      %v814 = vsel %vm570, %v813, -inf
      %815 = vmax.xlane.f32.xlu0 %v814
      %v816 = vpop.xlane.xlu0 %815
      %v817 = vsub.f32 %v813, %v816
      %v818 = vmul.f32 %v817, 1.442695
      %v819 = vpow.pop %v818
      %v820 = vsel %vm570, %v819, 0.0
      %821 = vadd.xlane.f32.xlu0 %v820
      %v822 = vpop.xlane.xlu0 %821
      %v823 = vrcp.pop %v822
      %v824 = vmul.f32 %v819, %v823
      %826 = vrot.lane.b32.xlu0 %v565, 120
      %v827 = vpop.permute.xlu0 %826
      %v830 = vsel %vm570, %v824, 0
      %832 = vmatprep.subr.mxu0 0.0
      %833 = vmatpush1.msra.mxu0 0.0
      %834 = vmatprep.subr.mxu0 0.0
      %835 = vmatpush1.msra.mxu0 0.0
      %836 = vmatprep.subr.mxu0 0.0
      %837 = vmatpush1.msra.mxu0 0.0
      %838 = vmatprep.subr.mxu0 0.0
      %839 = vmatpush1.msra.mxu0 0.0
      %840 = vmatprep.subr.mxu0 0.0
      %841 = vmatpush1.msra.mxu0 0.0
      %842 = vmatprep.subr.mxu0 0.0
      %843 = vmatpush1.msra.mxu0 0.0
      %844 = vmatprep.subr.mxu0 0.0
      %845 = vmatpush1.msra.mxu0 0.0
      %846 = vmatprep.subr.mxu0 0.0
      %847 = vmatpush1.msra.mxu0 0.0
      %848 = vmatprep.subr.mxu0 0.0
      %849 = vmatpush1.msra.mxu0 0.0
      %850 = vmatprep.subr.mxu0 0.0
      %851 = vmatpush1.msra.mxu0 0.0
      %852 = vmatprep.subr.mxu0 0.0
      %853 = vmatpush1.msra.mxu0 0.0
      %854 = vmatprep.subr.mxu0 0.0
      %855 = vmatpush1.msra.mxu0 0.0
      %856 = vmatprep.subr.mxu0 0.0
      %857 = vmatpush1.msra.mxu0 0.0
      %858 = vmatprep.subr.mxu0 0.0
      %859 = vmatpush1.msra.mxu0 0.0
      %860 = vmatprep.subr.mxu0 0.0
      %861 = vmatpush1.msra.mxu0 0.0
      %862 = vmatprep.subr.mxu0 0.0
      %863 = vmatpush1.msra.mxu0 %v827
      %864 = vmatprep.subr.mxu0 0.0
      %865 = vmatpush2.msra.mxu0 0.0
      %866 = vmatprep.subr.mxu0 0.0
      %867 = vmatpush2.msra.mxu0 0.0
      %868 = vmatprep.subr.mxu0 0.0
      %869 = vmatpush2.msra.mxu0 0.0
      %870 = vmatprep.subr.mxu0 0.0
      %871 = vmatpush2.msra.mxu0 0.0
      %872 = vmatprep.subr.mxu0 0.0
      %873 = vmatpush2.msra.mxu0 0.0
      %874 = vmatprep.subr.mxu0 0.0
      %875 = vmatpush2.msra.mxu0 0.0
      %876 = vmatprep.subr.mxu0 0.0
      %877 = vmatpush2.msra.mxu0 0.0
      %878 = vmatprep.subr.mxu0 0.0
      %879 = vmatpush2.msra.mxu0 0.0
      %880 = vmatprep.subr.mxu0 0.0
      %881 = vmatpush2.msra.mxu0 0.0
      %882 = vmatprep.subr.mxu0 0.0
      %883 = vmatpush2.msra.mxu0 0.0
      %884 = vmatprep.subr.mxu0 0.0
      %885 = vmatpush2.msra.mxu0 0.0
      %886 = vmatprep.subr.mxu0 0.0
      %887 = vmatpush2.msra.mxu0 0.0
      %888 = vmatprep.subr.mxu0 0.0
      %889 = vmatpush2.msra.mxu0 0.0
      %890 = vmatprep.subr.mxu0 0.0
      %891 = vmatpush2.msra.mxu0 0.0
      %892 = vmatprep.subr.mxu0 0.0
      %893 = vmatpush2.msra.mxu0 0.0
      %894 = vmatprep.subr.mxu0 0.0
      %895 = vmatpush2.msra.mxu0 0.0
      %896 = vmatprep.mubr.f32.mxu0 0.0
      %897 = vmatmul.mubr.f32.gmra.mxu0 %v830
      %v898 = vpop.f32.mrf.mxu0
      %v899 = vadd.f32 0.0, %v898
      %v900 = vpop.f32.mrf.mxu0
      %901 = vdwg.mxu0
      %902 = vrot.lane.b32.xlu0 %v450, 112
      %v903 = vpop.permute.xlu0 %902
      %904 = vrot.lane.b32.xlu0 %v509, 112
      %v905 = vpop.permute.xlu0 %904
      %v906 = vsel %vm570, %v903, 0
      %v908 = vsel %vm570, %v905, 0
      %910 = vmatprep.subr.mxu0 0.0
      %911 = vmatpush1.xpose.msra.mxu0 0.0
      %912 = vmatprep.subr.mxu0 0.0
      %913 = vmatpush1.xpose.msra.mxu0 0.0
      %914 = vmatprep.subr.mxu0 0.0
      %915 = vmatpush1.xpose.msra.mxu0 0.0
      %916 = vmatprep.subr.mxu0 0.0
      %917 = vmatpush1.xpose.msra.mxu0 0.0
      %918 = vmatprep.subr.mxu0 0.0
      %919 = vmatpush1.xpose.msra.mxu0 0.0
      %920 = vmatprep.subr.mxu0 0.0
      %921 = vmatpush1.xpose.msra.mxu0 0.0
      %922 = vmatprep.subr.mxu0 0.0
      %923 = vmatpush1.xpose.msra.mxu0 0.0
      %924 = vmatprep.subr.mxu0 0.0
      %925 = vmatpush1.xpose.msra.mxu0 0.0
      %926 = vmatprep.subr.mxu0 0.0
      %927 = vmatpush1.xpose.msra.mxu0 0.0
      %928 = vmatprep.subr.mxu0 0.0
      %929 = vmatpush1.xpose.msra.mxu0 0.0
      %930 = vmatprep.subr.mxu0 0.0
      %931 = vmatpush1.xpose.msra.mxu0 0.0
      %932 = vmatprep.subr.mxu0 0.0
      %933 = vmatpush1.xpose.msra.mxu0 0.0
      %934 = vmatprep.subr.mxu0 0.0
      %935 = vmatpush1.xpose.msra.mxu0 0.0
      %936 = vmatprep.subr.mxu0 0.0
      %937 = vmatpush1.xpose.msra.mxu0 0.0
      %938 = vmatprep.subr.mxu0 0.0
      %939 = vmatpush1.xpose.msra.mxu0 0.0
      %940 = vmatprep.subr.mxu0 0.0
      %941 = vmatpush1.xpose.msra.mxu0 %v908
      %942 = vmatprep.subr.mxu0 0.0
      %943 = vmatpush2.xpose.msra.mxu0 0.0
      %944 = vmatprep.subr.mxu0 0.0
      %945 = vmatpush2.xpose.msra.mxu0 0.0
      %946 = vmatprep.subr.mxu0 0.0
      %947 = vmatpush2.xpose.msra.mxu0 0.0
      %948 = vmatprep.subr.mxu0 0.0
      %949 = vmatpush2.xpose.msra.mxu0 0.0
      %950 = vmatprep.subr.mxu0 0.0
      %951 = vmatpush2.xpose.msra.mxu0 0.0
      %952 = vmatprep.subr.mxu0 0.0
      %953 = vmatpush2.xpose.msra.mxu0 0.0
      %954 = vmatprep.subr.mxu0 0.0
      %955 = vmatpush2.xpose.msra.mxu0 0.0
      %956 = vmatprep.subr.mxu0 0.0
      %957 = vmatpush2.xpose.msra.mxu0 0.0
      %958 = vmatprep.subr.mxu0 0.0
      %959 = vmatpush2.xpose.msra.mxu0 0.0
      %960 = vmatprep.subr.mxu0 0.0
      %961 = vmatpush2.xpose.msra.mxu0 0.0
      %962 = vmatprep.subr.mxu0 0.0
      %963 = vmatpush2.xpose.msra.mxu0 0.0
      %964 = vmatprep.subr.mxu0 0.0
      %965 = vmatpush2.xpose.msra.mxu0 0.0
      %966 = vmatprep.subr.mxu0 0.0
      %967 = vmatpush2.xpose.msra.mxu0 0.0
      %968 = vmatprep.subr.mxu0 0.0
      %969 = vmatpush2.xpose.msra.mxu0 0.0
      %970 = vmatprep.subr.mxu0 0.0
      %971 = vmatpush2.xpose.msra.mxu0 0.0
      %972 = vmatprep.subr.mxu0 0.0
      %973 = vmatpush2.xpose.msra.mxu0 0.0
      %974 = vmatprep.mubr.f32.mxu0 0.0
      %975 = vmatmul.mubr.f32.gmra.mxu0 %v906
      %v976 = vpop.f32.mrf.mxu0
      %v977 = vadd.f32 0.0, %v976
      %v978 = vpop.f32.mrf.mxu0
      %979 = vdwg.mxu0
      %v980 = vsel %vm647, -1e+20, %v977
      %v981 = vmul.f32 %v980, 0.17677669
      %v982 = vsel %vm570, %v981, -inf
      %983 = vmax.xlane.f32.xlu0 %v982
      %v984 = vpop.xlane.xlu0 %983
      %v985 = vsub.f32 %v981, %v984
      %v986 = vmul.f32 %v985, 1.442695
      %v987 = vpow.pop %v986
      %v988 = vsel %vm570, %v987, 0.0
      %989 = vadd.xlane.f32.xlu0 %v988
      %v990 = vpop.xlane.xlu0 %989
      %v991 = vrcp.pop %v990
      %v992 = vmul.f32 %v987, %v991
      %993 = vrot.lane.b32.xlu0 %v565, 112
      %v994 = vpop.permute.xlu0 %993
      %v997 = vsel %vm570, %v992, 0
      %999 = vmatprep.subr.mxu0 0.0
      %1000 = vmatpush1.msra.mxu0 0.0
      %1001 = vmatprep.subr.mxu0 0.0
      %1002 = vmatpush1.msra.mxu0 0.0
      %1003 = vmatprep.subr.mxu0 0.0
      %1004 = vmatpush1.msra.mxu0 0.0
      %1005 = vmatprep.subr.mxu0 0.0
      %1006 = vmatpush1.msra.mxu0 0.0
      %1007 = vmatprep.subr.mxu0 0.0
      %1008 = vmatpush1.msra.mxu0 0.0
      %1009 = vmatprep.subr.mxu0 0.0
      %1010 = vmatpush1.msra.mxu0 0.0
      %1011 = vmatprep.subr.mxu0 0.0
      %1012 = vmatpush1.msra.mxu0 0.0
      %1013 = vmatprep.subr.mxu0 0.0
      %1014 = vmatpush1.msra.mxu0 0.0
      %1015 = vmatprep.subr.mxu0 0.0
      %1016 = vmatpush1.msra.mxu0 0.0
      %1017 = vmatprep.subr.mxu0 0.0
      %1018 = vmatpush1.msra.mxu0 0.0
      %1019 = vmatprep.subr.mxu0 0.0
      %1020 = vmatpush1.msra.mxu0 0.0
      %1021 = vmatprep.subr.mxu0 0.0
      %1022 = vmatpush1.msra.mxu0 0.0
      %1023 = vmatprep.subr.mxu0 0.0
      %1024 = vmatpush1.msra.mxu0 0.0
      %1025 = vmatprep.subr.mxu0 0.0
      %1026 = vmatpush1.msra.mxu0 0.0
      %1027 = vmatprep.subr.mxu0 0.0
      %1028 = vmatpush1.msra.mxu0 0.0
      %1029 = vmatprep.subr.mxu0 0.0
      %1030 = vmatpush1.msra.mxu0 %v994
      %1031 = vmatprep.subr.mxu0 0.0
      %1032 = vmatpush2.msra.mxu0 0.0
      %1033 = vmatprep.subr.mxu0 0.0
      %1034 = vmatpush2.msra.mxu0 0.0
      %1035 = vmatprep.subr.mxu0 0.0
      %1036 = vmatpush2.msra.mxu0 0.0
      %1037 = vmatprep.subr.mxu0 0.0
      %1038 = vmatpush2.msra.mxu0 0.0
      %1039 = vmatprep.subr.mxu0 0.0
      %1040 = vmatpush2.msra.mxu0 0.0
      %1041 = vmatprep.subr.mxu0 0.0
      %1042 = vmatpush2.msra.mxu0 0.0
      %1043 = vmatprep.subr.mxu0 0.0
      %1044 = vmatpush2.msra.mxu0 0.0
      %1045 = vmatprep.subr.mxu0 0.0
      %1046 = vmatpush2.msra.mxu0 0.0
      %1047 = vmatprep.subr.mxu0 0.0
      %1048 = vmatpush2.msra.mxu0 0.0
      %1049 = vmatprep.subr.mxu0 0.0
      %1050 = vmatpush2.msra.mxu0 0.0
      %1051 = vmatprep.subr.mxu0 0.0
      %1052 = vmatpush2.msra.mxu0 0.0
      %1053 = vmatprep.subr.mxu0 0.0
      %1054 = vmatpush2.msra.mxu0 0.0
      %1055 = vmatprep.subr.mxu0 0.0
      %1056 = vmatpush2.msra.mxu0 0.0
      %1057 = vmatprep.subr.mxu0 0.0
      %1058 = vmatpush2.msra.mxu0 0.0
      %1059 = vmatprep.subr.mxu0 0.0
      %1060 = vmatpush2.msra.mxu0 0.0
      %1061 = vmatprep.subr.mxu0 0.0
      %1062 = vmatpush2.msra.mxu0 0.0
      %1063 = vmatprep.mubr.f32.mxu0 0.0
      %1064 = vmatmul.mubr.f32.gmra.mxu0 %v997
      %v1065 = vpop.f32.mrf.mxu0
      %v1066 = vadd.f32 0.0, %v1065
      %v1067 = vpop.f32.mrf.mxu0
      %1068 = vdwg.mxu0
      %1069 = vrot.lane.b32.xlu0 %v450, 104
      %v1070 = vpop.permute.xlu0 %1069
      %1071 = vrot.lane.b32.xlu0 %v509, 104
      %v1072 = vpop.permute.xlu0 %1071
      %v1073 = vsel %vm570, %v1070, 0
      %v1075 = vsel %vm570, %v1072, 0
      %1077 = vmatprep.subr.mxu0 0.0
      %1078 = vmatpush1.xpose.msra.mxu0 0.0
      %1079 = vmatprep.subr.mxu0 0.0
      %1080 = vmatpush1.xpose.msra.mxu0 0.0
      %1081 = vmatprep.subr.mxu0 0.0
      %1082 = vmatpush1.xpose.msra.mxu0 0.0
      %1083 = vmatprep.subr.mxu0 0.0
      %1084 = vmatpush1.xpose.msra.mxu0 0.0
      %1085 = vmatprep.subr.mxu0 0.0
      %1086 = vmatpush1.xpose.msra.mxu0 0.0
      %1087 = vmatprep.subr.mxu0 0.0
      %1088 = vmatpush1.xpose.msra.mxu0 0.0
      %1089 = vmatprep.subr.mxu0 0.0
      %1090 = vmatpush1.xpose.msra.mxu0 0.0
      %1091 = vmatprep.subr.mxu0 0.0
      %1092 = vmatpush1.xpose.msra.mxu0 0.0
      %1093 = vmatprep.subr.mxu0 0.0
      %1094 = vmatpush1.xpose.msra.mxu0 0.0
      %1095 = vmatprep.subr.mxu0 0.0
      %1096 = vmatpush1.xpose.msra.mxu0 0.0
      %1097 = vmatprep.subr.mxu0 0.0
      %1098 = vmatpush1.xpose.msra.mxu0 0.0
      %1099 = vmatprep.subr.mxu0 0.0
      %1100 = vmatpush1.xpose.msra.mxu0 0.0
      %1101 = vmatprep.subr.mxu0 0.0
      %1102 = vmatpush1.xpose.msra.mxu0 0.0
      %1103 = vmatprep.subr.mxu0 0.0
      %1104 = vmatpush1.xpose.msra.mxu0 0.0
      %1105 = vmatprep.subr.mxu0 0.0
      %1106 = vmatpush1.xpose.msra.mxu0 0.0
      %1107 = vmatprep.subr.mxu0 0.0
      %1108 = vmatpush1.xpose.msra.mxu0 %v1075
      %1109 = vmatprep.subr.mxu0 0.0
      %1110 = vmatpush2.xpose.msra.mxu0 0.0
      %1111 = vmatprep.subr.mxu0 0.0
      %1112 = vmatpush2.xpose.msra.mxu0 0.0
      %1113 = vmatprep.subr.mxu0 0.0
      %1114 = vmatpush2.xpose.msra.mxu0 0.0
      %1115 = vmatprep.subr.mxu0 0.0
      %1116 = vmatpush2.xpose.msra.mxu0 0.0
      %1117 = vmatprep.subr.mxu0 0.0
      %1118 = vmatpush2.xpose.msra.mxu0 0.0
      %1119 = vmatprep.subr.mxu0 0.0
      %1120 = vmatpush2.xpose.msra.mxu0 0.0
      %1121 = vmatprep.subr.mxu0 0.0
      %1122 = vmatpush2.xpose.msra.mxu0 0.0
      %1123 = vmatprep.subr.mxu0 0.0
      %1124 = vmatpush2.xpose.msra.mxu0 0.0
      %1125 = vmatprep.subr.mxu0 0.0
      %1126 = vmatpush2.xpose.msra.mxu0 0.0
      %1127 = vmatprep.subr.mxu0 0.0
      %1128 = vmatpush2.xpose.msra.mxu0 0.0
      %1129 = vmatprep.subr.mxu0 0.0
      %1130 = vmatpush2.xpose.msra.mxu0 0.0
      %1131 = vmatprep.subr.mxu0 0.0
      %1132 = vmatpush2.xpose.msra.mxu0 0.0
      %1133 = vmatprep.subr.mxu0 0.0
      %1134 = vmatpush2.xpose.msra.mxu0 0.0
      %1135 = vmatprep.subr.mxu0 0.0
      %1136 = vmatpush2.xpose.msra.mxu0 0.0
      %1137 = vmatprep.subr.mxu0 0.0
      %1138 = vmatpush2.xpose.msra.mxu0 0.0
      %1139 = vmatprep.subr.mxu0 0.0
      %1140 = vmatpush2.xpose.msra.mxu0 0.0
      %1141 = vmatprep.mubr.f32.mxu0 0.0
      %1142 = vmatmul.mubr.f32.gmra.mxu0 %v1073
      %v1143 = vpop.f32.mrf.mxu0
      %v1144 = vadd.f32 0.0, %v1143
      %v1145 = vpop.f32.mrf.mxu0
      %1146 = vdwg.mxu0
      %v1147 = vsel %vm647, -1e+20, %v1144
      %v1148 = vmul.f32 %v1147, 0.17677669
      %v1149 = vsel %vm570, %v1148, -inf
      %1150 = vmax.xlane.f32.xlu0 %v1149
      %v1151 = vpop.xlane.xlu0 %1150
      %v1152 = vsub.f32 %v1148, %v1151
      %v1153 = vmul.f32 %v1152, 1.442695
      %v1154 = vpow.pop %v1153
      %v1155 = vsel %vm570, %v1154, 0.0
      %1156 = vadd.xlane.f32.xlu0 %v1155
      %v1157 = vpop.xlane.xlu0 %1156
      %v1158 = vrcp.pop %v1157
      %v1159 = vmul.f32 %v1154, %v1158
      %1160 = vrot.lane.b32.xlu0 %v565, 104
      %v1161 = vpop.permute.xlu0 %1160
      %v1164 = vsel %vm570, %v1159, 0
      %1166 = vmatprep.subr.mxu0 0.0
      %1167 = vmatpush1.msra.mxu0 0.0
      %1168 = vmatprep.subr.mxu0 0.0
      %1169 = vmatpush1.msra.mxu0 0.0
      %1170 = vmatprep.subr.mxu0 0.0
      %1171 = vmatpush1.msra.mxu0 0.0
      %1172 = vmatprep.subr.mxu0 0.0
      %1173 = vmatpush1.msra.mxu0 0.0
      %1174 = vmatprep.subr.mxu0 0.0
      %1175 = vmatpush1.msra.mxu0 0.0
      %1176 = vmatprep.subr.mxu0 0.0
      %1177 = vmatpush1.msra.mxu0 0.0
      %1178 = vmatprep.subr.mxu0 0.0
      %1179 = vmatpush1.msra.mxu0 0.0
      %1180 = vmatprep.subr.mxu0 0.0
      %1181 = vmatpush1.msra.mxu0 0.0
      %1182 = vmatprep.subr.mxu0 0.0
      %1183 = vmatpush1.msra.mxu0 0.0
      %1184 = vmatprep.subr.mxu0 0.0
      %1185 = vmatpush1.msra.mxu0 0.0
      %1186 = vmatprep.subr.mxu0 0.0
      %1187 = vmatpush1.msra.mxu0 0.0
      %1188 = vmatprep.subr.mxu0 0.0
      %1189 = vmatpush1.msra.mxu0 0.0
      %1190 = vmatprep.subr.mxu0 0.0
      %1191 = vmatpush1.msra.mxu0 0.0
      %1192 = vmatprep.subr.mxu0 0.0
      %1193 = vmatpush1.msra.mxu0 0.0
      %1194 = vmatprep.subr.mxu0 0.0
      %1195 = vmatpush1.msra.mxu0 0.0
      %1196 = vmatprep.subr.mxu0 0.0
      %1197 = vmatpush1.msra.mxu0 %v1161
      %1198 = vmatprep.subr.mxu0 0.0
      %1199 = vmatpush2.msra.mxu0 0.0
      %1200 = vmatprep.subr.mxu0 0.0
      %1201 = vmatpush2.msra.mxu0 0.0
      %1202 = vmatprep.subr.mxu0 0.0
      %1203 = vmatpush2.msra.mxu0 0.0
      %1204 = vmatprep.subr.mxu0 0.0
      %1205 = vmatpush2.msra.mxu0 0.0
      %1206 = vmatprep.subr.mxu0 0.0
      %1207 = vmatpush2.msra.mxu0 0.0
      %1208 = vmatprep.subr.mxu0 0.0
      %1209 = vmatpush2.msra.mxu0 0.0
      %1210 = vmatprep.subr.mxu0 0.0
      %1211 = vmatpush2.msra.mxu0 0.0
      %1212 = vmatprep.subr.mxu0 0.0
      %1213 = vmatpush2.msra.mxu0 0.0
      %1214 = vmatprep.subr.mxu0 0.0
      %1215 = vmatpush2.msra.mxu0 0.0
      %1216 = vmatprep.subr.mxu0 0.0
      %1217 = vmatpush2.msra.mxu0 0.0
      %1218 = vmatprep.subr.mxu0 0.0
      %1219 = vmatpush2.msra.mxu0 0.0
      %1220 = vmatprep.subr.mxu0 0.0
      %1221 = vmatpush2.msra.mxu0 0.0
      %1222 = vmatprep.subr.mxu0 0.0
      %1223 = vmatpush2.msra.mxu0 0.0
      %1224 = vmatprep.subr.mxu0 0.0
      %1225 = vmatpush2.msra.mxu0 0.0
      %1226 = vmatprep.subr.mxu0 0.0
      %1227 = vmatpush2.msra.mxu0 0.0
      %1228 = vmatprep.subr.mxu0 0.0
      %1229 = vmatpush2.msra.mxu0 0.0
      %1230 = vmatprep.mubr.f32.mxu0 0.0
      %1231 = vmatmul.mubr.f32.gmra.mxu0 %v1164
      %v1232 = vpop.f32.mrf.mxu0
      %v1233 = vadd.f32 0.0, %v1232
      %v1234 = vpop.f32.mrf.mxu0
      %1235 = vdwg.mxu0
      %1237 = vrot.lane.b32.xlu0 %v899, 8
      %v1238 = vpop.permute.xlu0 %1237
      %1241 = vrot.lane.b32.xlu0 %v1066, 16
      %v1242 = vpop.permute.xlu0 %1241
      %1245 = vrot.lane.b32.xlu0 %v1233, 24
      %v1246 = vpop.permute.xlu0 %1245
      %v1248 = vsel %vm570, %v731, %v1238
      %vm1249 = vcmask 130048
      %v1250 = vsel %vm1249, %v1248, %v1242
      %vm1251 = vcmask 195584
      %v1252 = vsel %vm1251, %v1250, %v1246
      %v1253 = vpack.c.bf16 %v1252, %v1252
      %v1254 = vld [vmem:[%s6] sm:$0xf]
      %v1255 = vld [vmem:[%s6 + $0x4] sm:$0xf]
      %v1256 = vld [vmem:[%s6 + $0x8] sm:$0xf]
      %v1257 = vld [vmem:[%s6 + $0xc] sm:$0xf]
      %v1258 = vld [vmem:[%s7] sm:$0x1]
      %v1260 = vlaneseq
      %v1261 = vshrl.u32 %v1260, 7
      %v1262 = vsub.s32 0, %v1261
      %v1263 = vrot.slane %v1258, %v1262
      %v1269 = vunpack.c.l.b16 %v1254
      %v1270 = vunpack.c.l.b16 %v1255
      %v1271 = vunpack.c.l.b16 %v1256
      %v1272 = vunpack.c.l.b16 %v1257
      %v1273 = vpack.c.b16 %v1270, %v1269
      %v1274 = vpack.c.b16 %v1272, %v1271
      %v1278 = vsel %vm411, %v1253, 0
      %1280 = vmatprep.subr.bf16.mxu0 0
      %1281 = vmatpush1.bf16.msra.mxu0 0
      %1282 = vmatprep.subr.bf16.mxu0 0
      %1283 = vmatpush1.bf16.msra.mxu0 0
      %1284 = vmatprep.subr.bf16.mxu0 0
      %1285 = vmatpush1.bf16.msra.mxu0 0
      %1286 = vmatprep.subr.bf16.mxu0 0
      %1287 = vmatpush1.bf16.msra.mxu0 0
      %1288 = vmatprep.subr.bf16.mxu0 0
      %1289 = vmatpush1.bf16.msra.mxu0 0
      %1290 = vmatprep.subr.bf16.mxu0 0
      %1291 = vmatpush1.bf16.msra.mxu0 0
      %1292 = vmatprep.subr.bf16.mxu0 0
      %1293 = vmatpush1.bf16.msra.mxu0 %v1274
      %1294 = vmatprep.subr.bf16.mxu0 0
      %1295 = vmatpush1.bf16.msra.mxu0 %v1273
      %1296 = vmatprep.subr.bf16.mxu0 0
      %1297 = vmatpush2.bf16.msra.mxu0 0
      %1298 = vmatprep.subr.bf16.mxu0 0
      %1299 = vmatpush2.bf16.msra.mxu0 0
      %1300 = vmatprep.subr.bf16.mxu0 0
      %1301 = vmatpush2.bf16.msra.mxu0 0
      %1302 = vmatprep.subr.bf16.mxu0 0
      %1303 = vmatpush2.bf16.msra.mxu0 0
      %1304 = vmatprep.subr.bf16.mxu0 0
      %1305 = vmatpush2.bf16.msra.mxu0 0
      %1306 = vmatprep.subr.bf16.mxu0 0
      %1307 = vmatpush2.bf16.msra.mxu0 0
      %1308 = vmatprep.subr.bf16.mxu0 0
      %1309 = vmatpush2.bf16.msra.mxu0 0
      %1310 = vmatprep.subr.bf16.mxu0 0
      %1311 = vmatpush2.bf16.msra.mxu0 0
      %1312 = vmatprep.mubr.bf16.mxu0 0
      %1313 = vmatmul.mubr.bf16.gmra.mxu0 %v1278
      %v1314 = vpop.f32.mrf.mxu0
      %v1315 = vadd.f32 %v1263, %v1314
      %v1316 = vpop.f32.mrf.mxu0
      %v1317 = vpop.f32.mrf.mxu0
      %v1318 = vpop.f32.mrf.mxu0
      %1319 = vdwg.mxu0
      %v1320 = vadd.f32 %v1315, %v390
      %v1321 = vsel %vm411, %v1320, 0.0
      %1322 = vadd.xlane.f32.xlu0 %v1321
      %v1323 = vpop.xlane.xlu0 %1322
      %v1324 = vrcp.pop 32.0
      %v1325 = vmul.f32 %v1323, %v1324
      %v1326 = vsub.f32 %v1320, %v1325
      %v1327 = vmul.f32 %v1326, %v1326
      %v1328 = vsel %vm411, %v1327, 0.0
      %1329 = vadd.xlane.f32.xlu0 %v1328
      %v1330 = vpop.xlane.xlu0 %1329
      %v1331 = vmul.f32 %v1330, %v1324
      %v1332 = vadd.f32 %v1331, 1e-05
      %v1333 = vrsqrt.pop %v1332
      %v1334 = vmul.f32 %v1326, %v1333
      %v1335 = vld [vmem:[%s8] sm:$0x1]
      %v1337 = vlaneseq
      %v1338 = vshrl.u32 %v1337, 7
      %v1339 = vsub.s32 0, %v1338
      %v1340 = vrot.slane %v1335, %v1339
      %v1342 = vmul.f32 %v1334, %v1340
      %v1343 = vld [vmem:[%s9] sm:$0x1]
      %v1345 = vlaneseq
      %v1346 = vshrl.u32 %v1345, 7
      %v1347 = vsub.s32 0, %v1346
      %v1348 = vrot.slane %v1343, %v1347
      %v1350 = vadd.f32 %v1342, %v1348
      %1351 = vst.msk [vmem:[%s388] sm:$0xff] %vm411, %v1350
      %p1352 = scmp.lt.s32.totalorder %s21, 1
      %s1353 = scalar_select %p1352, %s21, 1
      %s1354 = smul.addr %s1353, 8
      %s1355 = scalar_lea.vmem %s10, %s1354
      // Predicated region
      $region61: #{decoder_forward.9} parent=59 // pred_check
        %p1356 = pneg %p264
      $region62: #{decoder_forward.9} parent=59 // pred_check_branch
        %1358 = sbr.rel (%p1356) target = $region64
      $region63: #{decoder_forward.9} parent=59 // pred_region
        _
      $region64: #{decoder_forward.9} parent=59 // pred_fallthru
        _
    $region60: #{decoder_forward.9} parent=5 // pred_fallthru
      _
    %p1359 = scmp.le.s32.totalorder 2, %s16
    // Predicated region
    $region65: #{decoder_forward.9} parent=5 // pred_check
      %p1360 = pneg %p1359
    $region66: #{decoder_forward.9} parent=5 // pred_check_branch
      %1362 = sbr.rel (%p1360) target = $region68
    $region67: #{decoder_forward.9} parent=5 // pred_region
      %s1363 = ssub.s32 %s16, 2
      // Predicated region
      $region69: #{decoder_forward.9} parent=67 // pred_check
        %p1364 = pneg %p270
      $region70: #{decoder_forward.9} parent=67 // pred_check_branch
        %1366 = sbr.rel (%p1364) target = $region72
      $region71: #{decoder_forward.9} parent=67 // pred_region
        %p1367 = scmp.lt.s32.totalorder %s22, 1
        %s1368 = scalar_select %p1367, %s22, 1
        %s1369 = smul.addr %s1368, 8
        %s1370 = scalar_lea.vmem %s10, %s1369
      $region72: #{decoder_forward.9} parent=67 // pred_fallthru
        _
    $region68: #{decoder_forward.9} parent=5 // pred_fallthru
      _
  $region6: #{decoder_forward.9} parent=0 // loop_footer
    %s20 = sadd.s32 1, %s16
  $region7: #{decoder_forward.9} parent=0 // loop_footer_branch
    %15 = sbr.rel target = $region3
  $region8: #{decoder_forward.9} parent=0 // loop_exit
    _

// kernel: decoder_forward.11
$region0: #{decoder_forward.11}
  #allocation0 [shape = 'u32[]', space=smem, size = 0x4, offset = 0x4, fixed_abs, tag = 'smem constant byte address 0x4 - core index']
  #allocation1 [shape = 'u32[144,128]{1,0:T(1,128)}', space=vmem, size = 0x12000, scoped, tag = 'internal scratch']
  %s0 = inlined_call_operand.vmem [shape: f32[2,8,32], index: 0, kind: input, shape index: {}]
  %s1 = inlined_call_operand.vmem [shape: bf16[32,64], index: 1, kind: input, shape index: {}]
  %s2 = inlined_call_operand.vmem [shape: f32[1,64], index: 2, kind: input, shape index: {}]
  %s3 = inlined_call_operand.vmem [shape: bf16[64,32], index: 3, kind: input, shape index: {}]
  %s4 = inlined_call_operand.vmem [shape: f32[1,32], index: 4, kind: input, shape index: {}]
  %s5 = inlined_call_operand.vmem [shape: f32[1,32], index: 5, kind: input, shape index: {}]
  %s6 = inlined_call_operand.vmem [shape: f32[1,32], index: 6, kind: input, shape index: {}]
  %s7 = inlined_call_operand.vmem [shape: f32[2,8,32], index: 7, kind: output, shape index: {}]
  %s8 = sld [smem:[#allocation0]]
  $region61: #{decoder_forward.11} parent=0
    _
  %s10 = ssub.s32 1, %s8
  %s11 = scalar_select 0, %s10, %s8
  loop: start=0, step=1, limit=4
  $region2: #{decoder_forward.11} parent=0 // loop_pre_header
    _
  $region3: #{decoder_forward.11} parent=0 // loop_header
    %s13 = sphi 0, %s17
    %p14 = scmp.ge.s32.totalorder %s13, 4
    %s23 = sphi 0, %s25
    %s26 = sphi 0, %s23
    %s27 = sphi 0, %s26
    %s43 = sphi 0, %s27
    %s47 = sphi 0, %s47
    %s49 = sphi 0, %s47
    %s50 = sphi 0, %s49
    %s64 = sphi 0, %s50
    %s68 = sphi 0, %s68
    %s70 = sphi 0, %s68
    %s71 = sphi 0, %s70
    %s85 = sphi 0, %s71
    %s89 = sphi 0, %s89
    %s91 = sphi 0, %s89
    %s92 = sphi 0, %s91
    %s106 = sphi 0, %s92
    %s110 = sphi 0, %s110
    %s112 = sphi 0, %s110
    %s113 = sphi 0, %s112
    %s127 = sphi 0, %s113
    %s131 = sphi 0, %s131
    %s133 = sphi 0, %s131
    %s134 = sphi 0, %s133
    %s148 = sphi 0, %s134
    %s152 = sphi 0, %s152
    %s154 = sphi 0, %s152
    %s155 = sphi 0, %s154
    %s169 = sphi 0, %s155
    %s175 = sphi 0, %s177
    %s178 = sphi 0, %s175
    %s179 = sphi 0, %s178
    %s195 = sphi 0, %s179
  $region4: #{decoder_forward.11} parent=0 // loop_header_branch
    %16 = sbr.rel (%p14) target = $region8
  $region5: #{decoder_forward.11} parent=0 // loop_body
    %s18 = ssub.s32 %s13, 1
    %s19 = ssub.s32 %s13, 2
    %s20 = sadd.s32 %s13, 1
    %s21 = ssub.s32 %s13, %s20
    %p22 = scmp.eq.s32.totalorder %s21, 0
    %s24 = sadd.s32 %s23, 1
    %s25 = scalar_select %p22, %s23, %s24
    %p28 = pneg %p22
    %p29 = scmp.eq.s32.totalorder %s13, 1
    %p30 = por %p28, %p29
    %p31 = scmp.ne.s32.totalorder %s23, %s26
    %p32 = scmp.eq.s32.totalorder %s13, 0
    %p33 = por %p31, %p32
    %p34 = scmp.ne.s32.totalorder %s23, %s26
    %p35 = scmp.eq.s32.totalorder %s18, 1
    %p36 = por %p34, %p35
    %p37 = scmp.ne.s32.totalorder %s26, %s27
    %p38 = scmp.eq.s32.totalorder %s18, 0
    %p39 = por %p37, %p38
    %p40 = scmp.ne.s32.totalorder %s26, %s27
    %p41 = scmp.eq.s32.totalorder %s19, 1
    %p42 = por %p40, %p41
    %p44 = scmp.ne.s32.totalorder %s27, %s43
    %p45 = scmp.eq.s32.totalorder %s19, 0
    %p46 = por %p44, %p45
    %s48 = sadd.s32 %s47, 1
    %p51 = scmp.eq.s32.totalorder %s13, 1
    %p52 = scmp.ne.s32.totalorder %s47, %s49
    %p53 = scmp.eq.s32.totalorder %s13, 0
    %p54 = por %p52, %p53
    %p55 = scmp.ne.s32.totalorder %s47, %s49
    %p56 = scmp.eq.s32.totalorder %s18, 1
    %p57 = por %p55, %p56
    %p58 = scmp.ne.s32.totalorder %s49, %s50
    %p59 = scmp.eq.s32.totalorder %s18, 0
    %p60 = por %p58, %p59
    %p61 = scmp.ne.s32.totalorder %s49, %s50
    %p62 = scmp.eq.s32.totalorder %s19, 1
    %p63 = por %p61, %p62
    %p65 = scmp.ne.s32.totalorder %s50, %s64
    %p66 = scmp.eq.s32.totalorder %s19, 0
    %p67 = por %p65, %p66
    %s69 = sadd.s32 %s68, 1
    %p72 = scmp.eq.s32.totalorder %s13, 1
    %p73 = scmp.ne.s32.totalorder %s68, %s70
    %p74 = scmp.eq.s32.totalorder %s13, 0
    %p75 = por %p73, %p74
    %p76 = scmp.ne.s32.totalorder %s68, %s70
    %p77 = scmp.eq.s32.totalorder %s18, 1
    %p78 = por %p76, %p77
    %p79 = scmp.ne.s32.totalorder %s70, %s71
    %p80 = scmp.eq.s32.totalorder %s18, 0
    %p81 = por %p79, %p80
    %p82 = scmp.ne.s32.totalorder %s70, %s71
    %p83 = scmp.eq.s32.totalorder %s19, 1
    %p84 = por %p82, %p83
    %p86 = scmp.ne.s32.totalorder %s71, %s85
    %p87 = scmp.eq.s32.totalorder %s19, 0
    %p88 = por %p86, %p87
    %s90 = sadd.s32 %s89, 1
    %p93 = scmp.eq.s32.totalorder %s13, 1
    %p94 = scmp.ne.s32.totalorder %s89, %s91
    %p95 = scmp.eq.s32.totalorder %s13, 0
    %p96 = por %p94, %p95
    %p97 = scmp.ne.s32.totalorder %s89, %s91
    %p98 = scmp.eq.s32.totalorder %s18, 1
    %p99 = por %p97, %p98
    %p100 = scmp.ne.s32.totalorder %s91, %s92
    %p101 = scmp.eq.s32.totalorder %s18, 0
    %p102 = por %p100, %p101
    %p103 = scmp.ne.s32.totalorder %s91, %s92
    %p104 = scmp.eq.s32.totalorder %s19, 1
    %p105 = por %p103, %p104
    %p107 = scmp.ne.s32.totalorder %s92, %s106
    %p108 = scmp.eq.s32.totalorder %s19, 0
    %p109 = por %p107, %p108
    %s111 = sadd.s32 %s110, 1
    %p114 = scmp.eq.s32.totalorder %s13, 1
    %p115 = scmp.ne.s32.totalorder %s110, %s112
    %p116 = scmp.eq.s32.totalorder %s13, 0
    %p117 = por %p115, %p116
    %p118 = scmp.ne.s32.totalorder %s110, %s112
    %p119 = scmp.eq.s32.totalorder %s18, 1
    %p120 = por %p118, %p119
    %p121 = scmp.ne.s32.totalorder %s112, %s113
    %p122 = scmp.eq.s32.totalorder %s18, 0
    %p123 = por %p121, %p122
    %p124 = scmp.ne.s32.totalorder %s112, %s113
    %p125 = scmp.eq.s32.totalorder %s19, 1
    %p126 = por %p124, %p125
    %p128 = scmp.ne.s32.totalorder %s113, %s127
    %p129 = scmp.eq.s32.totalorder %s19, 0
    %p130 = por %p128, %p129
    %s132 = sadd.s32 %s131, 1
    %p135 = scmp.eq.s32.totalorder %s13, 1
    %p136 = scmp.ne.s32.totalorder %s131, %s133
    %p137 = scmp.eq.s32.totalorder %s13, 0
    %p138 = por %p136, %p137
    %p139 = scmp.ne.s32.totalorder %s131, %s133
    %p140 = scmp.eq.s32.totalorder %s18, 1
    %p141 = por %p139, %p140
    %p142 = scmp.ne.s32.totalorder %s133, %s134
    %p143 = scmp.eq.s32.totalorder %s18, 0
    %p144 = por %p142, %p143
    %p145 = scmp.ne.s32.totalorder %s133, %s134
    %p146 = scmp.eq.s32.totalorder %s19, 1
    %p147 = por %p145, %p146
    %p149 = scmp.ne.s32.totalorder %s134, %s148
    %p150 = scmp.eq.s32.totalorder %s19, 0
    %p151 = por %p149, %p150
    %s153 = sadd.s32 %s152, 1
    %p156 = scmp.eq.s32.totalorder %s13, 1
    %p157 = scmp.ne.s32.totalorder %s152, %s154
    %p158 = scmp.eq.s32.totalorder %s13, 0
    %p159 = por %p157, %p158
    %p160 = scmp.ne.s32.totalorder %s152, %s154
    %p161 = scmp.eq.s32.totalorder %s18, 1
    %p162 = por %p160, %p161
    %p163 = scmp.ne.s32.totalorder %s154, %s155
    %p164 = scmp.eq.s32.totalorder %s18, 0
    %p165 = por %p163, %p164
    %p166 = scmp.ne.s32.totalorder %s154, %s155
    %p167 = scmp.eq.s32.totalorder %s19, 1
    %p168 = por %p166, %p167
    %p170 = scmp.ne.s32.totalorder %s155, %s169
    %p171 = scmp.eq.s32.totalorder %s19, 0
    %p172 = por %p170, %p171
    %s173 = ssub.s32 %s13, %s20
    %p174 = scmp.eq.s32.totalorder %s173, 0
    %s176 = sadd.s32 %s175, 1
    %s177 = scalar_select %p174, %s175, %s176
    %p180 = pneg %p174
    %p181 = scmp.eq.s32.totalorder %s13, 1
    %p182 = por %p180, %p181
    %p183 = scmp.ne.s32.totalorder %s175, %s178
    %p184 = scmp.eq.s32.totalorder %s13, 0
    %p185 = por %p183, %p184
    %p186 = scmp.ne.s32.totalorder %s175, %s178
    %p187 = scmp.eq.s32.totalorder %s18, 1
    %p188 = por %p186, %p187
    %p189 = scmp.ne.s32.totalorder %s178, %s179
    %p190 = scmp.eq.s32.totalorder %s18, 0
    %p191 = por %p189, %p190
    %p192 = scmp.ne.s32.totalorder %s178, %s179
    %p193 = scmp.eq.s32.totalorder %s19, 1
    %p194 = por %p192, %p193
    %p196 = scmp.ne.s32.totalorder %s179, %s195
    %p197 = scmp.eq.s32.totalorder %s19, 0
    %p198 = por %p196, %p197
    %p199 = scmp.le.s32.totalorder 1, %s13
    %p200 = scmp.lt.s32.totalorder %s13, 3
    %p201 = pnand %p199, %p200
    %p202 = pneg %p201
    // Predicated region
    $region9: #{decoder_forward.11} parent=5 // pred_check
      _
    $region10: #{decoder_forward.11} parent=5 // pred_check_branch
      %204 = sbr.rel (%p201) target = $region12
    $region11: #{decoder_forward.11} parent=5 // pred_region
      %s205 = ssub.s32 %s13, 1
      // Predicated region
      $region13: #{decoder_forward.11} parent=11 // pred_check
        %p206 = pneg %p60
      $region14: #{decoder_forward.11} parent=11 // pred_check_branch
        %208 = sbr.rel (%p206) target = $region16
      $region15: #{decoder_forward.11} parent=11 // pred_region
        _
      $region16: #{decoder_forward.11} parent=11 // pred_fallthru
        _
      // Predicated region
      $region17: #{decoder_forward.11} parent=11 // pred_check
        %p209 = pneg %p81
      $region18: #{decoder_forward.11} parent=11 // pred_check_branch
        %211 = sbr.rel (%p209) target = $region20
      $region19: #{decoder_forward.11} parent=11 // pred_region
        _
      $region20: #{decoder_forward.11} parent=11 // pred_fallthru
        _
      // Predicated region
      $region21: #{decoder_forward.11} parent=11 // pred_check
        %p212 = pneg %p102
      $region22: #{decoder_forward.11} parent=11 // pred_check_branch
        %214 = sbr.rel (%p212) target = $region24
      $region23: #{decoder_forward.11} parent=11 // pred_region
        _
      $region24: #{decoder_forward.11} parent=11 // pred_fallthru
        _
      // Predicated region
      $region25: #{decoder_forward.11} parent=11 // pred_check
        %p215 = pneg %p123
      $region26: #{decoder_forward.11} parent=11 // pred_check_branch
        %217 = sbr.rel (%p215) target = $region28
      $region27: #{decoder_forward.11} parent=11 // pred_region
        _
      $region28: #{decoder_forward.11} parent=11 // pred_fallthru
        _
      // Predicated region
      $region29: #{decoder_forward.11} parent=11 // pred_check
        %p218 = pneg %p144
      $region30: #{decoder_forward.11} parent=11 // pred_check_branch
        %220 = sbr.rel (%p218) target = $region32
      $region31: #{decoder_forward.11} parent=11 // pred_region
        _
      $region32: #{decoder_forward.11} parent=11 // pred_fallthru
        _
      // Predicated region
      $region33: #{decoder_forward.11} parent=11 // pred_check
        %p221 = pneg %p165
      $region34: #{decoder_forward.11} parent=11 // pred_check_branch
        %223 = sbr.rel (%p221) target = $region36
      $region35: #{decoder_forward.11} parent=11 // pred_region
        _
      $region36: #{decoder_forward.11} parent=11 // pred_fallthru
        _
    $region12: #{decoder_forward.11} parent=5 // pred_fallthru
      _
    %p224 = scmp.lt.s32.totalorder %s13, 2
    // Predicated region
    $region37: #{decoder_forward.11} parent=5 // pred_check
      %p225 = pneg %p224
    $region38: #{decoder_forward.11} parent=5 // pred_check_branch
      %227 = sbr.rel (%p225) target = $region40
    $region39: #{decoder_forward.11} parent=5 // pred_region
      // Predicated region
      $region41: #{decoder_forward.11} parent=39 // pred_check
        %p228 = pneg %p33
      $region42: #{decoder_forward.11} parent=39 // pred_check_branch
        %230 = sbr.rel (%p228) target = $region44
      $region43: #{decoder_forward.11} parent=39 // pred_region
        %p231 = scmp.lt.s32.totalorder %s13, 1
        %s232 = scalar_select %p231, %s13, 1
        %s233 = smul.addr %s232, 8
        %s234 = scalar_lea.vmem %s0, %s233
      $region44: #{decoder_forward.11} parent=39 // pred_fallthru
        _
    $region40: #{decoder_forward.11} parent=5 // pred_fallthru
      _
    %p235 = scmp.le.s32.totalorder 1, %s13
    %p236 = scmp.lt.s32.totalorder %s13, 3
    %p237 = pnand %p235, %p236
    %p238 = pneg %p237
    // Predicated region
    $region45: #{decoder_forward.11} parent=5 // pred_check
      _
    $region46: #{decoder_forward.11} parent=5 // pred_check_branch
      %240 = sbr.rel (%p237) target = $region48
    $region47: #{decoder_forward.11} parent=5 // pred_region
      %s241 = ssub.s32 %s13, 1
      %p242 = scmp.lt.s32.totalorder %s18, 1
      %s243 = scalar_select %p242, %s18, 1
      %s244 = smul.addr %s243, 8
      %s245 = scalar_lea.vmem %s0, %s244
      %p246 = pneg %p39
      %p247 = pneg %p36
      %p248 = pneg %p60
      %p249 = pneg %p57
      %p250 = pneg %p81
      %p251 = pneg %p78
      %p252 = pneg %p102
      %p253 = pneg %p99
      %p254 = pneg %p123
      %p255 = pneg %p120
      %p256 = pneg %p144
      %p257 = pneg %p141
      %p258 = pneg %p165
      %p259 = pneg %p162
      %p260 = pneg %p191
      %p261 = pneg %p188
      %p262 = scmp.lt.s32.totalorder %s18, 1
      %s263 = scalar_select %p262, %s18, 1
      %s264 = smul.addr %s263, 8
      %s265 = scalar_lea.vmem %s7, %s264
      %p266 = scmp.lt.s32.totalorder %s18, 1
      %s267 = scalar_select %p266, %s18, 1
      %s268 = smul.addr %s267, 8
      %s269 = scalar_lea.vmem %s0, %s268
      %p270 = scmp.lt.s32.totalorder %s18, 1
      %s271 = scalar_select %p270, %s18, 1
      %s272 = smul.addr %s271, 8
      %s273 = scalar_lea.vmem %s7, %s272
      %v275 = vld [vmem:[%s269] sm:$0xff]
      %v276 = vpack.c.bf16 %v275, %v275
      %v277 = vld [vmem:[%s1] sm:$0xf]
      %v278 = vld [vmem:[%s1 + $0x4] sm:$0xf]
      %v279 = vld [vmem:[%s1 + $0x8] sm:$0xf]
      %v280 = vld [vmem:[%s1 + $0xc] sm:$0xf]
      %v281 = vld [vmem:[%s2] sm:$0x1]
      %v283 = vlaneseq
      %v284 = vshrl.u32 %v283, 7
      %v285 = vsub.s32 0, %v284
      %v286 = vrot.slane %v281, %v285
      %v292 = vunpack.c.l.b16 %v277
      %v293 = vunpack.c.l.b16 %v278
      %v294 = vunpack.c.l.b16 %v279
      %v295 = vunpack.c.l.b16 %v280
      %v296 = vpack.c.b16 %v293, %v292
      %v297 = vpack.c.b16 %v295, %v294
      %vm300 = vcmask 261120
      %v302 = vsel %vm300, %v276, 0
      %304 = vmatprep.subr.bf16.mxu0 0
      %305 = vmatpush1.bf16.msra.mxu0 0
      %306 = vmatprep.subr.bf16.mxu0 0
      %307 = vmatpush1.bf16.msra.mxu0 0
      %308 = vmatprep.subr.bf16.mxu0 0
      %309 = vmatpush1.bf16.msra.mxu0 0
      %310 = vmatprep.subr.bf16.mxu0 0
      %311 = vmatpush1.bf16.msra.mxu0 0
      %312 = vmatprep.subr.bf16.mxu0 0
      %313 = vmatpush1.bf16.msra.mxu0 0
      %314 = vmatprep.subr.bf16.mxu0 0
      %315 = vmatpush1.bf16.msra.mxu0 0
      %316 = vmatprep.subr.bf16.mxu0 0
      %317 = vmatpush1.bf16.msra.mxu0 %v297
      %318 = vmatprep.subr.bf16.mxu0 0
      %319 = vmatpush1.bf16.msra.mxu0 %v296
      %320 = vmatprep.subr.bf16.mxu0 0
      %321 = vmatpush2.bf16.msra.mxu0 0
      %322 = vmatprep.subr.bf16.mxu0 0
      %323 = vmatpush2.bf16.msra.mxu0 0
      %324 = vmatprep.subr.bf16.mxu0 0
      %325 = vmatpush2.bf16.msra.mxu0 0
      %326 = vmatprep.subr.bf16.mxu0 0
      %327 = vmatpush2.bf16.msra.mxu0 0
      %328 = vmatprep.subr.bf16.mxu0 0
      %329 = vmatpush2.bf16.msra.mxu0 0
      %330 = vmatprep.subr.bf16.mxu0 0
      %331 = vmatpush2.bf16.msra.mxu0 0
      %332 = vmatprep.subr.bf16.mxu0 0
      %333 = vmatpush2.bf16.msra.mxu0 0
      %334 = vmatprep.subr.bf16.mxu0 0
      %335 = vmatpush2.bf16.msra.mxu0 0
      %336 = vmatprep.mubr.bf16.mxu0 0
      %337 = vmatmul.mubr.bf16.gmra.mxu0 %v302
      %v338 = vpop.f32.mrf.mxu0
      %v339 = vadd.f32 %v286, %v338
      %v340 = vpop.f32.mrf.mxu0
      %v341 = vpop.f32.mrf.mxu0
      %v342 = vpop.f32.mrf.mxu0
      %343 = vdwg.mxu0
      %v344 = vmax.f32 %v339, 0.0
      %v345 = vpack.c.bf16 %v344, %v344
      %v346 = vld [vmem:[%s3] sm:$0xf]
      %v347 = vld [vmem:[%s3 + $0x4] sm:$0xf]
      %v348 = vld [vmem:[%s3 + $0x8] sm:$0xf]
      %v349 = vld [vmem:[%s3 + $0xc] sm:$0xf]
      %v350 = vld [vmem:[%s3 + $0x10] sm:$0xf]
      %v351 = vld [vmem:[%s3 + $0x14] sm:$0xf]
      %v352 = vld [vmem:[%s3 + $0x18] sm:$0xf]
      %v353 = vld [vmem:[%s3 + $0x1c] sm:$0xf]
      %v354 = vld [vmem:[%s4] sm:$0x1]
      %v356 = vlaneseq
      %v357 = vshrl.u32 %v356, 7
      %v358 = vsub.s32 0, %v357
      %v359 = vrot.slane %v354, %v358
      %v369 = vunpack.c.l.b16 %v346
      %v370 = vunpack.c.l.b16 %v347
      %v371 = vunpack.c.l.b16 %v348
      %v372 = vunpack.c.l.b16 %v349
      %v373 = vunpack.c.l.b16 %v350
      %v374 = vunpack.c.l.b16 %v351
      %v375 = vunpack.c.l.b16 %v352
      %v376 = vunpack.c.l.b16 %v353
      %v377 = vpack.c.b16 %v370, %v369
      %v378 = vpack.c.b16 %v372, %v371
      %v379 = vpack.c.b16 %v374, %v373
      %v380 = vpack.c.b16 %v376, %v375
      %vm385 = vcmask 523264
      %v387 = vsel %vm385, %v345, 0
      %389 = vmatprep.subr.bf16.mxu0 0
      %390 = vmatpush1.bf16.msra.mxu0 0
      %391 = vmatprep.subr.bf16.mxu0 0
      %392 = vmatpush1.bf16.msra.mxu0 0
      %393 = vmatprep.subr.bf16.mxu0 0
      %394 = vmatpush1.bf16.msra.mxu0 0
      %395 = vmatprep.subr.bf16.mxu0 0
      %396 = vmatpush1.bf16.msra.mxu0 0
      %397 = vmatprep.subr.bf16.mxu0 0
      %398 = vmatpush1.bf16.msra.mxu0 %v380
      %399 = vmatprep.subr.bf16.mxu0 0
      %400 = vmatpush1.bf16.msra.mxu0 %v379
      %401 = vmatprep.subr.bf16.mxu0 0
      %402 = vmatpush1.bf16.msra.mxu0 %v378
      %403 = vmatprep.subr.bf16.mxu0 0
      %404 = vmatpush1.bf16.msra.mxu0 %v377
      %405 = vmatprep.subr.bf16.mxu0 0
      %406 = vmatpush2.bf16.msra.mxu0 0
      %407 = vmatprep.subr.bf16.mxu0 0
      %408 = vmatpush2.bf16.msra.mxu0 0
      %409 = vmatprep.subr.bf16.mxu0 0
      %410 = vmatpush2.bf16.msra.mxu0 0
      %411 = vmatprep.subr.bf16.mxu0 0
      %412 = vmatpush2.bf16.msra.mxu0 0
      %413 = vmatprep.subr.bf16.mxu0 0
      %414 = vmatpush2.bf16.msra.mxu0 0
      %415 = vmatprep.subr.bf16.mxu0 0
      %416 = vmatpush2.bf16.msra.mxu0 0
      %417 = vmatprep.subr.bf16.mxu0 0
      %418 = vmatpush2.bf16.msra.mxu0 0
      %419 = vmatprep.subr.bf16.mxu0 0
      %420 = vmatpush2.bf16.msra.mxu0 0
      %421 = vmatprep.mubr.bf16.mxu0 0
      %422 = vmatmul.mubr.bf16.gmra.mxu0 %v387
      %v423 = vpop.f32.mrf.mxu0
      %v424 = vadd.f32 %v359, %v423
      %v425 = vpop.f32.mrf.mxu0
      %v426 = vpop.f32.mrf.mxu0
      %v427 = vpop.f32.mrf.mxu0
      %428 = vdwg.mxu0
      %v429 = vadd.f32 %v424, %v275
      %v430 = vsel %vm300, %v429, 0.0
      %431 = vadd.xlane.f32.xlu0 %v430
      %v432 = vpop.xlane.xlu0 %431
      %v433 = vrcp.pop 32.0
      %v434 = vmul.f32 %v432, %v433
      %v435 = vsub.f32 %v429, %v434
      %v436 = vmul.f32 %v435, %v435
      %v437 = vsel %vm300, %v436, 0.0
      %438 = vadd.xlane.f32.xlu0 %v437
      %v439 = vpop.xlane.xlu0 %438
      %v440 = vmul.f32 %v439, %v433
      %v441 = vadd.f32 %v440, 1e-05
      %v442 = vrsqrt.pop %v441
      %v443 = vmul.f32 %v435, %v442
      %v444 = vld [vmem:[%s5] sm:$0x1]
      %v446 = vlaneseq
      %v447 = vshrl.u32 %v446, 7
      %v448 = vsub.s32 0, %v447
      %v449 = vrot.slane %v444, %v448
      %v451 = vmul.f32 %v443, %v449
      %v452 = vld [vmem:[%s6] sm:$0x1]
      %v454 = vlaneseq
      %v455 = vshrl.u32 %v454, 7
      %v456 = vsub.s32 0, %v455
      %v457 = vrot.slane %v452, %v456
      %v459 = vadd.f32 %v451, %v457
      %460 = vst.msk [vmem:[%s273] sm:$0xff] %vm300, %v459
      %p461 = scmp.lt.s32.totalorder %s18, 1
      %s462 = scalar_select %p461, %s18, 1
      %s463 = smul.addr %s462, 8
      %s464 = scalar_lea.vmem %s7, %s463
      // Predicated region
      $region49: #{decoder_forward.11} parent=47 // pred_check
        %p465 = pneg %p188
      $region50: #{decoder_forward.11} parent=47 // pred_check_branch
        %467 = sbr.rel (%p465) target = $region52
      $region51: #{decoder_forward.11} parent=47 // pred_region
        _
      $region52: #{decoder_forward.11} parent=47 // pred_fallthru
        _
    $region48: #{decoder_forward.11} parent=5 // pred_fallthru
      _
    %p468 = scmp.le.s32.totalorder 2, %s13
    // Predicated region
    $region53: #{decoder_forward.11} parent=5 // pred_check
      %p469 = pneg %p468
    $region54: #{decoder_forward.11} parent=5 // pred_check_branch
      %471 = sbr.rel (%p469) target = $region56
    $region55: #{decoder_forward.11} parent=5 // pred_region
      %s472 = ssub.s32 %s13, 2
      // Predicated region
      $region57: #{decoder_forward.11} parent=55 // pred_check
        %p473 = pneg %p194
      $region58: #{decoder_forward.11} parent=55 // pred_check_branch
        %475 = sbr.rel (%p473) target = $region60
      $region59: #{decoder_forward.11} parent=55 // pred_region
        %p476 = scmp.lt.s32.totalorder %s19, 1
        %s477 = scalar_select %p476, %s19, 1
        %s478 = smul.addr %s477, 8
        %s479 = scalar_lea.vmem %s7, %s478
      $region60: #{decoder_forward.11} parent=55 // pred_fallthru
        _
    $region56: #{decoder_forward.11} parent=5 // pred_fallthru
      _
  $region6: #{decoder_forward.11} parent=0 // loop_footer
    %s17 = sadd.s32 1, %s13
  $region7: #{decoder_forward.11} parent=0 // loop_footer_branch
    %12 = sbr.rel target = $region3
  $region8: #{decoder_forward.11} parent=0 // loop_exit
    _

// kernel: decoder_forward.15
$region0: #{decoder_forward.15}
  #allocation0 [shape = 'u32[]', space=smem, size = 0x4, offset = 0x4, fixed_abs, tag = 'smem constant byte address 0x4 - core index']
  #allocation1 [shape = 'u32[144,128]{1,0:T(1,128)}', space=vmem, size = 0x12000, scoped, tag = 'internal scratch']
  %s0 = inlined_call_operand.vmem [shape: f32[2,8,32], index: 0, kind: input, shape index: {}]
  %s1 = inlined_call_operand.vmem [shape: bf16[32,4], index: 1, kind: input, shape index: {}]
  %s2 = inlined_call_operand.vmem [shape: f32[1,4], index: 2, kind: input, shape index: {}]
  %s3 = inlined_call_operand.vmem [shape: f32[2,8,4], index: 3, kind: output, shape index: {}]
  %s4 = sld [smem:[#allocation0]]
  $region45: #{decoder_forward.15} parent=0
    _
  %s6 = ssub.s32 1, %s4
  %s7 = scalar_select 0, %s6, %s4
  loop: start=0, step=1, limit=4
  $region2: #{decoder_forward.15} parent=0 // loop_pre_header
    _
  $region3: #{decoder_forward.15} parent=0 // loop_header
    %s9 = sphi 0, %s13
    %p10 = scmp.ge.s32.totalorder %s9, 4
    %s19 = sphi 0, %s21
    %s22 = sphi 0, %s19
    %s23 = sphi 0, %s22
    %s39 = sphi 0, %s23
    %s43 = sphi 0, %s43
    %s45 = sphi 0, %s43
    %s46 = sphi 0, %s45
    %s60 = sphi 0, %s46
    %s64 = sphi 0, %s64
    %s66 = sphi 0, %s64
    %s67 = sphi 0, %s66
    %s81 = sphi 0, %s67
    %s87 = sphi 0, %s89
    %s90 = sphi 0, %s87
    %s91 = sphi 0, %s90
    %s107 = sphi 0, %s91
  $region4: #{decoder_forward.15} parent=0 // loop_header_branch
    %12 = sbr.rel (%p10) target = $region8
  $region5: #{decoder_forward.15} parent=0 // loop_body
    %s14 = ssub.s32 %s9, 1
    %s15 = ssub.s32 %s9, 2
    %s16 = sadd.s32 %s9, 1
    %s17 = ssub.s32 %s9, %s16
    %p18 = scmp.eq.s32.totalorder %s17, 0
    %s20 = sadd.s32 %s19, 1
    %s21 = scalar_select %p18, %s19, %s20
    %p24 = pneg %p18
    %p25 = scmp.eq.s32.totalorder %s9, 1
    %p26 = por %p24, %p25
    %p27 = scmp.ne.s32.totalorder %s19, %s22
    %p28 = scmp.eq.s32.totalorder %s9, 0
    %p29 = por %p27, %p28
    %p30 = scmp.ne.s32.totalorder %s19, %s22
    %p31 = scmp.eq.s32.totalorder %s14, 1
    %p32 = por %p30, %p31
    %p33 = scmp.ne.s32.totalorder %s22, %s23
    %p34 = scmp.eq.s32.totalorder %s14, 0
    %p35 = por %p33, %p34
    %p36 = scmp.ne.s32.totalorder %s22, %s23
    %p37 = scmp.eq.s32.totalorder %s15, 1
    %p38 = por %p36, %p37
    %p40 = scmp.ne.s32.totalorder %s23, %s39
    %p41 = scmp.eq.s32.totalorder %s15, 0
    %p42 = por %p40, %p41
    %s44 = sadd.s32 %s43, 1
    %p47 = scmp.eq.s32.totalorder %s9, 1
    %p48 = scmp.ne.s32.totalorder %s43, %s45
    %p49 = scmp.eq.s32.totalorder %s9, 0
    %p50 = por %p48, %p49
    %p51 = scmp.ne.s32.totalorder %s43, %s45
    %p52 = scmp.eq.s32.totalorder %s14, 1
    %p53 = por %p51, %p52
    %p54 = scmp.ne.s32.totalorder %s45, %s46
    %p55 = scmp.eq.s32.totalorder %s14, 0
    %p56 = por %p54, %p55
    %p57 = scmp.ne.s32.totalorder %s45, %s46
    %p58 = scmp.eq.s32.totalorder %s15, 1
    %p59 = por %p57, %p58
    %p61 = scmp.ne.s32.totalorder %s46, %s60
    %p62 = scmp.eq.s32.totalorder %s15, 0
    %p63 = por %p61, %p62
    %s65 = sadd.s32 %s64, 1
    %p68 = scmp.eq.s32.totalorder %s9, 1
    %p69 = scmp.ne.s32.totalorder %s64, %s66
    %p70 = scmp.eq.s32.totalorder %s9, 0
    %p71 = por %p69, %p70
    %p72 = scmp.ne.s32.totalorder %s64, %s66
    %p73 = scmp.eq.s32.totalorder %s14, 1
    %p74 = por %p72, %p73
    %p75 = scmp.ne.s32.totalorder %s66, %s67
    %p76 = scmp.eq.s32.totalorder %s14, 0
    %p77 = por %p75, %p76
    %p78 = scmp.ne.s32.totalorder %s66, %s67
    %p79 = scmp.eq.s32.totalorder %s15, 1
    %p80 = por %p78, %p79
    %p82 = scmp.ne.s32.totalorder %s67, %s81
    %p83 = scmp.eq.s32.totalorder %s15, 0
    %p84 = por %p82, %p83
    %s85 = ssub.s32 %s9, %s16
    %p86 = scmp.eq.s32.totalorder %s85, 0
    %s88 = sadd.s32 %s87, 1
    %s89 = scalar_select %p86, %s87, %s88
    %p92 = pneg %p86
    %p93 = scmp.eq.s32.totalorder %s9, 1
    %p94 = por %p92, %p93
    %p95 = scmp.ne.s32.totalorder %s87, %s90
    %p96 = scmp.eq.s32.totalorder %s9, 0
    %p97 = por %p95, %p96
    %p98 = scmp.ne.s32.totalorder %s87, %s90
    %p99 = scmp.eq.s32.totalorder %s14, 1
    %p100 = por %p98, %p99
    %p101 = scmp.ne.s32.totalorder %s90, %s91
    %p102 = scmp.eq.s32.totalorder %s14, 0
    %p103 = por %p101, %p102
    %p104 = scmp.ne.s32.totalorder %s90, %s91
    %p105 = scmp.eq.s32.totalorder %s15, 1
    %p106 = por %p104, %p105
    %p108 = scmp.ne.s32.totalorder %s91, %s107
    %p109 = scmp.eq.s32.totalorder %s15, 0
    %p110 = por %p108, %p109
    %p111 = scmp.le.s32.totalorder 1, %s9
    %p112 = scmp.lt.s32.totalorder %s9, 3
    %p113 = pnand %p111, %p112
    %p114 = pneg %p113
    // Predicated region
    $region9: #{decoder_forward.15} parent=5 // pred_check
      _
    $region10: #{decoder_forward.15} parent=5 // pred_check_branch
      %116 = sbr.rel (%p113) target = $region12
    $region11: #{decoder_forward.15} parent=5 // pred_region
      %s117 = ssub.s32 %s9, 1
      // Predicated region
      $region13: #{decoder_forward.15} parent=11 // pred_check
        %p118 = pneg %p56
      $region14: #{decoder_forward.15} parent=11 // pred_check_branch
        %120 = sbr.rel (%p118) target = $region16
      $region15: #{decoder_forward.15} parent=11 // pred_region
        _
      $region16: #{decoder_forward.15} parent=11 // pred_fallthru
        _
      // Predicated region
      $region17: #{decoder_forward.15} parent=11 // pred_check
        %p121 = pneg %p77
      $region18: #{decoder_forward.15} parent=11 // pred_check_branch
        %123 = sbr.rel (%p121) target = $region20
      $region19: #{decoder_forward.15} parent=11 // pred_region
        _
      $region20: #{decoder_forward.15} parent=11 // pred_fallthru
        _
    $region12: #{decoder_forward.15} parent=5 // pred_fallthru
      _
    %p124 = scmp.lt.s32.totalorder %s9, 2
    // Predicated region
    $region21: #{decoder_forward.15} parent=5 // pred_check
      %p125 = pneg %p124
    $region22: #{decoder_forward.15} parent=5 // pred_check_branch
      %127 = sbr.rel (%p125) target = $region24
    $region23: #{decoder_forward.15} parent=5 // pred_region
      // Predicated region
      $region25: #{decoder_forward.15} parent=23 // pred_check
        %p128 = pneg %p29
      $region26: #{decoder_forward.15} parent=23 // pred_check_branch
        %130 = sbr.rel (%p128) target = $region28
      $region27: #{decoder_forward.15} parent=23 // pred_region
        %p131 = scmp.lt.s32.totalorder %s9, 1
        %s132 = scalar_select %p131, %s9, 1
        %s133 = smul.addr %s132, 8
        %s134 = scalar_lea.vmem %s0, %s133
      $region28: #{decoder_forward.15} parent=23 // pred_fallthru
        _
    $region24: #{decoder_forward.15} parent=5 // pred_fallthru
      _
    %p135 = scmp.le.s32.totalorder 1, %s9
    %p136 = scmp.lt.s32.totalorder %s9, 3
    %p137 = pnand %p135, %p136
    %p138 = pneg %p137
    // Predicated region
    $region29: #{decoder_forward.15} parent=5 // pred_check
      _
    $region30: #{decoder_forward.15} parent=5 // pred_check_branch
      %140 = sbr.rel (%p137) target = $region32
    $region31: #{decoder_forward.15} parent=5 // pred_region
      %s141 = ssub.s32 %s9, 1
      %p142 = scmp.lt.s32.totalorder %s14, 1
      %s143 = scalar_select %p142, %s14, 1
      %s144 = smul.addr %s143, 8
      %s145 = scalar_lea.vmem %s0, %s144
      %p146 = pneg %p35
      %p147 = pneg %p32
      %p148 = pneg %p56
      %p149 = pneg %p53
      %p150 = pneg %p77
      %p151 = pneg %p74
      %p152 = pneg %p103
      %p153 = pneg %p100
      %p154 = scmp.lt.s32.totalorder %s14, 1
      %s155 = scalar_select %p154, %s14, 1
      %s156 = smul.addr %s155, 8
      %s157 = scalar_lea.vmem %s3, %s156
      %p158 = scmp.lt.s32.totalorder %s14, 1
      %s159 = scalar_select %p158, %s14, 1
      %s160 = smul.addr %s159, 8
      %s161 = scalar_lea.vmem %s0, %s160
      %p162 = scmp.lt.s32.totalorder %s14, 1
      %s163 = scalar_select %p162, %s14, 1
      %s164 = smul.addr %s163, 8
      %s165 = scalar_lea.vmem %s3, %s164
      %v167 = vld [vmem:[%s161] sm:$0xff]
      %v168 = vpack.c.bf16 %v167, %v167
      %v169 = vld [vmem:[%s1] sm:$0xf]
      %v170 = vld [vmem:[%s1 + $0x4] sm:$0xf]
      %v171 = vld [vmem:[%s1 + $0x8] sm:$0xf]
      %v172 = vld [vmem:[%s1 + $0xc] sm:$0xf]
      %v173 = vld [vmem:[%s2] sm:$0x1]
      %v175 = vlaneseq
      %v176 = vshrl.u32 %v175, 7
      %v177 = vsub.s32 0, %v176
      %v178 = vrot.slane %v173, %v177
      %v184 = vunpack.c.l.b16 %v169
      %v185 = vunpack.c.l.b16 %v170
      %v186 = vunpack.c.l.b16 %v171
      %v187 = vunpack.c.l.b16 %v172
      %v188 = vpack.c.b16 %v185, %v184
      %v189 = vpack.c.b16 %v187, %v186
      %vm192 = vcmask 261120
      %v194 = vsel %vm192, %v168, 0
      %196 = vmatprep.subr.bf16.mxu0 0
      %197 = vmatpush1.bf16.msra.mxu0 0
      %198 = vmatprep.subr.bf16.mxu0 0
      %199 = vmatpush1.bf16.msra.mxu0 0
      %200 = vmatprep.subr.bf16.mxu0 0
      %201 = vmatpush1.bf16.msra.mxu0 0
      %202 = vmatprep.subr.bf16.mxu0 0
      %203 = vmatpush1.bf16.msra.mxu0 0
      %204 = vmatprep.subr.bf16.mxu0 0
      %205 = vmatpush1.bf16.msra.mxu0 0
      %206 = vmatprep.subr.bf16.mxu0 0
      %207 = vmatpush1.bf16.msra.mxu0 0
      %208 = vmatprep.subr.bf16.mxu0 0
      %209 = vmatpush1.bf16.msra.mxu0 %v189
      %210 = vmatprep.subr.bf16.mxu0 0
      %211 = vmatpush1.bf16.msra.mxu0 %v188
      %212 = vmatprep.subr.bf16.mxu0 0
      %213 = vmatpush2.bf16.msra.mxu0 0
      %214 = vmatprep.subr.bf16.mxu0 0
      %215 = vmatpush2.bf16.msra.mxu0 0
      %216 = vmatprep.subr.bf16.mxu0 0
      %217 = vmatpush2.bf16.msra.mxu0 0
      %218 = vmatprep.subr.bf16.mxu0 0
      %219 = vmatpush2.bf16.msra.mxu0 0
      %220 = vmatprep.subr.bf16.mxu0 0
      %221 = vmatpush2.bf16.msra.mxu0 0
      %222 = vmatprep.subr.bf16.mxu0 0
      %223 = vmatpush2.bf16.msra.mxu0 0
      %224 = vmatprep.subr.bf16.mxu0 0
      %225 = vmatpush2.bf16.msra.mxu0 0
      %226 = vmatprep.subr.bf16.mxu0 0
      %227 = vmatpush2.bf16.msra.mxu0 0
      %228 = vmatprep.mubr.bf16.mxu0 0
      %229 = vmatmul.mubr.bf16.gmra.mxu0 %v194
      %v230 = vpop.f32.mrf.mxu0
      %v231 = vadd.f32 %v178, %v230
      %v232 = vpop.f32.mrf.mxu0
      %v233 = vpop.f32.mrf.mxu0
      %v234 = vpop.f32.mrf.mxu0
      %235 = vdwg.mxu0
      %vm236 = vcmask 31744
      %237 = vst.msk [vmem:[%s165] sm:$0xff] %vm236, %v231
      %p238 = scmp.lt.s32.totalorder %s14, 1
      %s239 = scalar_select %p238, %s14, 1
      %s240 = smul.addr %s239, 8
      %s241 = scalar_lea.vmem %s3, %s240
      // Predicated region
      $region33: #{decoder_forward.15} parent=31 // pred_check
        %p242 = pneg %p100
      $region34: #{decoder_forward.15} parent=31 // pred_check_branch
        %244 = sbr.rel (%p242) target = $region36
      $region35: #{decoder_forward.15} parent=31 // pred_region
        _
      $region36: #{decoder_forward.15} parent=31 // pred_fallthru
        _
    $region32: #{decoder_forward.15} parent=5 // pred_fallthru
      _
    %p245 = scmp.le.s32.totalorder 2, %s9
    // Predicated region
    $region37: #{decoder_forward.15} parent=5 // pred_check
      %p246 = pneg %p245
    $region38: #{decoder_forward.15} parent=5 // pred_check_branch
      %248 = sbr.rel (%p246) target = $region40
    $region39: #{decoder_forward.15} parent=5 // pred_region
      %s249 = ssub.s32 %s9, 2
      // Predicated region
      $region41: #{decoder_forward.15} parent=39 // pred_check
        %p250 = pneg %p106
      $region42: #{decoder_forward.15} parent=39 // pred_check_branch
        %252 = sbr.rel (%p250) target = $region44
      $region43: #{decoder_forward.15} parent=39 // pred_region
        %p253 = scmp.lt.s32.totalorder %s15, 1
        %s254 = scalar_select %p253, %s15, 1
        %s255 = smul.addr %s254, 8
        %s256 = scalar_lea.vmem %s3, %s255
      $region44: #{decoder_forward.15} parent=39 // pred_fallthru
        _
    $region40: #{decoder_forward.15} parent=5 // pred_fallthru
      _
  $region6: #{decoder_forward.15} parent=0 // loop_footer
    %s13 = sadd.s32 1, %s9
  $region7: #{decoder_forward.15} parent=0 // loop_footer_branch
    %8 = sbr.rel target = $region3
  $region8: #{decoder_forward.15} parent=0 // loop_exit
    _

</llo_original>
